<compile_context>
chip_gen: v7x
topology: tpu7x:2x2x1
jax: 0.10.0
libtpu: 0.0.40
codegen_flags: <defaults>
</compile_context>

<pallas_src>
import numpy as np
import jax
import jax.numpy as jnp
from jax.experimental import pallas as pl
from jax.experimental.pallas import tpu as pltpu

# ----------------------------- configuration -------------------------------
B, C, H, W = 2, 3, 16, 16            # batch, in_chans, spatial
HW = H * W                           # 256 = 2 full lane groups
STRIDE = 4                           # encoder_stride == patch_size
NUM_FEATURES = 32                    # encoder.num_features
HP, WP = H // STRIDE, W // STRIDE    # feature-map spatial size (4, 4)
N_TOK = HP * WP                      # tokens per image (16)
Z_DIM = N_TOK * NUM_FEATURES         # 512 = 4 full lane groups
PATCH_DIM = C * STRIDE * STRIDE      # 48
DEC_OUT = STRIDE * STRIDE * 3        # 48
IMG_DIM = C * HW                     # 768 = 6 full lane groups
REC_DIM = 3 * HW                     # 768
MASK_RADIUS1 = 4.0                   # low-pass radius for the 'mfm' mask

# ImageNet statistics baked in as Python scalars / folded into init weights.
_MEAN = (0.485, 0.456, 0.406)
_STD = (0.229, 0.224, 0.225)
_SCALE = tuple(1.0 / s for s in _STD)
_BIAS = tuple(-m / s for m, s in zip(_MEAN, _STD))


def _full_spec(shape):
    """BlockSpec covering the whole (small) array, grid=(1,)."""
    return pl.BlockSpec(shape, lambda i: (0,) * len(shape))


# ------------------------------ fused kernel --------------------------------
def _mfm_fused_kernel(x_ref, m_ref, krt_ref, kit_ref, lrt_ref, lit_ref,
                      wenc_ref, benc_ref, wdec_ref, bdec_ref, loss_ref):
    """Whole MFM forward in one kernel.

    x_ref  : (B, C*H*W) clean image, [0,1]
    m_ref  : (B, H*W)   shifted-frequency mask
    krt/kit: (HW, HW)   Re/Im of (Fs⊗Fs)^T          (fft2 + fftshift folded)
    lrt/lit: (HW, HW)   Re/Im of (G⊗G)^T, G=conj(F)P/N (ifftshift+ifft2 folded)
    wenc   : (C*H*W, Z_DIM)  patchify + normalize-scale folded encoder weight
    benc   : (1, Z_DIM)      encoder bias + normalize-bias contribution
    wdec   : (Z_DIM, 3*H*W)  1x1-conv + PixelShuffle folded decoder weight
    bdec   : (1, 3*H*W)      decoder bias scattered into (c,h,w) layout
    loss   : (1, 1) SMEM scalar
    """
    f32 = jnp.float32
    x = x_ref[...]                                   # (B, 768)
    m = m_ref[...]                                   # (B, 256)
    krt = krt_ref[...]
    kit = kit_ref[...]
    lrt = lrt_ref[...]
    lit = lit_ref[...]

    # --- frequency corruption + clamp + (folded) normalize + patch-embed ----
    z = None
    for c in range(C):                               # static unroll, C=3
        sl = slice(c * HW, (c + 1) * HW)             # 128-aligned lane slice
        xc = x[:, sl]                                # (B, 256)
        yr = jnp.dot(xc, krt, preferred_element_type=f32)   # Re fftshift(fft2)
        yi = jnp.dot(xc, kit, preferred_element_type=f32)   # Im
        zr = m * yr                                  # masked spectrum
        zi = m * yi
        rec = (jnp.dot(zr, lrt, preferred_element_type=f32)
               - jnp.dot(zi, lit, preferred_element_type=f32))  # Re(ifft2)
        rec = jnp.clip(rec, 0.0, 1.0)                # clamp(0,1)
        # encoder matmul with patchify + ImageNet scale folded into the weight
        contrib = jnp.dot(rec, wenc_ref[sl, :], preferred_element_type=f32)
        z = contrib if z is None else z + contrib
    z = z + benc_ref[...]                            # (B, Z_DIM)
    # TODO(synk): exact erf GELU to bit-match nn.GELU once a real encoder lands.
    z = jax.nn.gelu(z, approximate=True)

    # --- decoder 1x1 conv + PixelShuffle (both folded into wdec/bdec) -------
    xrec = (jnp.dot(z, wdec_ref[...], preferred_element_type=f32)
            + bdec_ref[...])                         # (B, 3*H*W), (c,h,w) order

    # --- FrequencyLoss via Parseval:  sum|FFT(d)|^2 = H*W * sum(d^2) ---------
    total = jnp.float32(0.0)
    for c in range(3):                               # decoder has 3 channels
        sl = slice(c * HW, (c + 1) * HW)
        xn = x[:, sl] * _SCALE[c] + _BIAS[c]         # normalize(x) target
        d = xrec[:, sl] - xn
        total = total + jnp.sum(d * d)
    # loss = H*W*sum(d^2) / (B*3*H*W) = sum(d^2) / (B*3)
    loss_ref[0, 0] = total * (1.0 / float(B * 3))


# ------------------------------ kernel wrapper -------------------------------
def mfm_forward(params, x, mask):
    x2 = x.reshape(B, IMG_DIM).astype(jnp.float32)       # (B, C*H*W)
    m2 = mask.reshape(B, HW).astype(jnp.float32)         # (B, H*W), shifted conv.
    loss = pl.pallas_call(
        _mfm_fused_kernel,
        out_shape=jax.ShapeDtypeStruct((1, 1), jnp.float32),
        grid=(1,),
        in_specs=[_full_spec((B, IMG_DIM)), _full_spec((B, HW)),
                  _full_spec((HW, HW)), _full_spec((HW, HW)),
                  _full_spec((HW, HW)), _full_spec((HW, HW)),
                  _full_spec((IMG_DIM, Z_DIM)), _full_spec((1, Z_DIM)),
                  _full_spec((Z_DIM, REC_DIM)), _full_spec((1, REC_DIM))],
        out_specs=pl.BlockSpec(memory_space=pltpu.MemorySpace.SMEM),
        compiler_params=pltpu.CompilerParams(
            dimension_semantics=("arbitrary",)),
    )(x2, m2, params["dft_kr_t"], params["dft_ki_t"],
      params["dft_lr_t"], params["dft_li_t"],
      params["enc_w_big"], params["enc_b_big"],
      params["dec_w_big"], params["dec_b_big"])
    return loss[0, 0]


# -------------------- init-time constant / weight folding --------------------
def _dft_matrices():
    """Shifted 2-D DFT / inverse-DFT as real Kronecker matrices (transposed for
    right-multiplication on (rows, H*W) slabs).  H=W=16 (even), so
    fftshift == ifftshift and both shifts fold exactly into the constants."""
    idx = np.arange(H)
    F_ = np.exp(-2j * np.pi * np.outer(idx, idx) / H)        # (16,16) DFT
    Fs = np.fft.fftshift(F_, axes=0)                         # fftshift (rows)
    G = np.fft.fftshift(np.conj(F_), axes=1) / H             # ifftshift+ifft+1/N
    K = np.kron(Fs, Fs).T                                    # vec_rowmajor form
    L = np.kron(G, G).T
    return (jnp.asarray(K.real, jnp.float32), jnp.asarray(K.imag, jnp.float32),
            jnp.asarray(L.real, jnp.float32), jnp.asarray(L.imag, jnp.float32))


def init_params(key):
    k1, k2, k3, k4 = jax.random.split(key, 4)
    enc_w = np.asarray(jax.random.normal(k1, (PATCH_DIM, NUM_FEATURES),
                                         jnp.float32)) * np.float32(0.02)
    enc_b = np.asarray(jax.random.normal(k2, (NUM_FEATURES,),
                                         jnp.float32)) * np.float32(0.02)
    dec_w = np.asarray(jax.random.normal(k3, (NUM_FEATURES, DEC_OUT),
                                         jnp.float32)) * np.float32(0.02)
    dec_b = np.asarray(jax.random.normal(k4, (DEC_OUT,),
                                         jnp.float32)) * np.float32(0.02)
    p = STRIDE

    # Encoder: patchify (stride-4) + ImageNet normalize folded into one matmul.
    #   z[b, tok*F+f] = sum_{c,h,w} clamp(xcorr)[b, c*HW+h*W+w] * wenc_big[...,]
    wenc_big = np.zeros((IMG_DIM, Z_DIM), np.float32)
    for c in range(C):
        for h in range(H):
            for w in range(W):
                tok = (h // p) * WP + (w // p)
                prow = c * p * p + (h % p) * p + (w % p)
                wenc_big[c * HW + h * W + w,
                         tok * NUM_FEATURES:(tok + 1) * NUM_FEATURES] = (
                             enc_w[prow] * np.float32(_SCALE[c]))
    bias_patch = np.zeros(NUM_FEATURES, np.float32)          # normalize-bias term
    for c in range(C):
        for r in range(p * p):
            bias_patch += np.float32(_BIAS[c]) * enc_w[c * p * p + r]
    enc_b_big = np.tile(enc_b + bias_patch, N_TOK)[None, :].astype(np.float32)

    # Decoder: 1x1 Conv2d + PixelShuffle(stride) folded into one matmul whose
    # output columns are already in (c, h, w) image layout (no pixel-shuffle op).
    wdec_big = np.zeros((Z_DIM, REC_DIM), np.float32)
    bdec_big = np.zeros((1, REC_DIM), np.float32)
    for co in range(3):
        for h in range(H):
            for w in range(W):
                tok = (h // p) * WP + (w // p)
                oc = co * p * p + (h % p) * p + (w % p)
                col = co * HW + h * W + w
                wdec_big[tok * NUM_FEATURES:(tok + 1) * NUM_FEATURES,
                         col] = dec_w[:, oc]
                bdec_big[0, col] = dec_b[oc]

    kr, ki, lr, li = _dft_matrices()
    return {
        "enc_w_big": jnp.asarray(wenc_big), "enc_b_big": jnp.asarray(enc_b_big),
        "dec_w_big": jnp.asarray(wdec_big), "dec_b_big": jnp.asarray(bdec_big),
        "dft_kr_t": kr, "dft_ki_t": ki, "dft_lr_t": lr, "dft_li_t": li,
    }


def make_lowpass_mask():
    """'mfm' frequency mask (shifted convention): keep radius <= MASK_RADIUS1."""
    yy = jnp.arange(H, dtype=jnp.float32) - (H // 2)
    xx = jnp.arange(W, dtype=jnp.float32) - (W // 2)
    rad = jnp.sqrt(yy[:, None] ** 2 + xx[None, :] ** 2)
    m = (rad <= MASK_RADIUS1).astype(jnp.float32)            # [H, W]
    return jnp.broadcast_to(m, (B, H, W))


if __name__ == "__main__":
    key = jax.random.PRNGKey(0)
    k_params, k_x = jax.random.split(key)
    params = init_params(k_params)
    x = jax.random.uniform(k_x, (B, C, H, W), jnp.float32)   # images in [0,1]
    mask = make_lowpass_mask()                               # [B, H, W]

    loss = jax.jit(mfm_forward)(params, x, mask)
    loss = jax.block_until_ready(loss)
    assert loss.shape == () and bool(jnp.isfinite(loss))
    print("KERNEL_OK")
</pallas_src>

<mosaic_0001>
module attributes {stable_mosaic.version = 11 : i64} {
  func.func @_mfm_fused_kernel(%arg0: i32, %arg1: memref<2x768xf32, #tpu.memory_space<vmem>>, %arg2: memref<2x256xf32, #tpu.memory_space<vmem>>, %arg3: memref<256x256xf32, #tpu.memory_space<vmem>>, %arg4: memref<256x256xf32, #tpu.memory_space<vmem>>, %arg5: memref<256x256xf32, #tpu.memory_space<vmem>>, %arg6: memref<256x256xf32, #tpu.memory_space<vmem>>, %arg7: memref<768x512xf32, #tpu.memory_space<vmem>>, %arg8: memref<1x512xf32, #tpu.memory_space<vmem>>, %arg9: memref<512x768xf32, #tpu.memory_space<vmem>>, %arg10: memref<1x768xf32, #tpu.memory_space<vmem>>, %arg11: memref<1x1xf32, #tpu.memory_space<smem>>) attributes {dimension_semantics = [#tpu.dimension_semantics<arbitrary>], iteration_bounds = array<i64: 1>, scalar_prefetch = 0 : i64, scratch_operands = 0 : i64, tpu.core_type = #tpu.core_type<tc>, window_params = [{pipeline_mode = #tpu.pipeline_mode<synchronous>, transform_indices = @transform_0, window_bounds = array<i64: 2, 768>}, {pipeline_mode = #tpu.pipeline_mode<synchronous>, transform_indices = @transform_1, window_bounds = array<i64: 2, 256>}, {pipeline_mode = #tpu.pipeline_mode<synchronous>, transform_indices = @transform_2, window_bounds = array<i64: 256, 256>}, {pipeline_mode = #tpu.pipeline_mode<synchronous>, transform_indices = @transform_3, window_bounds = array<i64: 256, 256>}, {pipeline_mode = #tpu.pipeline_mode<synchronous>, transform_indices = @transform_4, window_bounds = array<i64: 256, 256>}, {pipeline_mode = #tpu.pipeline_mode<synchronous>, transform_indices = @transform_5, window_bounds = array<i64: 256, 256>}, {pipeline_mode = #tpu.pipeline_mode<synchronous>, transform_indices = @transform_6, window_bounds = array<i64: 768, 512>}, {pipeline_mode = #tpu.pipeline_mode<synchronous>, transform_indices = @transform_7, window_bounds = array<i64: 1, 512>}, {pipeline_mode = #tpu.pipeline_mode<synchronous>, transform_indices = @transform_8, window_bounds = array<i64: 512, 768>}, {pipeline_mode = #tpu.pipeline_mode<synchronous>, transform_indices = @transform_9, window_bounds = array<i64: 1, 768>}, {transform_indices = @transform_10, window_bounds = array<i64: 1, 1>}]} {
    %c0 = arith.constant 0 : index
    %c0_0 = arith.constant 0 : index
    %0 = vector.load %arg1[%c0, %c0_0] : memref<2x768xf32, #tpu.memory_space<vmem>>, vector<2x768xf32>
    %c0_1 = arith.constant 0 : index
    %c0_2 = arith.constant 0 : index
    %1 = vector.load %arg2[%c0_1, %c0_2] : memref<2x256xf32, #tpu.memory_space<vmem>>, vector<2x256xf32>
    %c0_3 = arith.constant 0 : index
    %c0_4 = arith.constant 0 : index
    %2 = vector.load %arg3[%c0_3, %c0_4] : memref<256x256xf32, #tpu.memory_space<vmem>>, vector<256x256xf32>
    %c0_5 = arith.constant 0 : index
    %c0_6 = arith.constant 0 : index
    %3 = vector.load %arg4[%c0_5, %c0_6] : memref<256x256xf32, #tpu.memory_space<vmem>>, vector<256x256xf32>
    %c0_7 = arith.constant 0 : index
    %c0_8 = arith.constant 0 : index
    %4 = vector.load %arg5[%c0_7, %c0_8] : memref<256x256xf32, #tpu.memory_space<vmem>>, vector<256x256xf32>
    %c0_9 = arith.constant 0 : index
    %c0_10 = arith.constant 0 : index
    %5 = vector.load %arg6[%c0_9, %c0_10] : memref<256x256xf32, #tpu.memory_space<vmem>>, vector<256x256xf32>
    %6 = vector.extract_strided_slice %0 {offsets = [0, 0], sizes = [2, 256], strides = [1, 1]} : vector<2x768xf32> to vector<2x256xf32>
    %cst = arith.constant dense<0.000000e+00> : vector<2x256xf32>
    %7 = tpu.matmul %6, %2, %cst {dimension_numbers = #tpu.dot_dimension_numbers<[1], [0], [0], [1], [0, 0, 1, 1], [], []>} : vector<2x256xf32>, vector<256x256xf32>, vector<2x256xf32> -> vector<2x256xf32>
    %cst_11 = arith.constant dense<0.000000e+00> : vector<2x256xf32>
    %8 = tpu.matmul %6, %3, %cst_11 {dimension_numbers = #tpu.dot_dimension_numbers<[1], [0], [0], [1], [0, 0, 1, 1], [], []>} : vector<2x256xf32>, vector<256x256xf32>, vector<2x256xf32> -> vector<2x256xf32>
    %9 = arith.mulf %1, %7 : vector<2x256xf32>
    %10 = arith.mulf %1, %8 : vector<2x256xf32>
    %cst_12 = arith.constant dense<0.000000e+00> : vector<2x256xf32>
    %11 = tpu.matmul %9, %4, %cst_12 {dimension_numbers = #tpu.dot_dimension_numbers<[1], [0], [0], [1], [0, 0, 1, 1], [], []>} : vector<2x256xf32>, vector<256x256xf32>, vector<2x256xf32> -> vector<2x256xf32>
    %cst_13 = arith.constant dense<0.000000e+00> : vector<2x256xf32>
    %12 = tpu.matmul %10, %5, %cst_13 {dimension_numbers = #tpu.dot_dimension_numbers<[1], [0], [0], [1], [0, 0, 1, 1], [], []>} : vector<2x256xf32>, vector<256x256xf32>, vector<2x256xf32> -> vector<2x256xf32>
    %13 = arith.subf %11, %12 : vector<2x256xf32>
    %cst_14 = arith.constant 0.000000e+00 : f32
    %cst_15 = arith.constant 1.000000e+00 : f32
    %14 = vector.broadcast %cst_14 : f32 to vector<2x256xf32>
    %15 = arith.maximumf %14, %13 : vector<2x256xf32>
    %16 = vector.broadcast %cst_15 : f32 to vector<2x256xf32>
    %17 = arith.minimumf %16, %15 : vector<2x256xf32>
    %c0_16 = arith.constant 0 : index
    %c0_17 = arith.constant 0 : index
    %18 = vector.load %arg7[%c0_16, %c0_17] : memref<768x512xf32, #tpu.memory_space<vmem>>, vector<256x512xf32>
    %cst_18 = arith.constant dense<0.000000e+00> : vector<2x512xf32>
    %19 = tpu.matmul %17, %18, %cst_18 {dimension_numbers = #tpu.dot_dimension_numbers<[1], [0], [0], [1], [0, 0, 1, 1], [], []>} : vector<2x256xf32>, vector<256x512xf32>, vector<2x512xf32> -> vector<2x512xf32>
    %20 = vector.extract_strided_slice %0 {offsets = [0, 256], sizes = [2, 256], strides = [1, 1]} : vector<2x768xf32> to vector<2x256xf32>
    %cst_19 = arith.constant dense<0.000000e+00> : vector<2x256xf32>
    %21 = tpu.matmul %20, %2, %cst_19 {dimension_numbers = #tpu.dot_dimension_numbers<[1], [0], [0], [1], [0, 0, 1, 1], [], []>} : vector<2x256xf32>, vector<256x256xf32>, vector<2x256xf32> -> vector<2x256xf32>
    %cst_20 = arith.constant dense<0.000000e+00> : vector<2x256xf32>
    %22 = tpu.matmul %20, %3, %cst_20 {dimension_numbers = #tpu.dot_dimension_numbers<[1], [0], [0], [1], [0, 0, 1, 1], [], []>} : vector<2x256xf32>, vector<256x256xf32>, vector<2x256xf32> -> vector<2x256xf32>
    %23 = arith.mulf %1, %21 : vector<2x256xf32>
    %24 = arith.mulf %1, %22 : vector<2x256xf32>
    %cst_21 = arith.constant dense<0.000000e+00> : vector<2x256xf32>
    %25 = tpu.matmul %23, %4, %cst_21 {dimension_numbers = #tpu.dot_dimension_numbers<[1], [0], [0], [1], [0, 0, 1, 1], [], []>} : vector<2x256xf32>, vector<256x256xf32>, vector<2x256xf32> -> vector<2x256xf32>
    %cst_22 = arith.constant dense<0.000000e+00> : vector<2x256xf32>
    %26 = tpu.matmul %24, %5, %cst_22 {dimension_numbers = #tpu.dot_dimension_numbers<[1], [0], [0], [1], [0, 0, 1, 1], [], []>} : vector<2x256xf32>, vector<256x256xf32>, vector<2x256xf32> -> vector<2x256xf32>
    %27 = arith.subf %25, %26 : vector<2x256xf32>
    %cst_23 = arith.constant 0.000000e+00 : f32
    %cst_24 = arith.constant 1.000000e+00 : f32
    %28 = vector.broadcast %cst_23 : f32 to vector<2x256xf32>
    %29 = arith.maximumf %28, %27 : vector<2x256xf32>
    %30 = vector.broadcast %cst_24 : f32 to vector<2x256xf32>
    %31 = arith.minimumf %30, %29 : vector<2x256xf32>
    %c256 = arith.constant 256 : index
    %c0_25 = arith.constant 0 : index
    %32 = vector.load %arg7[%c256, %c0_25] : memref<768x512xf32, #tpu.memory_space<vmem>>, vector<256x512xf32>
    %cst_26 = arith.constant dense<0.000000e+00> : vector<2x512xf32>
    %33 = tpu.matmul %31, %32, %cst_26 {dimension_numbers = #tpu.dot_dimension_numbers<[1], [0], [0], [1], [0, 0, 1, 1], [], []>} : vector<2x256xf32>, vector<256x512xf32>, vector<2x512xf32> -> vector<2x512xf32>
    %34 = arith.addf %19, %33 : vector<2x512xf32>
    %35 = vector.extract_strided_slice %0 {offsets = [0, 512], sizes = [2, 256], strides = [1, 1]} : vector<2x768xf32> to vector<2x256xf32>
    %cst_27 = arith.constant dense<0.000000e+00> : vector<2x256xf32>
    %36 = tpu.matmul %35, %2, %cst_27 {dimension_numbers = #tpu.dot_dimension_numbers<[1], [0], [0], [1], [0, 0, 1, 1], [], []>} : vector<2x256xf32>, vector<256x256xf32>, vector<2x256xf32> -> vector<2x256xf32>
    %cst_28 = arith.constant dense<0.000000e+00> : vector<2x256xf32>
    %37 = tpu.matmul %35, %3, %cst_28 {dimension_numbers = #tpu.dot_dimension_numbers<[1], [0], [0], [1], [0, 0, 1, 1], [], []>} : vector<2x256xf32>, vector<256x256xf32>, vector<2x256xf32> -> vector<2x256xf32>
    %38 = arith.mulf %1, %36 : vector<2x256xf32>
    %39 = arith.mulf %1, %37 : vector<2x256xf32>
    %cst_29 = arith.constant dense<0.000000e+00> : vector<2x256xf32>
    %40 = tpu.matmul %38, %4, %cst_29 {dimension_numbers = #tpu.dot_dimension_numbers<[1], [0], [0], [1], [0, 0, 1, 1], [], []>} : vector<2x256xf32>, vector<256x256xf32>, vector<2x256xf32> -> vector<2x256xf32>
    %cst_30 = arith.constant dense<0.000000e+00> : vector<2x256xf32>
    %41 = tpu.matmul %39, %5, %cst_30 {dimension_numbers = #tpu.dot_dimension_numbers<[1], [0], [0], [1], [0, 0, 1, 1], [], []>} : vector<2x256xf32>, vector<256x256xf32>, vector<2x256xf32> -> vector<2x256xf32>
    %42 = arith.subf %40, %41 : vector<2x256xf32>
    %cst_31 = arith.constant 0.000000e+00 : f32
    %cst_32 = arith.constant 1.000000e+00 : f32
    %43 = vector.broadcast %cst_31 : f32 to vector<2x256xf32>
    %44 = arith.maximumf %43, %42 : vector<2x256xf32>
    %45 = vector.broadcast %cst_32 : f32 to vector<2x256xf32>
    %46 = arith.minimumf %45, %44 : vector<2x256xf32>
    %c512 = arith.constant 512 : index
    %c0_33 = arith.constant 0 : index
    %47 = vector.load %arg7[%c512, %c0_33] : memref<768x512xf32, #tpu.memory_space<vmem>>, vector<256x512xf32>
    %cst_34 = arith.constant dense<0.000000e+00> : vector<2x512xf32>
    %48 = tpu.matmul %46, %47, %cst_34 {dimension_numbers = #tpu.dot_dimension_numbers<[1], [0], [0], [1], [0, 0, 1, 1], [], []>} : vector<2x256xf32>, vector<256x512xf32>, vector<2x512xf32> -> vector<2x512xf32>
    %49 = arith.addf %34, %48 : vector<2x512xf32>
    %c0_35 = arith.constant 0 : index
    %c0_36 = arith.constant 0 : index
    %50 = vector.load %arg8[%c0_35, %c0_36] : memref<1x512xf32, #tpu.memory_space<vmem>>, vector<1x512xf32>
    %51 = vector.broadcast %50 : vector<1x512xf32> to vector<2x512xf32>
    %52 = arith.addf %49, %51 : vector<2x512xf32>
    %53 = arith.mulf %52, %52 : vector<2x512xf32>
    %54 = arith.mulf %52, %53 : vector<2x512xf32>
    %cst_37 = arith.constant 4.471500e-02 : f32
    %55 = vector.broadcast %cst_37 : f32 to vector<2x512xf32>
    %56 = arith.mulf %55, %54 : vector<2x512xf32>
    %57 = arith.addf %52, %56 : vector<2x512xf32>
    %cst_38 = arith.constant 0.797884583 : f32
    %58 = vector.broadcast %cst_38 : f32 to vector<2x512xf32>
    %59 = arith.mulf %58, %57 : vector<2x512xf32>
    %60 = math.tanh %59 : vector<2x512xf32>
    %cst_39 = arith.constant 1.000000e+00 : f32
    %61 = vector.broadcast %cst_39 : f32 to vector<2x512xf32>
    %62 = arith.addf %61, %60 : vector<2x512xf32>
    %cst_40 = arith.constant 5.000000e-01 : f32
    %63 = vector.broadcast %cst_40 : f32 to vector<2x512xf32>
    %64 = arith.mulf %63, %62 : vector<2x512xf32>
    %65 = arith.mulf %52, %64 : vector<2x512xf32>
    %c0_41 = arith.constant 0 : index
    %c0_42 = arith.constant 0 : index
    %66 = vector.load %arg9[%c0_41, %c0_42] : memref<512x768xf32, #tpu.memory_space<vmem>>, vector<512x768xf32>
    %cst_43 = arith.constant dense<0.000000e+00> : vector<2x768xf32>
    %67 = tpu.matmul %65, %66, %cst_43 {dimension_numbers = #tpu.dot_dimension_numbers<[1], [0], [0], [1], [0, 0, 1, 1], [], []>} : vector<2x512xf32>, vector<512x768xf32>, vector<2x768xf32> -> vector<2x768xf32>
    %c0_44 = arith.constant 0 : index
    %c0_45 = arith.constant 0 : index
    %68 = vector.load %arg10[%c0_44, %c0_45] : memref<1x768xf32, #tpu.memory_space<vmem>>, vector<1x768xf32>
    %69 = vector.broadcast %68 : vector<1x768xf32> to vector<2x768xf32>
    %70 = arith.addf %67, %69 : vector<2x768xf32>
    %71 = vector.extract_strided_slice %0 {offsets = [0, 0], sizes = [2, 256], strides = [1, 1]} : vector<2x768xf32> to vector<2x256xf32>
    %cst_46 = arith.constant 4.36681223 : f32
    %72 = vector.broadcast %cst_46 : f32 to vector<2x256xf32>
    %73 = arith.mulf %71, %72 : vector<2x256xf32>
    %cst_47 = arith.constant -2.11790395 : f32
    %74 = vector.broadcast %cst_47 : f32 to vector<2x256xf32>
    %75 = arith.addf %73, %74 : vector<2x256xf32>
    %76 = vector.extract_strided_slice %70 {offsets = [0, 0], sizes = [2, 256], strides = [1, 1]} : vector<2x768xf32> to vector<2x256xf32>
    %77 = arith.subf %76, %75 : vector<2x256xf32>
    %78 = arith.mulf %77, %77 : vector<2x256xf32>
    %79 = vector.shape_cast %78 : vector<2x256xf32> to vector<1x2x256xf32>
    %cst_48 = arith.constant dense<0.000000e+00> : vector<1xf32>
    %80 = vector.multi_reduction <add>, %79, %cst_48 [1, 2] : vector<1x2x256xf32> to vector<1xf32>
    %81 = vector.shape_cast %80 : vector<1xf32> to vector<1x1x1xf32>
    %82 = vector.extract %81[0, 0, 0] : f32 from vector<1x1x1xf32>
    %cst_49 = arith.constant 0.000000e+00 : f32
    %83 = arith.addf %cst_49, %82 : f32
    %84 = vector.extract_strided_slice %0 {offsets = [0, 256], sizes = [2, 256], strides = [1, 1]} : vector<2x768xf32> to vector<2x256xf32>
    %cst_50 = arith.constant 4.46428585 : f32
    %85 = vector.broadcast %cst_50 : f32 to vector<2x256xf32>
    %86 = arith.mulf %84, %85 : vector<2x256xf32>
    %cst_51 = arith.constant -2.03571439 : f32
    %87 = vector.broadcast %cst_51 : f32 to vector<2x256xf32>
    %88 = arith.addf %86, %87 : vector<2x256xf32>
    %89 = vector.extract_strided_slice %70 {offsets = [0, 256], sizes = [2, 256], strides = [1, 1]} : vector<2x768xf32> to vector<2x256xf32>
    %90 = arith.subf %89, %88 : vector<2x256xf32>
    %91 = arith.mulf %90, %90 : vector<2x256xf32>
    %92 = vector.shape_cast %91 : vector<2x256xf32> to vector<1x2x256xf32>
    %cst_52 = arith.constant dense<0.000000e+00> : vector<1xf32>
    %93 = vector.multi_reduction <add>, %92, %cst_52 [1, 2] : vector<1x2x256xf32> to vector<1xf32>
    %94 = vector.shape_cast %93 : vector<1xf32> to vector<1x1x1xf32>
    %95 = vector.extract %94[0, 0, 0] : f32 from vector<1x1x1xf32>
    %96 = arith.addf %83, %95 : f32
    %97 = vector.extract_strided_slice %0 {offsets = [0, 512], sizes = [2, 256], strides = [1, 1]} : vector<2x768xf32> to vector<2x256xf32>
    %cst_53 = arith.constant 4.44444466 : f32
    %98 = vector.broadcast %cst_53 : f32 to vector<2x256xf32>
    %99 = arith.mulf %97, %98 : vector<2x256xf32>
    %cst_54 = arith.constant -1.80444443 : f32
    %100 = vector.broadcast %cst_54 : f32 to vector<2x256xf32>
    %101 = arith.addf %99, %100 : vector<2x256xf32>
    %102 = vector.extract_strided_slice %70 {offsets = [0, 512], sizes = [2, 256], strides = [1, 1]} : vector<2x768xf32> to vector<2x256xf32>
    %103 = arith.subf %102, %101 : vector<2x256xf32>
    %104 = arith.mulf %103, %103 : vector<2x256xf32>
    %105 = vector.shape_cast %104 : vector<2x256xf32> to vector<1x2x256xf32>
    %cst_55 = arith.constant dense<0.000000e+00> : vector<1xf32>
    %106 = vector.multi_reduction <add>, %105, %cst_55 [1, 2] : vector<1x2x256xf32> to vector<1xf32>
    %107 = vector.shape_cast %106 : vector<1xf32> to vector<1x1x1xf32>
    %108 = vector.extract %107[0, 0, 0] : f32 from vector<1x1x1xf32>
    %109 = arith.addf %96, %108 : f32
    %cst_56 = arith.constant 0.166666672 : f32
    %110 = arith.mulf %109, %cst_56 : f32
    %c0_57 = arith.constant 0 : index
    %c0_58 = arith.constant 0 : index
    %111 = memref.load %arg11[%c0_57, %c0_58] : memref<1x1xf32, #tpu.memory_space<smem>>
    memref.store %110, %arg11[%c0_57, %c0_58] : memref<1x1xf32, #tpu.memory_space<smem>>
    return
  }
  func.func @transform_0(%arg0: i32) -> (i32, i32) {
    %c0_i32 = arith.constant 0 : i32
    %c0_i32_0 = arith.constant 0 : i32
    %c0_i32_1 = arith.constant 0 : i32
    return %c0_i32, %c0_i32_0 : i32, i32
  }
  func.func @transform_1(%arg0: i32) -> (i32, i32) {
    %c0_i32 = arith.constant 0 : i32
    %c0_i32_0 = arith.constant 0 : i32
    %c0_i32_1 = arith.constant 0 : i32
    return %c0_i32, %c0_i32_0 : i32, i32
  }
  func.func @transform_2(%arg0: i32) -> (i32, i32) {
    %c0_i32 = arith.constant 0 : i32
    %c0_i32_0 = arith.constant 0 : i32
    %c0_i32_1 = arith.constant 0 : i32
    return %c0_i32, %c0_i32_0 : i32, i32
  }
  func.func @transform_3(%arg0: i32) -> (i32, i32) {
    %c0_i32 = arith.constant 0 : i32
    %c0_i32_0 = arith.constant 0 : i32
    %c0_i32_1 = arith.constant 0 : i32
    return %c0_i32, %c0_i32_0 : i32, i32
  }
  func.func @transform_4(%arg0: i32) -> (i32, i32) {
    %c0_i32 = arith.constant 0 : i32
    %c0_i32_0 = arith.constant 0 : i32
    %c0_i32_1 = arith.constant 0 : i32
    return %c0_i32, %c0_i32_0 : i32, i32
  }
  func.func @transform_5(%arg0: i32) -> (i32, i32) {
    %c0_i32 = arith.constant 0 : i32
    %c0_i32_0 = arith.constant 0 : i32
    %c0_i32_1 = arith.constant 0 : i32
    return %c0_i32, %c0_i32_0 : i32, i32
  }
  func.func @transform_6(%arg0: i32) -> (i32, i32) {
    %c0_i32 = arith.constant 0 : i32
    %c0_i32_0 = arith.constant 0 : i32
    %c0_i32_1 = arith.constant 0 : i32
    return %c0_i32, %c0_i32_0 : i32, i32
  }
  func.func @transform_7(%arg0: i32) -> (i32, i32) {
    %c0_i32 = arith.constant 0 : i32
    %c0_i32_0 = arith.constant 0 : i32
    %c0_i32_1 = arith.constant 0 : i32
    return %c0_i32, %c0_i32_0 : i32, i32
  }
  func.func @transform_8(%arg0: i32) -> (i32, i32) {
    %c0_i32 = arith.constant 0 : i32
    %c0_i32_0 = arith.constant 0 : i32
    %c0_i32_1 = arith.constant 0 : i32
    return %c0_i32, %c0_i32_0 : i32, i32
  }
  func.func @transform_9(%arg0: i32) -> (i32, i32) {
    %c0_i32 = arith.constant 0 : i32
    %c0_i32_0 = arith.constant 0 : i32
    %c0_i32_1 = arith.constant 0 : i32
    return %c0_i32, %c0_i32_0 : i32, i32
  }
  func.func @transform_10(%arg0: i32) -> (i32, i32) {
    %c0_i32 = arith.constant 0 : i32
    %c0_i32_0 = arith.constant 0 : i32
    %c0_i32_1 = arith.constant 0 : i32
    return %c0_i32, %c0_i32_0 : i32, i32
  }
}

</mosaic_0001>

<llo_original>
// kernel: mfm_forward.1
$region0: #{mfm_forward.1}
  #allocation0 [shape = 'u32[]', space=smem, size = 0x4, offset = 0x4, fixed_abs, tag = 'smem constant byte address 0x4 - core index']
  #allocation1 [shape = 'u32[144,128]{1,0:T(1,128)}', space=vmem, size = 0x12000, scoped, tag = 'internal scratch']
  %s0 = inlined_call_operand.vmem [shape: f32[2,768], index: 0, kind: input, shape index: {}]
  %s1 = inlined_call_operand.vmem [shape: f32[2,256], index: 1, kind: input, shape index: {}]
  %s2 = inlined_call_operand.hbm [shape: f32[256,256], index: 2, kind: input, shape index: {}]
  %s3 = inlined_call_operand.hbm [shape: f32[256,256], index: 3, kind: input, shape index: {}]
  %s4 = inlined_call_operand.hbm [shape: f32[256,256], index: 4, kind: input, shape index: {}]
  %s5 = inlined_call_operand.hbm [shape: f32[256,256], index: 5, kind: input, shape index: {}]
  %s6 = inlined_call_operand.hbm [shape: f32[768,512], index: 6, kind: input, shape index: {}]
  %s7 = inlined_call_operand.hbm [shape: f32[1,512], index: 7, kind: input, shape index: {}]
  %s8 = inlined_call_operand.hbm [shape: f32[512,768], index: 8, kind: input, shape index: {}]
  %s9 = inlined_call_operand.hbm [shape: f32[1,768], index: 9, kind: input, shape index: {}]
  %s10 = inlined_call_operand.hbm [shape: f32[1,1], index: 10, kind: output, shape index: {}]
  %s11 = sld [smem:[#allocation0]]
  $region82: #{mfm_forward.1} parent=0
    _
  %s13 = ssub.s32 1, %s11
  %s14 = scalar_select 0, %s13, %s11
  $region1: #{mfm_forward.1} parent=0
    #allocation2 [shape = 'u8[262144]{0}', space=vmem, size = 0x40000, scoped, tag = 'input window, operand 2, single buffered']
    #allocation3 [shape = 's32[1]{0}', space=sflag, size = 0x4, scoped, tag = 'scoped memory for mfm_forward.1']
    #allocation4 [shape = 's32[1]{0}', space=sflag, size = 0x4, scoped, tag = 'scoped memory for mfm_forward.1']
    #allocation5 [shape = 'u8[262144]{0}', space=vmem, size = 0x40000, scoped, tag = 'input window, operand 3, single buffered']
    #allocation6 [shape = 's32[1]{0}', space=sflag, size = 0x4, scoped, tag = 'scoped memory for mfm_forward.1']
    #allocation7 [shape = 'u8[262144]{0}', space=vmem, size = 0x40000, scoped, tag = 'input window, operand 4, single buffered']
    #allocation8 [shape = 'u8[262144]{0}', space=vmem, size = 0x40000, scoped, tag = 'input window, operand 5, single buffered']
    #allocation9 [shape = 's32[1]{0}', space=sflag, size = 0x4, scoped, tag = 'scoped memory for mfm_forward.1']
    #allocation10 [shape = 'u8[1572864]{0}', space=vmem, size = 0x180000, scoped, tag = 'input window, operand 6, single buffered']
    #allocation11 [shape = 'u8[2048]{0}', space=vmem, size = 0x800, scoped, tag = 'input window, operand 7, single buffered']
    #allocation12 [shape = 's32[1]{0}', space=sflag, size = 0x4, scoped, tag = 'scoped memory for mfm_forward.1']
    #allocation13 [shape = 'u8[1572864]{0}', space=vmem, size = 0x180000, scoped, tag = 'input window, operand 8, single buffered']
    #allocation14 [shape = 'u8[3072]{0}', space=vmem, size = 0xc00, scoped, tag = 'input window, operand 9, single buffered']
    #allocation15 [shape = 's32[1]{0}', space=sflag, size = 0x4, scoped, tag = 'scoped memory for mfm_forward.1']
    #allocation16 [shape = 'u8[512]{0}', space=smem, size = 0x200, scoped, tag = 'output window, operand 0, single buffered']
    %15 = vsyncpa [#allocation3], 0
    %16 = vsyncpa [#allocation6], 0
    %17 = vsyncpa [#allocation9], 0
    %18 = vsyncpa [#allocation12], 0
    %19 = vsyncpa [#allocation15], 0
    %20 = vsyncpa [#allocation4], 0
    // Predicated region
    $region2: #{mfm_forward.1} parent=1 // pred_check
      _
    $region3: #{mfm_forward.1} parent=1 // pred_check_branch
      %22 = sbr.rel (0) target = $region5
    $region4: #{mfm_forward.1} parent=1 // pred_region
      _
    $region5: #{mfm_forward.1} parent=1 // pred_fallthru
      _
    // Predicated region
    $region6: #{mfm_forward.1} parent=1 // pred_check
      _
    $region7: #{mfm_forward.1} parent=1 // pred_check_branch
      %24 = sbr.rel (0) target = $region9
    $region8: #{mfm_forward.1} parent=1 // pred_region
      _
    $region9: #{mfm_forward.1} parent=1 // pred_fallthru
      _
    // Predicated region
    $region10: #{mfm_forward.1} parent=1 // pred_check
      _
    $region11: #{mfm_forward.1} parent=1 // pred_check_branch
      %26 = sbr.rel (0) target = $region13
    $region12: #{mfm_forward.1} parent=1 // pred_region
      %s28 = ssub.s32 8192, 8192
      %29 = vsyncadd [#allocation3], %s28
      %s30 = sshll.u32 [#allocation2], 4
      %s31 = int_to_ptr.vmem [resolvable:$true] %s30
      %36 = dma.hbm_to_vmem [thread:$0]  %s2, 8192, %s31, [#allocation3], 256, 256, 16
    $region13: #{mfm_forward.1} parent=1 // pred_fallthru
      _
    // Predicated region
    $region14: #{mfm_forward.1} parent=1 // pred_check
      _
    $region15: #{mfm_forward.1} parent=1 // pred_check_branch
      %38 = sbr.rel (0) target = $region17
    $region16: #{mfm_forward.1} parent=1 // pred_region
      %s40 = ssub.s32 8192, 8192
      %41 = vsyncadd [#allocation6], %s40
      %s42 = sshll.u32 [#allocation5], 4
      %s43 = int_to_ptr.vmem [resolvable:$true] %s42
      %48 = dma.hbm_to_vmem [thread:$0]  %s3, 8192, %s43, [#allocation6], 256, 256, 16
    $region17: #{mfm_forward.1} parent=1 // pred_fallthru
      _
    // Predicated region
    $region18: #{mfm_forward.1} parent=1 // pred_check
      _
    $region19: #{mfm_forward.1} parent=1 // pred_check_branch
      %50 = sbr.rel (0) target = $region21
    $region20: #{mfm_forward.1} parent=1 // pred_region
      %s52 = ssub.s32 8192, 8192
      %53 = vsyncadd [#allocation6], %s52
      %s54 = sshll.u32 [#allocation7], 4
      %s55 = int_to_ptr.vmem [resolvable:$true] %s54
      %60 = dma.hbm_to_vmem [thread:$0]  %s4, 8192, %s55, [#allocation6], 256, 256, 16
    $region21: #{mfm_forward.1} parent=1 // pred_fallthru
      _
    // Predicated region
    $region22: #{mfm_forward.1} parent=1 // pred_check
      _
    $region23: #{mfm_forward.1} parent=1 // pred_check_branch
      %62 = sbr.rel (0) target = $region25
    $region24: #{mfm_forward.1} parent=1 // pred_region
      %s64 = ssub.s32 8192, 8192
      %65 = vsyncadd [#allocation9], %s64
      %s66 = sshll.u32 [#allocation8], 4
      %s67 = int_to_ptr.vmem [resolvable:$true] %s66
      %72 = dma.hbm_to_vmem [thread:$0]  %s5, 8192, %s67, [#allocation9], 256, 256, 16
    $region25: #{mfm_forward.1} parent=1 // pred_fallthru
      _
    // Predicated region
    $region26: #{mfm_forward.1} parent=1 // pred_check
      _
    $region27: #{mfm_forward.1} parent=1 // pred_check_branch
      %74 = sbr.rel (0) target = $region29
    $region28: #{mfm_forward.1} parent=1 // pred_region
      %s76 = ssub.s32 49152, 49152
      %77 = vsyncadd [#allocation9], %s76
      %s78 = sshll.u32 [#allocation10], 4
      %s79 = int_to_ptr.vmem [resolvable:$true] %s78
      %84 = dma.hbm_to_vmem [thread:$0]  %s6, 49152, %s79, [#allocation9], 512, 512, 32
    $region29: #{mfm_forward.1} parent=1 // pred_fallthru
      _
    // Predicated region
    $region30: #{mfm_forward.1} parent=1 // pred_check
      _
    $region31: #{mfm_forward.1} parent=1 // pred_check_branch
      %86 = sbr.rel (0) target = $region33
    $region32: #{mfm_forward.1} parent=1 // pred_region
      %s88 = ssub.s32 64, 64
      %89 = vsyncadd [#allocation12], %s88
      %s91 = sshll.u32 [#allocation11], 4
      %s92 = int_to_ptr.vmem [resolvable:$true] %s91
      %94 = dma.hbm_to_vmem [thread:$0]  %s7, 64, %s92, [#allocation12]
    $region33: #{mfm_forward.1} parent=1 // pred_fallthru
      _
    // Predicated region
    $region34: #{mfm_forward.1} parent=1 // pred_check
      _
    $region35: #{mfm_forward.1} parent=1 // pred_check_branch
      %96 = sbr.rel (0) target = $region37
    $region36: #{mfm_forward.1} parent=1 // pred_region
      %s98 = ssub.s32 49152, 49152
      %99 = vsyncadd [#allocation12], %s98
      %s100 = sshll.u32 [#allocation13], 4
      %s101 = int_to_ptr.vmem [resolvable:$true] %s100
      %106 = dma.hbm_to_vmem [thread:$0]  %s8, 49152, %s101, [#allocation12], 768, 768, 48
    $region37: #{mfm_forward.1} parent=1 // pred_fallthru
      _
    // Predicated region
    $region38: #{mfm_forward.1} parent=1 // pred_check
      _
    $region39: #{mfm_forward.1} parent=1 // pred_check_branch
      %108 = sbr.rel (0) target = $region41
    $region40: #{mfm_forward.1} parent=1 // pred_region
      %s110 = ssub.s32 96, 96
      %111 = vsyncadd [#allocation15], %s110
      %s113 = sshll.u32 [#allocation14], 4
      %s114 = int_to_ptr.vmem [resolvable:$true] %s113
      %116 = dma.hbm_to_vmem [thread:$0]  %s9, 96, %s114, [#allocation15]
    $region41: #{mfm_forward.1} parent=1 // pred_fallthru
      _
    // Predicated region
    $region42: #{mfm_forward.1} parent=1 // pred_check
      _
    $region43: #{mfm_forward.1} parent=1 // pred_check_branch
      %118 = sbr.rel (0) target = $region45
    $region44: #{mfm_forward.1} parent=1 // pred_region
      %119 = dma.done [#allocation3], 8192
    $region45: #{mfm_forward.1} parent=1 // pred_fallthru
      _
    // Predicated region
    $region46: #{mfm_forward.1} parent=1 // pred_check
      _
    $region47: #{mfm_forward.1} parent=1 // pred_check_branch
      %121 = sbr.rel (0) target = $region49
    $region48: #{mfm_forward.1} parent=1 // pred_region
      %122 = dma.done [#allocation6], 8192
    $region49: #{mfm_forward.1} parent=1 // pred_fallthru
      _
    // Predicated region
    $region50: #{mfm_forward.1} parent=1 // pred_check
      _
    $region51: #{mfm_forward.1} parent=1 // pred_check_branch
      %124 = sbr.rel (0) target = $region53
    $region52: #{mfm_forward.1} parent=1 // pred_region
      %125 = dma.done [#allocation6], 8192
    $region53: #{mfm_forward.1} parent=1 // pred_fallthru
      _
    // Predicated region
    $region54: #{mfm_forward.1} parent=1 // pred_check
      _
    $region55: #{mfm_forward.1} parent=1 // pred_check_branch
      %127 = sbr.rel (0) target = $region57
    $region56: #{mfm_forward.1} parent=1 // pred_region
      %128 = dma.done [#allocation9], 8192
    $region57: #{mfm_forward.1} parent=1 // pred_fallthru
      _
    // Predicated region
    $region58: #{mfm_forward.1} parent=1 // pred_check
      _
    $region59: #{mfm_forward.1} parent=1 // pred_check_branch
      %130 = sbr.rel (0) target = $region61
    $region60: #{mfm_forward.1} parent=1 // pred_region
      %131 = dma.done [#allocation9], 49152
    $region61: #{mfm_forward.1} parent=1 // pred_fallthru
      _
    // Predicated region
    $region62: #{mfm_forward.1} parent=1 // pred_check
      _
    $region63: #{mfm_forward.1} parent=1 // pred_check_branch
      %133 = sbr.rel (0) target = $region65
    $region64: #{mfm_forward.1} parent=1 // pred_region
      %134 = dma.done [#allocation12], 64
    $region65: #{mfm_forward.1} parent=1 // pred_fallthru
      _
    // Predicated region
    $region66: #{mfm_forward.1} parent=1 // pred_check
      _
    $region67: #{mfm_forward.1} parent=1 // pred_check_branch
      %136 = sbr.rel (0) target = $region69
    $region68: #{mfm_forward.1} parent=1 // pred_region
      %137 = dma.done [#allocation12], 49152
    $region69: #{mfm_forward.1} parent=1 // pred_fallthru
      _
    // Predicated region
    $region70: #{mfm_forward.1} parent=1 // pred_check
      _
    $region71: #{mfm_forward.1} parent=1 // pred_check_branch
      %139 = sbr.rel (0) target = $region73
    $region72: #{mfm_forward.1} parent=1 // pred_region
      %140 = dma.done [#allocation15], 96
    $region73: #{mfm_forward.1} parent=1 // pred_fallthru
      _
    %v141 = vld [vmem:[%s0] sm:$0xff]
    %v142 = vld [vmem:[%s0 + $0x8] sm:$0xf]
    %v143 = vld [vmem:[%s1] sm:$0xf]
    %v144 = vld [vmem:[#allocation2] sm:$0xff]
    %v145 = vld [vmem:[#allocation2 + $0x8] sm:$0xff]
    %v146 = vld [vmem:[#allocation2 + $0x10] sm:$0xff]
    %v147 = vld [vmem:[#allocation2 + $0x18] sm:$0xff]
    %v148 = vld [vmem:[#allocation2 + $0x20] sm:$0xff]
    %v149 = vld [vmem:[#allocation2 + $0x28] sm:$0xff]
    %v150 = vld [vmem:[#allocation2 + $0x30] sm:$0xff]
    %v151 = vld [vmem:[#allocation2 + $0x38] sm:$0xff]
    %v152 = vld [vmem:[#allocation2 + $0x40] sm:$0xff]
    %v153 = vld [vmem:[#allocation2 + $0x48] sm:$0xff]
    %v154 = vld [vmem:[#allocation2 + $0x50] sm:$0xff]
    %v155 = vld [vmem:[#allocation2 + $0x58] sm:$0xff]
    %v156 = vld [vmem:[#allocation2 + $0x60] sm:$0xff]
    %v157 = vld [vmem:[#allocation2 + $0x68] sm:$0xff]
    %v158 = vld [vmem:[#allocation2 + $0x70] sm:$0xff]
    %v159 = vld [vmem:[#allocation2 + $0x78] sm:$0xff]
    %v160 = vld [vmem:[#allocation2 + $0x80] sm:$0xff]
    %v161 = vld [vmem:[#allocation2 + $0x88] sm:$0xff]
    %v162 = vld [vmem:[#allocation2 + $0x90] sm:$0xff]
    %v163 = vld [vmem:[#allocation2 + $0x98] sm:$0xff]
    %v164 = vld [vmem:[#allocation2 + $0xa0] sm:$0xff]
    %v165 = vld [vmem:[#allocation2 + $0xa8] sm:$0xff]
    %v166 = vld [vmem:[#allocation2 + $0xb0] sm:$0xff]
    %v167 = vld [vmem:[#allocation2 + $0xb8] sm:$0xff]
    %v168 = vld [vmem:[#allocation2 + $0xc0] sm:$0xff]
    %v169 = vld [vmem:[#allocation2 + $0xc8] sm:$0xff]
    %v170 = vld [vmem:[#allocation2 + $0xd0] sm:$0xff]
    %v171 = vld [vmem:[#allocation2 + $0xd8] sm:$0xff]
    %v172 = vld [vmem:[#allocation2 + $0xe0] sm:$0xff]
    %v173 = vld [vmem:[#allocation2 + $0xe8] sm:$0xff]
    %v174 = vld [vmem:[#allocation2 + $0xf0] sm:$0xff]
    %v175 = vld [vmem:[#allocation2 + $0xf8] sm:$0xff]
    %v176 = vld [vmem:[#allocation2 + $0x100] sm:$0xff]
    %v177 = vld [vmem:[#allocation2 + $0x108] sm:$0xff]
    %v178 = vld [vmem:[#allocation2 + $0x110] sm:$0xff]
    %v179 = vld [vmem:[#allocation2 + $0x118] sm:$0xff]
    %v180 = vld [vmem:[#allocation2 + $0x120] sm:$0xff]
    %v181 = vld [vmem:[#allocation2 + $0x128] sm:$0xff]
    %v182 = vld [vmem:[#allocation2 + $0x130] sm:$0xff]
    %v183 = vld [vmem:[#allocation2 + $0x138] sm:$0xff]
    %v184 = vld [vmem:[#allocation2 + $0x140] sm:$0xff]
    %v185 = vld [vmem:[#allocation2 + $0x148] sm:$0xff]
    %v186 = vld [vmem:[#allocation2 + $0x150] sm:$0xff]
    %v187 = vld [vmem:[#allocation2 + $0x158] sm:$0xff]
    %v188 = vld [vmem:[#allocation2 + $0x160] sm:$0xff]
    %v189 = vld [vmem:[#allocation2 + $0x168] sm:$0xff]
    %v190 = vld [vmem:[#allocation2 + $0x170] sm:$0xff]
    %v191 = vld [vmem:[#allocation2 + $0x178] sm:$0xff]
    %v192 = vld [vmem:[#allocation2 + $0x180] sm:$0xff]
    %v193 = vld [vmem:[#allocation2 + $0x188] sm:$0xff]
    %v194 = vld [vmem:[#allocation2 + $0x190] sm:$0xff]
    %v195 = vld [vmem:[#allocation2 + $0x198] sm:$0xff]
    %v196 = vld [vmem:[#allocation2 + $0x1a0] sm:$0xff]
    %v197 = vld [vmem:[#allocation2 + $0x1a8] sm:$0xff]
    %v198 = vld [vmem:[#allocation2 + $0x1b0] sm:$0xff]
    %v199 = vld [vmem:[#allocation2 + $0x1b8] sm:$0xff]
    %v200 = vld [vmem:[#allocation2 + $0x1c0] sm:$0xff]
    %v201 = vld [vmem:[#allocation2 + $0x1c8] sm:$0xff]
    %v202 = vld [vmem:[#allocation2 + $0x1d0] sm:$0xff]
    %v203 = vld [vmem:[#allocation2 + $0x1d8] sm:$0xff]
    %v204 = vld [vmem:[#allocation2 + $0x1e0] sm:$0xff]
    %v205 = vld [vmem:[#allocation2 + $0x1e8] sm:$0xff]
    %v206 = vld [vmem:[#allocation2 + $0x1f0] sm:$0xff]
    %v207 = vld [vmem:[#allocation2 + $0x1f8] sm:$0xff]
    %v208 = vld [vmem:[#allocation5] sm:$0xff]
    %v209 = vld [vmem:[#allocation5 + $0x8] sm:$0xff]
    %v210 = vld [vmem:[#allocation5 + $0x10] sm:$0xff]
    %v211 = vld [vmem:[#allocation5 + $0x18] sm:$0xff]
    %v212 = vld [vmem:[#allocation5 + $0x20] sm:$0xff]
    %v213 = vld [vmem:[#allocation5 + $0x28] sm:$0xff]
    %v214 = vld [vmem:[#allocation5 + $0x30] sm:$0xff]
    %v215 = vld [vmem:[#allocation5 + $0x38] sm:$0xff]
    %v216 = vld [vmem:[#allocation5 + $0x40] sm:$0xff]
    %v217 = vld [vmem:[#allocation5 + $0x48] sm:$0xff]
    %v218 = vld [vmem:[#allocation5 + $0x50] sm:$0xff]
    %v219 = vld [vmem:[#allocation5 + $0x58] sm:$0xff]
    %v220 = vld [vmem:[#allocation5 + $0x60] sm:$0xff]
    %v221 = vld [vmem:[#allocation5 + $0x68] sm:$0xff]
    %v222 = vld [vmem:[#allocation5 + $0x70] sm:$0xff]
    %v223 = vld [vmem:[#allocation5 + $0x78] sm:$0xff]
    %v224 = vld [vmem:[#allocation5 + $0x80] sm:$0xff]
    %v225 = vld [vmem:[#allocation5 + $0x88] sm:$0xff]
    %v226 = vld [vmem:[#allocation5 + $0x90] sm:$0xff]
    %v227 = vld [vmem:[#allocation5 + $0x98] sm:$0xff]
    %v228 = vld [vmem:[#allocation5 + $0xa0] sm:$0xff]
    %v229 = vld [vmem:[#allocation5 + $0xa8] sm:$0xff]
    %v230 = vld [vmem:[#allocation5 + $0xb0] sm:$0xff]
    %v231 = vld [vmem:[#allocation5 + $0xb8] sm:$0xff]
    %v232 = vld [vmem:[#allocation5 + $0xc0] sm:$0xff]
    %v233 = vld [vmem:[#allocation5 + $0xc8] sm:$0xff]
    %v234 = vld [vmem:[#allocation5 + $0xd0] sm:$0xff]
    %v235 = vld [vmem:[#allocation5 + $0xd8] sm:$0xff]
    %v236 = vld [vmem:[#allocation5 + $0xe0] sm:$0xff]
    %v237 = vld [vmem:[#allocation5 + $0xe8] sm:$0xff]
    %v238 = vld [vmem:[#allocation5 + $0xf0] sm:$0xff]
    %v239 = vld [vmem:[#allocation5 + $0xf8] sm:$0xff]
    %v240 = vld [vmem:[#allocation5 + $0x100] sm:$0xff]
    %v241 = vld [vmem:[#allocation5 + $0x108] sm:$0xff]
    %v242 = vld [vmem:[#allocation5 + $0x110] sm:$0xff]
    %v243 = vld [vmem:[#allocation5 + $0x118] sm:$0xff]
    %v244 = vld [vmem:[#allocation5 + $0x120] sm:$0xff]
    %v245 = vld [vmem:[#allocation5 + $0x128] sm:$0xff]
    %v246 = vld [vmem:[#allocation5 + $0x130] sm:$0xff]
    %v247 = vld [vmem:[#allocation5 + $0x138] sm:$0xff]
    %v248 = vld [vmem:[#allocation5 + $0x140] sm:$0xff]
    %v249 = vld [vmem:[#allocation5 + $0x148] sm:$0xff]
    %v250 = vld [vmem:[#allocation5 + $0x150] sm:$0xff]
    %v251 = vld [vmem:[#allocation5 + $0x158] sm:$0xff]
    %v252 = vld [vmem:[#allocation5 + $0x160] sm:$0xff]
    %v253 = vld [vmem:[#allocation5 + $0x168] sm:$0xff]
    %v254 = vld [vmem:[#allocation5 + $0x170] sm:$0xff]
    %v255 = vld [vmem:[#allocation5 + $0x178] sm:$0xff]
    %v256 = vld [vmem:[#allocation5 + $0x180] sm:$0xff]
    %v257 = vld [vmem:[#allocation5 + $0x188] sm:$0xff]
    %v258 = vld [vmem:[#allocation5 + $0x190] sm:$0xff]
    %v259 = vld [vmem:[#allocation5 + $0x198] sm:$0xff]
    %v260 = vld [vmem:[#allocation5 + $0x1a0] sm:$0xff]
    %v261 = vld [vmem:[#allocation5 + $0x1a8] sm:$0xff]
    %v262 = vld [vmem:[#allocation5 + $0x1b0] sm:$0xff]
    %v263 = vld [vmem:[#allocation5 + $0x1b8] sm:$0xff]
    %v264 = vld [vmem:[#allocation5 + $0x1c0] sm:$0xff]
    %v265 = vld [vmem:[#allocation5 + $0x1c8] sm:$0xff]
    %v266 = vld [vmem:[#allocation5 + $0x1d0] sm:$0xff]
    %v267 = vld [vmem:[#allocation5 + $0x1d8] sm:$0xff]
    %v268 = vld [vmem:[#allocation5 + $0x1e0] sm:$0xff]
    %v269 = vld [vmem:[#allocation5 + $0x1e8] sm:$0xff]
    %v270 = vld [vmem:[#allocation5 + $0x1f0] sm:$0xff]
    %v271 = vld [vmem:[#allocation5 + $0x1f8] sm:$0xff]
    %v272 = vld [vmem:[#allocation7] sm:$0xff]
    %v273 = vld [vmem:[#allocation7 + $0x8] sm:$0xff]
    %v274 = vld [vmem:[#allocation7 + $0x10] sm:$0xff]
    %v275 = vld [vmem:[#allocation7 + $0x18] sm:$0xff]
    %v276 = vld [vmem:[#allocation7 + $0x20] sm:$0xff]
    %v277 = vld [vmem:[#allocation7 + $0x28] sm:$0xff]
    %v278 = vld [vmem:[#allocation7 + $0x30] sm:$0xff]
    %v279 = vld [vmem:[#allocation7 + $0x38] sm:$0xff]
    %v280 = vld [vmem:[#allocation7 + $0x40] sm:$0xff]
    %v281 = vld [vmem:[#allocation7 + $0x48] sm:$0xff]
    %v282 = vld [vmem:[#allocation7 + $0x50] sm:$0xff]
    %v283 = vld [vmem:[#allocation7 + $0x58] sm:$0xff]
    %v284 = vld [vmem:[#allocation7 + $0x60] sm:$0xff]
    %v285 = vld [vmem:[#allocation7 + $0x68] sm:$0xff]
    %v286 = vld [vmem:[#allocation7 + $0x70] sm:$0xff]
    %v287 = vld [vmem:[#allocation7 + $0x78] sm:$0xff]
    %v288 = vld [vmem:[#allocation7 + $0x80] sm:$0xff]
    %v289 = vld [vmem:[#allocation7 + $0x88] sm:$0xff]
    %v290 = vld [vmem:[#allocation7 + $0x90] sm:$0xff]
    %v291 = vld [vmem:[#allocation7 + $0x98] sm:$0xff]
    %v292 = vld [vmem:[#allocation7 + $0xa0] sm:$0xff]
    %v293 = vld [vmem:[#allocation7 + $0xa8] sm:$0xff]
    %v294 = vld [vmem:[#allocation7 + $0xb0] sm:$0xff]
    %v295 = vld [vmem:[#allocation7 + $0xb8] sm:$0xff]
    %v296 = vld [vmem:[#allocation7 + $0xc0] sm:$0xff]
    %v297 = vld [vmem:[#allocation7 + $0xc8] sm:$0xff]
    %v298 = vld [vmem:[#allocation7 + $0xd0] sm:$0xff]
    %v299 = vld [vmem:[#allocation7 + $0xd8] sm:$0xff]
    %v300 = vld [vmem:[#allocation7 + $0xe0] sm:$0xff]
    %v301 = vld [vmem:[#allocation7 + $0xe8] sm:$0xff]
    %v302 = vld [vmem:[#allocation7 + $0xf0] sm:$0xff]
    %v303 = vld [vmem:[#allocation7 + $0xf8] sm:$0xff]
    %v304 = vld [vmem:[#allocation7 + $0x100] sm:$0xff]
    %v305 = vld [vmem:[#allocation7 + $0x108] sm:$0xff]
    %v306 = vld [vmem:[#allocation7 + $0x110] sm:$0xff]
    %v307 = vld [vmem:[#allocation7 + $0x118] sm:$0xff]
    %v308 = vld [vmem:[#allocation7 + $0x120] sm:$0xff]
    %v309 = vld [vmem:[#allocation7 + $0x128] sm:$0xff]
    %v310 = vld [vmem:[#allocation7 + $0x130] sm:$0xff]
    %v311 = vld [vmem:[#allocation7 + $0x138] sm:$0xff]
    %v312 = vld [vmem:[#allocation7 + $0x140] sm:$0xff]
    %v313 = vld [vmem:[#allocation7 + $0x148] sm:$0xff]
    %v314 = vld [vmem:[#allocation7 + $0x150] sm:$0xff]
    %v315 = vld [vmem:[#allocation7 + $0x158] sm:$0xff]
    %v316 = vld [vmem:[#allocation7 + $0x160] sm:$0xff]
    %v317 = vld [vmem:[#allocation7 + $0x168] sm:$0xff]
    %v318 = vld [vmem:[#allocation7 + $0x170] sm:$0xff]
    %v319 = vld [vmem:[#allocation7 + $0x178] sm:$0xff]
    %v320 = vld [vmem:[#allocation7 + $0x180] sm:$0xff]
    %v321 = vld [vmem:[#allocation7 + $0x188] sm:$0xff]
    %v322 = vld [vmem:[#allocation7 + $0x190] sm:$0xff]
    %v323 = vld [vmem:[#allocation7 + $0x198] sm:$0xff]
    %v324 = vld [vmem:[#allocation7 + $0x1a0] sm:$0xff]
    %v325 = vld [vmem:[#allocation7 + $0x1a8] sm:$0xff]
    %v326 = vld [vmem:[#allocation7 + $0x1b0] sm:$0xff]
    %v327 = vld [vmem:[#allocation7 + $0x1b8] sm:$0xff]
    %v328 = vld [vmem:[#allocation7 + $0x1c0] sm:$0xff]
    %v329 = vld [vmem:[#allocation7 + $0x1c8] sm:$0xff]
    %v330 = vld [vmem:[#allocation7 + $0x1d0] sm:$0xff]
    %v331 = vld [vmem:[#allocation7 + $0x1d8] sm:$0xff]
    %v332 = vld [vmem:[#allocation7 + $0x1e0] sm:$0xff]
    %v333 = vld [vmem:[#allocation7 + $0x1e8] sm:$0xff]
    %v334 = vld [vmem:[#allocation7 + $0x1f0] sm:$0xff]
    %v335 = vld [vmem:[#allocation7 + $0x1f8] sm:$0xff]
    %v336 = vld [vmem:[#allocation8] sm:$0xff]
    %v337 = vld [vmem:[#allocation8 + $0x8] sm:$0xff]
    %v338 = vld [vmem:[#allocation8 + $0x10] sm:$0xff]
    %v339 = vld [vmem:[#allocation8 + $0x18] sm:$0xff]
    %v340 = vld [vmem:[#allocation8 + $0x20] sm:$0xff]
    %v341 = vld [vmem:[#allocation8 + $0x28] sm:$0xff]
    %v342 = vld [vmem:[#allocation8 + $0x30] sm:$0xff]
    %v343 = vld [vmem:[#allocation8 + $0x38] sm:$0xff]
    %v344 = vld [vmem:[#allocation8 + $0x40] sm:$0xff]
    %v345 = vld [vmem:[#allocation8 + $0x48] sm:$0xff]
    %v346 = vld [vmem:[#allocation8 + $0x50] sm:$0xff]
    %v347 = vld [vmem:[#allocation8 + $0x58] sm:$0xff]
    %v348 = vld [vmem:[#allocation8 + $0x60] sm:$0xff]
    %v349 = vld [vmem:[#allocation8 + $0x68] sm:$0xff]
    %v350 = vld [vmem:[#allocation8 + $0x70] sm:$0xff]
    %v351 = vld [vmem:[#allocation8 + $0x78] sm:$0xff]
    %v352 = vld [vmem:[#allocation8 + $0x80] sm:$0xff]
    %v353 = vld [vmem:[#allocation8 + $0x88] sm:$0xff]
    %v354 = vld [vmem:[#allocation8 + $0x90] sm:$0xff]
    %v355 = vld [vmem:[#allocation8 + $0x98] sm:$0xff]
    %v356 = vld [vmem:[#allocation8 + $0xa0] sm:$0xff]
    %v357 = vld [vmem:[#allocation8 + $0xa8] sm:$0xff]
    %v358 = vld [vmem:[#allocation8 + $0xb0] sm:$0xff]
    %v359 = vld [vmem:[#allocation8 + $0xb8] sm:$0xff]
    %v360 = vld [vmem:[#allocation8 + $0xc0] sm:$0xff]
    %v361 = vld [vmem:[#allocation8 + $0xc8] sm:$0xff]
    %v362 = vld [vmem:[#allocation8 + $0xd0] sm:$0xff]
    %v363 = vld [vmem:[#allocation8 + $0xd8] sm:$0xff]
    %v364 = vld [vmem:[#allocation8 + $0xe0] sm:$0xff]
    %v365 = vld [vmem:[#allocation8 + $0xe8] sm:$0xff]
    %v366 = vld [vmem:[#allocation8 + $0xf0] sm:$0xff]
    %v367 = vld [vmem:[#allocation8 + $0xf8] sm:$0xff]
    %v368 = vld [vmem:[#allocation8 + $0x100] sm:$0xff]
    %v369 = vld [vmem:[#allocation8 + $0x108] sm:$0xff]
    %v370 = vld [vmem:[#allocation8 + $0x110] sm:$0xff]
    %v371 = vld [vmem:[#allocation8 + $0x118] sm:$0xff]
    %v372 = vld [vmem:[#allocation8 + $0x120] sm:$0xff]
    %v373 = vld [vmem:[#allocation8 + $0x128] sm:$0xff]
    %v374 = vld [vmem:[#allocation8 + $0x130] sm:$0xff]
    %v375 = vld [vmem:[#allocation8 + $0x138] sm:$0xff]
    %v376 = vld [vmem:[#allocation8 + $0x140] sm:$0xff]
    %v377 = vld [vmem:[#allocation8 + $0x148] sm:$0xff]
    %v378 = vld [vmem:[#allocation8 + $0x150] sm:$0xff]
    %v379 = vld [vmem:[#allocation8 + $0x158] sm:$0xff]
    %v380 = vld [vmem:[#allocation8 + $0x160] sm:$0xff]
    %v381 = vld [vmem:[#allocation8 + $0x168] sm:$0xff]
    %v382 = vld [vmem:[#allocation8 + $0x170] sm:$0xff]
    %v383 = vld [vmem:[#allocation8 + $0x178] sm:$0xff]
    %v384 = vld [vmem:[#allocation8 + $0x180] sm:$0xff]
    %v385 = vld [vmem:[#allocation8 + $0x188] sm:$0xff]
    %v386 = vld [vmem:[#allocation8 + $0x190] sm:$0xff]
    %v387 = vld [vmem:[#allocation8 + $0x198] sm:$0xff]
    %v388 = vld [vmem:[#allocation8 + $0x1a0] sm:$0xff]
    %v389 = vld [vmem:[#allocation8 + $0x1a8] sm:$0xff]
    %v390 = vld [vmem:[#allocation8 + $0x1b0] sm:$0xff]
    %v391 = vld [vmem:[#allocation8 + $0x1b8] sm:$0xff]
    %v392 = vld [vmem:[#allocation8 + $0x1c0] sm:$0xff]
    %v393 = vld [vmem:[#allocation8 + $0x1c8] sm:$0xff]
    %v394 = vld [vmem:[#allocation8 + $0x1d0] sm:$0xff]
    %v395 = vld [vmem:[#allocation8 + $0x1d8] sm:$0xff]
    %v396 = vld [vmem:[#allocation8 + $0x1e0] sm:$0xff]
    %v397 = vld [vmem:[#allocation8 + $0x1e8] sm:$0xff]
    %v398 = vld [vmem:[#allocation8 + $0x1f0] sm:$0xff]
    %v399 = vld [vmem:[#allocation8 + $0x1f8] sm:$0xff]
    %v402 = vunpack.c.l.s4 1983009808
    %v403 = vunpack.c.0.s8 %v402
    %v404 = vlaneseq
    %v405 = vshrl.u32 %v404, 7
    %v406 = vsub.s32 %v403, %v405
    %v407 = vrot.slane %v141, %v406
    %v408 = vcombine.high %v407, %v407
    %411 = vmatprep.subr.mxu0 %v145
    %412 = vmatpush1.msra.mxu0 %v144
    %413 = vmatprep.subr.mxu0 %v147
    %414 = vmatpush1.msra.mxu0 %v146
    %415 = vmatprep.subr.mxu0 %v149
    %416 = vmatpush1.msra.mxu0 %v148
    %417 = vmatprep.subr.mxu0 %v151
    %418 = vmatpush1.msra.mxu0 %v150
    %419 = vmatprep.subr.mxu0 %v153
    %420 = vmatpush1.msra.mxu0 %v152
    %421 = vmatprep.subr.mxu0 %v155
    %422 = vmatpush1.msra.mxu0 %v154
    %423 = vmatprep.subr.mxu0 %v157
    %424 = vmatpush1.msra.mxu0 %v156
    %425 = vmatprep.subr.mxu0 %v159
    %426 = vmatpush1.msra.mxu0 %v158
    %427 = vmatprep.subr.mxu0 %v161
    %428 = vmatpush1.msra.mxu0 %v160
    %429 = vmatprep.subr.mxu0 %v163
    %430 = vmatpush1.msra.mxu0 %v162
    %431 = vmatprep.subr.mxu0 %v165
    %432 = vmatpush1.msra.mxu0 %v164
    %433 = vmatprep.subr.mxu0 %v167
    %434 = vmatpush1.msra.mxu0 %v166
    %435 = vmatprep.subr.mxu0 %v169
    %436 = vmatpush1.msra.mxu0 %v168
    %437 = vmatprep.subr.mxu0 %v171
    %438 = vmatpush1.msra.mxu0 %v170
    %439 = vmatprep.subr.mxu0 %v173
    %440 = vmatpush1.msra.mxu0 %v172
    %441 = vmatprep.subr.mxu0 %v175
    %442 = vmatpush1.msra.mxu0 %v174
    %443 = vmatprep.subr.mxu0 %v177
    %444 = vmatpush1.msra.mxu0 %v176
    %445 = vmatprep.subr.mxu0 %v179
    %446 = vmatpush1.msra.mxu0 %v178
    %447 = vmatprep.subr.mxu0 %v181
    %448 = vmatpush1.msra.mxu0 %v180
    %449 = vmatprep.subr.mxu0 %v183
    %450 = vmatpush1.msra.mxu0 %v182
    %451 = vmatprep.subr.mxu0 %v185
    %452 = vmatpush1.msra.mxu0 %v184
    %453 = vmatprep.subr.mxu0 %v187
    %454 = vmatpush1.msra.mxu0 %v186
    %455 = vmatprep.subr.mxu0 %v189
    %456 = vmatpush1.msra.mxu0 %v188
    %457 = vmatprep.subr.mxu0 %v191
    %458 = vmatpush1.msra.mxu0 %v190
    %459 = vmatprep.subr.mxu0 %v193
    %460 = vmatpush1.msra.mxu0 %v192
    %461 = vmatprep.subr.mxu0 %v195
    %462 = vmatpush1.msra.mxu0 %v194
    %463 = vmatprep.subr.mxu0 %v197
    %464 = vmatpush1.msra.mxu0 %v196
    %465 = vmatprep.subr.mxu0 %v199
    %466 = vmatpush1.msra.mxu0 %v198
    %467 = vmatprep.subr.mxu0 %v201
    %468 = vmatpush1.msra.mxu0 %v200
    %469 = vmatprep.subr.mxu0 %v203
    %470 = vmatpush1.msra.mxu0 %v202
    %471 = vmatprep.subr.mxu0 %v205
    %472 = vmatpush1.msra.mxu0 %v204
    %473 = vmatprep.subr.mxu0 %v207
    %474 = vmatpush1.msra.mxu0 %v206
    %475 = vmatprep.mubr.f32.mxu0 %v408
    %476 = vmatmul.mubr.f32.gmra.mrb[0].mxu0 %v407
    %v477 = vpop.f32.mrb[0].mxu0
    %v478 = vadd.f32 0.0, %v477
    %v479 = vpop.f32.mrb[0].mxu0
    %v480 = vadd.f32 0.0, %v479
    %481 = vdwg.mxu0
    %482 = vmatprep.subr.mxu0 %v209
    %483 = vmatpush1.msra.mxu0 %v208
    %484 = vmatprep.subr.mxu0 %v211
    %485 = vmatpush1.msra.mxu0 %v210
    %486 = vmatprep.subr.mxu0 %v213
    %487 = vmatpush1.msra.mxu0 %v212
    %488 = vmatprep.subr.mxu0 %v215
    %489 = vmatpush1.msra.mxu0 %v214
    %490 = vmatprep.subr.mxu0 %v217
    %491 = vmatpush1.msra.mxu0 %v216
    %492 = vmatprep.subr.mxu0 %v219
    %493 = vmatpush1.msra.mxu0 %v218
    %494 = vmatprep.subr.mxu0 %v221
    %495 = vmatpush1.msra.mxu0 %v220
    %496 = vmatprep.subr.mxu0 %v223
    %497 = vmatpush1.msra.mxu0 %v222
    %498 = vmatprep.subr.mxu0 %v225
    %499 = vmatpush1.msra.mxu0 %v224
    %500 = vmatprep.subr.mxu0 %v227
    %501 = vmatpush1.msra.mxu0 %v226
    %502 = vmatprep.subr.mxu0 %v229
    %503 = vmatpush1.msra.mxu0 %v228
    %504 = vmatprep.subr.mxu0 %v231
    %505 = vmatpush1.msra.mxu0 %v230
    %506 = vmatprep.subr.mxu0 %v233
    %507 = vmatpush1.msra.mxu0 %v232
    %508 = vmatprep.subr.mxu0 %v235
    %509 = vmatpush1.msra.mxu0 %v234
    %510 = vmatprep.subr.mxu0 %v237
    %511 = vmatpush1.msra.mxu0 %v236
    %512 = vmatprep.subr.mxu0 %v239
    %513 = vmatpush1.msra.mxu0 %v238
    %514 = vmatprep.subr.mxu0 %v241
    %515 = vmatpush1.msra.mxu0 %v240
    %516 = vmatprep.subr.mxu0 %v243
    %517 = vmatpush1.msra.mxu0 %v242
    %518 = vmatprep.subr.mxu0 %v245
    %519 = vmatpush1.msra.mxu0 %v244
    %520 = vmatprep.subr.mxu0 %v247
    %521 = vmatpush1.msra.mxu0 %v246
    %522 = vmatprep.subr.mxu0 %v249
    %523 = vmatpush1.msra.mxu0 %v248
    %524 = vmatprep.subr.mxu0 %v251
    %525 = vmatpush1.msra.mxu0 %v250
    %526 = vmatprep.subr.mxu0 %v253
    %527 = vmatpush1.msra.mxu0 %v252
    %528 = vmatprep.subr.mxu0 %v255
    %529 = vmatpush1.msra.mxu0 %v254
    %530 = vmatprep.subr.mxu0 %v257
    %531 = vmatpush1.msra.mxu0 %v256
    %532 = vmatprep.subr.mxu0 %v259
    %533 = vmatpush1.msra.mxu0 %v258
    %534 = vmatprep.subr.mxu0 %v261
    %535 = vmatpush1.msra.mxu0 %v260
    %536 = vmatprep.subr.mxu0 %v263
    %537 = vmatpush1.msra.mxu0 %v262
    %538 = vmatprep.subr.mxu0 %v265
    %539 = vmatpush1.msra.mxu0 %v264
    %540 = vmatprep.subr.mxu0 %v267
    %541 = vmatpush1.msra.mxu0 %v266
    %542 = vmatprep.subr.mxu0 %v269
    %543 = vmatpush1.msra.mxu0 %v268
    %544 = vmatprep.subr.mxu0 %v271
    %545 = vmatpush1.msra.mxu0 %v270
    %546 = vmatprep.mubr.f32.mxu0 %v408
    %547 = vmatmul.mubr.f32.gmra.mrb[0].mxu0 %v407
    %v548 = vpop.f32.mrb[0].mxu0
    %v549 = vadd.f32 0.0, %v548
    %v550 = vpop.f32.mrb[0].mxu0
    %v551 = vadd.f32 0.0, %v550
    %552 = vdwg.mxu0
    %v555 = vcombine.low %v478, %v480
    %v557 = vunpack.c.l.s4 1983009808
    %v558 = vunpack.c.0.s8 %v557
    %v559 = vlaneseq
    %v560 = vshrl.u32 %v559, 7
    %v561 = vsub.s32 %v558, %v560
    %v562 = vrot.slane %v555, %v561
    %v564 = vmul.f32 %v143, %v562
    %v567 = vcombine.low %v549, %v551
    %v569 = vunpack.c.l.s4 1983009808
    %v570 = vunpack.c.0.s8 %v569
    %v571 = vlaneseq
    %v572 = vshrl.u32 %v571, 7
    %v573 = vsub.s32 %v570, %v572
    %v574 = vrot.slane %v567, %v573
    %v576 = vmul.f32 %v143, %v574
    %v579 = vunpack.c.l.s4 1983009808
    %v580 = vunpack.c.0.s8 %v579
    %v581 = vlaneseq
    %v582 = vshrl.u32 %v581, 7
    %v583 = vsub.s32 %v580, %v582
    %v584 = vrot.slane %v564, %v583
    %v585 = vcombine.high %v584, %v584
    %588 = vmatprep.subr.mxu0 %v273
    %589 = vmatpush1.msra.mxu0 %v272
    %590 = vmatprep.subr.mxu0 %v275
    %591 = vmatpush1.msra.mxu0 %v274
    %592 = vmatprep.subr.mxu0 %v277
    %593 = vmatpush1.msra.mxu0 %v276
    %594 = vmatprep.subr.mxu0 %v279
    %595 = vmatpush1.msra.mxu0 %v278
    %596 = vmatprep.subr.mxu0 %v281
    %597 = vmatpush1.msra.mxu0 %v280
    %598 = vmatprep.subr.mxu0 %v283
    %599 = vmatpush1.msra.mxu0 %v282
    %600 = vmatprep.subr.mxu0 %v285
    %601 = vmatpush1.msra.mxu0 %v284
    %602 = vmatprep.subr.mxu0 %v287
    %603 = vmatpush1.msra.mxu0 %v286
    %604 = vmatprep.subr.mxu0 %v289
    %605 = vmatpush1.msra.mxu0 %v288
    %606 = vmatprep.subr.mxu0 %v291
    %607 = vmatpush1.msra.mxu0 %v290
    %608 = vmatprep.subr.mxu0 %v293
    %609 = vmatpush1.msra.mxu0 %v292
    %610 = vmatprep.subr.mxu0 %v295
    %611 = vmatpush1.msra.mxu0 %v294
    %612 = vmatprep.subr.mxu0 %v297
    %613 = vmatpush1.msra.mxu0 %v296
    %614 = vmatprep.subr.mxu0 %v299
    %615 = vmatpush1.msra.mxu0 %v298
    %616 = vmatprep.subr.mxu0 %v301
    %617 = vmatpush1.msra.mxu0 %v300
    %618 = vmatprep.subr.mxu0 %v303
    %619 = vmatpush1.msra.mxu0 %v302
    %620 = vmatprep.subr.mxu0 %v305
    %621 = vmatpush1.msra.mxu0 %v304
    %622 = vmatprep.subr.mxu0 %v307
    %623 = vmatpush1.msra.mxu0 %v306
    %624 = vmatprep.subr.mxu0 %v309
    %625 = vmatpush1.msra.mxu0 %v308
    %626 = vmatprep.subr.mxu0 %v311
    %627 = vmatpush1.msra.mxu0 %v310
    %628 = vmatprep.subr.mxu0 %v313
    %629 = vmatpush1.msra.mxu0 %v312
    %630 = vmatprep.subr.mxu0 %v315
    %631 = vmatpush1.msra.mxu0 %v314
    %632 = vmatprep.subr.mxu0 %v317
    %633 = vmatpush1.msra.mxu0 %v316
    %634 = vmatprep.subr.mxu0 %v319
    %635 = vmatpush1.msra.mxu0 %v318
    %636 = vmatprep.subr.mxu0 %v321
    %637 = vmatpush1.msra.mxu0 %v320
    %638 = vmatprep.subr.mxu0 %v323
    %639 = vmatpush1.msra.mxu0 %v322
    %640 = vmatprep.subr.mxu0 %v325
    %641 = vmatpush1.msra.mxu0 %v324
    %642 = vmatprep.subr.mxu0 %v327
    %643 = vmatpush1.msra.mxu0 %v326
    %644 = vmatprep.subr.mxu0 %v329
    %645 = vmatpush1.msra.mxu0 %v328
    %646 = vmatprep.subr.mxu0 %v331
    %647 = vmatpush1.msra.mxu0 %v330
    %648 = vmatprep.subr.mxu0 %v333
    %649 = vmatpush1.msra.mxu0 %v332
    %650 = vmatprep.subr.mxu0 %v335
    %651 = vmatpush1.msra.mxu0 %v334
    %652 = vmatprep.mubr.f32.mxu0 %v585
    %653 = vmatmul.mubr.f32.gmra.mrb[0].mxu0 %v584
    %v654 = vpop.f32.mrb[0].mxu0
    %v655 = vadd.f32 0.0, %v654
    %v656 = vpop.f32.mrb[0].mxu0
    %v657 = vadd.f32 0.0, %v656
    %658 = vdwg.mxu0
    %v661 = vunpack.c.l.s4 1983009808
    %v662 = vunpack.c.0.s8 %v661
    %v663 = vlaneseq
    %v664 = vshrl.u32 %v663, 7
    %v665 = vsub.s32 %v662, %v664
    %v666 = vrot.slane %v576, %v665
    %v667 = vcombine.high %v666, %v666
    %670 = vmatprep.subr.mxu0 %v337
    %671 = vmatpush1.msra.mxu0 %v336
    %672 = vmatprep.subr.mxu0 %v339
    %673 = vmatpush1.msra.mxu0 %v338
    %674 = vmatprep.subr.mxu0 %v341
    %675 = vmatpush1.msra.mxu0 %v340
    %676 = vmatprep.subr.mxu0 %v343
    %677 = vmatpush1.msra.mxu0 %v342
    %678 = vmatprep.subr.mxu0 %v345
    %679 = vmatpush1.msra.mxu0 %v344
    %680 = vmatprep.subr.mxu0 %v347
    %681 = vmatpush1.msra.mxu0 %v346
    %682 = vmatprep.subr.mxu0 %v349
    %683 = vmatpush1.msra.mxu0 %v348
    %684 = vmatprep.subr.mxu0 %v351
    %685 = vmatpush1.msra.mxu0 %v350
    %686 = vmatprep.subr.mxu0 %v353
    %687 = vmatpush1.msra.mxu0 %v352
    %688 = vmatprep.subr.mxu0 %v355
    %689 = vmatpush1.msra.mxu0 %v354
    %690 = vmatprep.subr.mxu0 %v357
    %691 = vmatpush1.msra.mxu0 %v356
    %692 = vmatprep.subr.mxu0 %v359
    %693 = vmatpush1.msra.mxu0 %v358
    %694 = vmatprep.subr.mxu0 %v361
    %695 = vmatpush1.msra.mxu0 %v360
    %696 = vmatprep.subr.mxu0 %v363
    %697 = vmatpush1.msra.mxu0 %v362
    %698 = vmatprep.subr.mxu0 %v365
    %699 = vmatpush1.msra.mxu0 %v364
    %700 = vmatprep.subr.mxu0 %v367
    %701 = vmatpush1.msra.mxu0 %v366
    %702 = vmatprep.subr.mxu0 %v369
    %703 = vmatpush1.msra.mxu0 %v368
    %704 = vmatprep.subr.mxu0 %v371
    %705 = vmatpush1.msra.mxu0 %v370
    %706 = vmatprep.subr.mxu0 %v373
    %707 = vmatpush1.msra.mxu0 %v372
    %708 = vmatprep.subr.mxu0 %v375
    %709 = vmatpush1.msra.mxu0 %v374
    %710 = vmatprep.subr.mxu0 %v377
    %711 = vmatpush1.msra.mxu0 %v376
    %712 = vmatprep.subr.mxu0 %v379
    %713 = vmatpush1.msra.mxu0 %v378
    %714 = vmatprep.subr.mxu0 %v381
    %715 = vmatpush1.msra.mxu0 %v380
    %716 = vmatprep.subr.mxu0 %v383
    %717 = vmatpush1.msra.mxu0 %v382
    %718 = vmatprep.subr.mxu0 %v385
    %719 = vmatpush1.msra.mxu0 %v384
    %720 = vmatprep.subr.mxu0 %v387
    %721 = vmatpush1.msra.mxu0 %v386
    %722 = vmatprep.subr.mxu0 %v389
    %723 = vmatpush1.msra.mxu0 %v388
    %724 = vmatprep.subr.mxu0 %v391
    %725 = vmatpush1.msra.mxu0 %v390
    %726 = vmatprep.subr.mxu0 %v393
    %727 = vmatpush1.msra.mxu0 %v392
    %728 = vmatprep.subr.mxu0 %v395
    %729 = vmatpush1.msra.mxu0 %v394
    %730 = vmatprep.subr.mxu0 %v397
    %731 = vmatpush1.msra.mxu0 %v396
    %732 = vmatprep.subr.mxu0 %v399
    %733 = vmatpush1.msra.mxu0 %v398
    %734 = vmatprep.mubr.f32.mxu0 %v667
    %735 = vmatmul.mubr.f32.gmra.mrb[0].mxu0 %v666
    %v736 = vpop.f32.mrb[0].mxu0
    %v737 = vadd.f32 0.0, %v736
    %v738 = vpop.f32.mrb[0].mxu0
    %v739 = vadd.f32 0.0, %v738
    %740 = vdwg.mxu0
    %v741 = vsub.f32 %v655, %v737
    %v742 = vsub.f32 %v657, %v739
    %v743 = vmax.f32 %v741, 0.0
    %v744 = vmax.f32 %v742, 0.0
    %v745 = vmin.f32 %v743, 1.0
    %v746 = vmin.f32 %v744, 1.0
    %v747 = vld [vmem:[#allocation10] sm:$0xff]
    %v748 = vld [vmem:[#allocation10 + $0x8] sm:$0xff]
    %v749 = vld [vmem:[#allocation10 + $0x10] sm:$0xff]
    %v750 = vld [vmem:[#allocation10 + $0x18] sm:$0xff]
    %v751 = vld [vmem:[#allocation10 + $0x20] sm:$0xff]
    %v752 = vld [vmem:[#allocation10 + $0x28] sm:$0xff]
    %v753 = vld [vmem:[#allocation10 + $0x30] sm:$0xff]
    %v754 = vld [vmem:[#allocation10 + $0x38] sm:$0xff]
    %v755 = vld [vmem:[#allocation10 + $0x40] sm:$0xff]
    %v756 = vld [vmem:[#allocation10 + $0x48] sm:$0xff]
    %v757 = vld [vmem:[#allocation10 + $0x50] sm:$0xff]
    %v758 = vld [vmem:[#allocation10 + $0x58] sm:$0xff]
    %v759 = vld [vmem:[#allocation10 + $0x60] sm:$0xff]
    %v760 = vld [vmem:[#allocation10 + $0x68] sm:$0xff]
    %v761 = vld [vmem:[#allocation10 + $0x70] sm:$0xff]
    %v762 = vld [vmem:[#allocation10 + $0x78] sm:$0xff]
    %v763 = vld [vmem:[#allocation10 + $0x80] sm:$0xff]
    %v764 = vld [vmem:[#allocation10 + $0x88] sm:$0xff]
    %v765 = vld [vmem:[#allocation10 + $0x90] sm:$0xff]
    %v766 = vld [vmem:[#allocation10 + $0x98] sm:$0xff]
    %v767 = vld [vmem:[#allocation10 + $0xa0] sm:$0xff]
    %v768 = vld [vmem:[#allocation10 + $0xa8] sm:$0xff]
    %v769 = vld [vmem:[#allocation10 + $0xb0] sm:$0xff]
    %v770 = vld [vmem:[#allocation10 + $0xb8] sm:$0xff]
    %v771 = vld [vmem:[#allocation10 + $0xc0] sm:$0xff]
    %v772 = vld [vmem:[#allocation10 + $0xc8] sm:$0xff]
    %v773 = vld [vmem:[#allocation10 + $0xd0] sm:$0xff]
    %v774 = vld [vmem:[#allocation10 + $0xd8] sm:$0xff]
    %v775 = vld [vmem:[#allocation10 + $0xe0] sm:$0xff]
    %v776 = vld [vmem:[#allocation10 + $0xe8] sm:$0xff]
    %v777 = vld [vmem:[#allocation10 + $0xf0] sm:$0xff]
    %v778 = vld [vmem:[#allocation10 + $0xf8] sm:$0xff]
    %v779 = vld [vmem:[#allocation10 + $0x100] sm:$0xff]
    %v780 = vld [vmem:[#allocation10 + $0x108] sm:$0xff]
    %v781 = vld [vmem:[#allocation10 + $0x110] sm:$0xff]
    %v782 = vld [vmem:[#allocation10 + $0x118] sm:$0xff]
    %v783 = vld [vmem:[#allocation10 + $0x120] sm:$0xff]
    %v784 = vld [vmem:[#allocation10 + $0x128] sm:$0xff]
    %v785 = vld [vmem:[#allocation10 + $0x130] sm:$0xff]
    %v786 = vld [vmem:[#allocation10 + $0x138] sm:$0xff]
    %v787 = vld [vmem:[#allocation10 + $0x140] sm:$0xff]
    %v788 = vld [vmem:[#allocation10 + $0x148] sm:$0xff]
    %v789 = vld [vmem:[#allocation10 + $0x150] sm:$0xff]
    %v790 = vld [vmem:[#allocation10 + $0x158] sm:$0xff]
    %v791 = vld [vmem:[#allocation10 + $0x160] sm:$0xff]
    %v792 = vld [vmem:[#allocation10 + $0x168] sm:$0xff]
    %v793 = vld [vmem:[#allocation10 + $0x170] sm:$0xff]
    %v794 = vld [vmem:[#allocation10 + $0x178] sm:$0xff]
    %v795 = vld [vmem:[#allocation10 + $0x180] sm:$0xff]
    %v796 = vld [vmem:[#allocation10 + $0x188] sm:$0xff]
    %v797 = vld [vmem:[#allocation10 + $0x190] sm:$0xff]
    %v798 = vld [vmem:[#allocation10 + $0x198] sm:$0xff]
    %v799 = vld [vmem:[#allocation10 + $0x1a0] sm:$0xff]
    %v800 = vld [vmem:[#allocation10 + $0x1a8] sm:$0xff]
    %v801 = vld [vmem:[#allocation10 + $0x1b0] sm:$0xff]
    %v802 = vld [vmem:[#allocation10 + $0x1b8] sm:$0xff]
    %v803 = vld [vmem:[#allocation10 + $0x1c0] sm:$0xff]
    %v804 = vld [vmem:[#allocation10 + $0x1c8] sm:$0xff]
    %v805 = vld [vmem:[#allocation10 + $0x1d0] sm:$0xff]
    %v806 = vld [vmem:[#allocation10 + $0x1d8] sm:$0xff]
    %v807 = vld [vmem:[#allocation10 + $0x1e0] sm:$0xff]
    %v808 = vld [vmem:[#allocation10 + $0x1e8] sm:$0xff]
    %v809 = vld [vmem:[#allocation10 + $0x1f0] sm:$0xff]
    %v810 = vld [vmem:[#allocation10 + $0x1f8] sm:$0xff]
    %v811 = vld [vmem:[#allocation10 + $0x200] sm:$0xff]
    %v812 = vld [vmem:[#allocation10 + $0x208] sm:$0xff]
    %v813 = vld [vmem:[#allocation10 + $0x210] sm:$0xff]
    %v814 = vld [vmem:[#allocation10 + $0x218] sm:$0xff]
    %v815 = vld [vmem:[#allocation10 + $0x220] sm:$0xff]
    %v816 = vld [vmem:[#allocation10 + $0x228] sm:$0xff]
    %v817 = vld [vmem:[#allocation10 + $0x230] sm:$0xff]
    %v818 = vld [vmem:[#allocation10 + $0x238] sm:$0xff]
    %v819 = vld [vmem:[#allocation10 + $0x240] sm:$0xff]
    %v820 = vld [vmem:[#allocation10 + $0x248] sm:$0xff]
    %v821 = vld [vmem:[#allocation10 + $0x250] sm:$0xff]
    %v822 = vld [vmem:[#allocation10 + $0x258] sm:$0xff]
    %v823 = vld [vmem:[#allocation10 + $0x260] sm:$0xff]
    %v824 = vld [vmem:[#allocation10 + $0x268] sm:$0xff]
    %v825 = vld [vmem:[#allocation10 + $0x270] sm:$0xff]
    %v826 = vld [vmem:[#allocation10 + $0x278] sm:$0xff]
    %v827 = vld [vmem:[#allocation10 + $0x280] sm:$0xff]
    %v828 = vld [vmem:[#allocation10 + $0x288] sm:$0xff]
    %v829 = vld [vmem:[#allocation10 + $0x290] sm:$0xff]
    %v830 = vld [vmem:[#allocation10 + $0x298] sm:$0xff]
    %v831 = vld [vmem:[#allocation10 + $0x2a0] sm:$0xff]
    %v832 = vld [vmem:[#allocation10 + $0x2a8] sm:$0xff]
    %v833 = vld [vmem:[#allocation10 + $0x2b0] sm:$0xff]
    %v834 = vld [vmem:[#allocation10 + $0x2b8] sm:$0xff]
    %v835 = vld [vmem:[#allocation10 + $0x2c0] sm:$0xff]
    %v836 = vld [vmem:[#allocation10 + $0x2c8] sm:$0xff]
    %v837 = vld [vmem:[#allocation10 + $0x2d0] sm:$0xff]
    %v838 = vld [vmem:[#allocation10 + $0x2d8] sm:$0xff]
    %v839 = vld [vmem:[#allocation10 + $0x2e0] sm:$0xff]
    %v840 = vld [vmem:[#allocation10 + $0x2e8] sm:$0xff]
    %v841 = vld [vmem:[#allocation10 + $0x2f0] sm:$0xff]
    %v842 = vld [vmem:[#allocation10 + $0x2f8] sm:$0xff]
    %v843 = vld [vmem:[#allocation10 + $0x300] sm:$0xff]
    %v844 = vld [vmem:[#allocation10 + $0x308] sm:$0xff]
    %v845 = vld [vmem:[#allocation10 + $0x310] sm:$0xff]
    %v846 = vld [vmem:[#allocation10 + $0x318] sm:$0xff]
    %v847 = vld [vmem:[#allocation10 + $0x320] sm:$0xff]
    %v848 = vld [vmem:[#allocation10 + $0x328] sm:$0xff]
    %v849 = vld [vmem:[#allocation10 + $0x330] sm:$0xff]
    %v850 = vld [vmem:[#allocation10 + $0x338] sm:$0xff]
    %v851 = vld [vmem:[#allocation10 + $0x340] sm:$0xff]
    %v852 = vld [vmem:[#allocation10 + $0x348] sm:$0xff]
    %v853 = vld [vmem:[#allocation10 + $0x350] sm:$0xff]
    %v854 = vld [vmem:[#allocation10 + $0x358] sm:$0xff]
    %v855 = vld [vmem:[#allocation10 + $0x360] sm:$0xff]
    %v856 = vld [vmem:[#allocation10 + $0x368] sm:$0xff]
    %v857 = vld [vmem:[#allocation10 + $0x370] sm:$0xff]
    %v858 = vld [vmem:[#allocation10 + $0x378] sm:$0xff]
    %v859 = vld [vmem:[#allocation10 + $0x380] sm:$0xff]
    %v860 = vld [vmem:[#allocation10 + $0x388] sm:$0xff]
    %v861 = vld [vmem:[#allocation10 + $0x390] sm:$0xff]
    %v862 = vld [vmem:[#allocation10 + $0x398] sm:$0xff]
    %v863 = vld [vmem:[#allocation10 + $0x3a0] sm:$0xff]
    %v864 = vld [vmem:[#allocation10 + $0x3a8] sm:$0xff]
    %v865 = vld [vmem:[#allocation10 + $0x3b0] sm:$0xff]
    %v866 = vld [vmem:[#allocation10 + $0x3b8] sm:$0xff]
    %v867 = vld [vmem:[#allocation10 + $0x3c0] sm:$0xff]
    %v868 = vld [vmem:[#allocation10 + $0x3c8] sm:$0xff]
    %v869 = vld [vmem:[#allocation10 + $0x3d0] sm:$0xff]
    %v870 = vld [vmem:[#allocation10 + $0x3d8] sm:$0xff]
    %v871 = vld [vmem:[#allocation10 + $0x3e0] sm:$0xff]
    %v872 = vld [vmem:[#allocation10 + $0x3e8] sm:$0xff]
    %v873 = vld [vmem:[#allocation10 + $0x3f0] sm:$0xff]
    %v874 = vld [vmem:[#allocation10 + $0x3f8] sm:$0xff]
    %v875 = vcombine.high %v141, %v141
    %v877 = vunpack.c.l.s4 1983009808
    %v878 = vunpack.c.0.s8 %v877
    %v879 = vlaneseq
    %v880 = vshrl.u32 %v879, 7
    %v881 = vsub.s32 %v878, %v880
    %v882 = vrot.slane %v875, %v881
    %v883 = vcombine.high %v882, %v882
    %886 = vmatprep.subr.mxu0 %v145
    %887 = vmatpush1.msra.mxu0 %v144
    %888 = vmatprep.subr.mxu0 %v147
    %889 = vmatpush1.msra.mxu0 %v146
    %890 = vmatprep.subr.mxu0 %v149
    %891 = vmatpush1.msra.mxu0 %v148
    %892 = vmatprep.subr.mxu0 %v151
    %893 = vmatpush1.msra.mxu0 %v150
    %894 = vmatprep.subr.mxu0 %v153
    %895 = vmatpush1.msra.mxu0 %v152
    %896 = vmatprep.subr.mxu0 %v155
    %897 = vmatpush1.msra.mxu0 %v154
    %898 = vmatprep.subr.mxu0 %v157
    %899 = vmatpush1.msra.mxu0 %v156
    %900 = vmatprep.subr.mxu0 %v159
    %901 = vmatpush1.msra.mxu0 %v158
    %902 = vmatprep.subr.mxu0 %v161
    %903 = vmatpush1.msra.mxu0 %v160
    %904 = vmatprep.subr.mxu0 %v163
    %905 = vmatpush1.msra.mxu0 %v162
    %906 = vmatprep.subr.mxu0 %v165
    %907 = vmatpush1.msra.mxu0 %v164
    %908 = vmatprep.subr.mxu0 %v167
    %909 = vmatpush1.msra.mxu0 %v166
    %910 = vmatprep.subr.mxu0 %v169
    %911 = vmatpush1.msra.mxu0 %v168
    %912 = vmatprep.subr.mxu0 %v171
    %913 = vmatpush1.msra.mxu0 %v170
    %914 = vmatprep.subr.mxu0 %v173
    %915 = vmatpush1.msra.mxu0 %v172
    %916 = vmatprep.subr.mxu0 %v175
    %917 = vmatpush1.msra.mxu0 %v174
    %918 = vmatprep.subr.mxu0 %v177
    %919 = vmatpush1.msra.mxu0 %v176
    %920 = vmatprep.subr.mxu0 %v179
    %921 = vmatpush1.msra.mxu0 %v178
    %922 = vmatprep.subr.mxu0 %v181
    %923 = vmatpush1.msra.mxu0 %v180
    %924 = vmatprep.subr.mxu0 %v183
    %925 = vmatpush1.msra.mxu0 %v182
    %926 = vmatprep.subr.mxu0 %v185
    %927 = vmatpush1.msra.mxu0 %v184
    %928 = vmatprep.subr.mxu0 %v187
    %929 = vmatpush1.msra.mxu0 %v186
    %930 = vmatprep.subr.mxu0 %v189
    %931 = vmatpush1.msra.mxu0 %v188
    %932 = vmatprep.subr.mxu0 %v191
    %933 = vmatpush1.msra.mxu0 %v190
    %934 = vmatprep.subr.mxu0 %v193
    %935 = vmatpush1.msra.mxu0 %v192
    %936 = vmatprep.subr.mxu0 %v195
    %937 = vmatpush1.msra.mxu0 %v194
    %938 = vmatprep.subr.mxu0 %v197
    %939 = vmatpush1.msra.mxu0 %v196
    %940 = vmatprep.subr.mxu0 %v199
    %941 = vmatpush1.msra.mxu0 %v198
    %942 = vmatprep.subr.mxu0 %v201
    %943 = vmatpush1.msra.mxu0 %v200
    %944 = vmatprep.subr.mxu0 %v203
    %945 = vmatpush1.msra.mxu0 %v202
    %946 = vmatprep.subr.mxu0 %v205
    %947 = vmatpush1.msra.mxu0 %v204
    %948 = vmatprep.subr.mxu0 %v207
    %949 = vmatpush1.msra.mxu0 %v206
    %950 = vmatprep.mubr.f32.mxu0 %v883
    %951 = vmatmul.mubr.f32.gmra.mrb[0].mxu0 %v882
    %v952 = vpop.f32.mrb[0].mxu0
    %v953 = vadd.f32 0.0, %v952
    %v954 = vpop.f32.mrb[0].mxu0
    %v955 = vadd.f32 0.0, %v954
    %956 = vdwg.mxu0
    %957 = vmatprep.subr.mxu0 %v209
    %958 = vmatpush1.msra.mxu0 %v208
    %959 = vmatprep.subr.mxu0 %v211
    %960 = vmatpush1.msra.mxu0 %v210
    %961 = vmatprep.subr.mxu0 %v213
    %962 = vmatpush1.msra.mxu0 %v212
    %963 = vmatprep.subr.mxu0 %v215
    %964 = vmatpush1.msra.mxu0 %v214
    %965 = vmatprep.subr.mxu0 %v217
    %966 = vmatpush1.msra.mxu0 %v216
    %967 = vmatprep.subr.mxu0 %v219
    %968 = vmatpush1.msra.mxu0 %v218
    %969 = vmatprep.subr.mxu0 %v221
    %970 = vmatpush1.msra.mxu0 %v220
    %971 = vmatprep.subr.mxu0 %v223
    %972 = vmatpush1.msra.mxu0 %v222
    %973 = vmatprep.subr.mxu0 %v225
    %974 = vmatpush1.msra.mxu0 %v224
    %975 = vmatprep.subr.mxu0 %v227
    %976 = vmatpush1.msra.mxu0 %v226
    %977 = vmatprep.subr.mxu0 %v229
    %978 = vmatpush1.msra.mxu0 %v228
    %979 = vmatprep.subr.mxu0 %v231
    %980 = vmatpush1.msra.mxu0 %v230
    %981 = vmatprep.subr.mxu0 %v233
    %982 = vmatpush1.msra.mxu0 %v232
    %983 = vmatprep.subr.mxu0 %v235
    %984 = vmatpush1.msra.mxu0 %v234
    %985 = vmatprep.subr.mxu0 %v237
    %986 = vmatpush1.msra.mxu0 %v236
    %987 = vmatprep.subr.mxu0 %v239
    %988 = vmatpush1.msra.mxu0 %v238
    %989 = vmatprep.subr.mxu0 %v241
    %990 = vmatpush1.msra.mxu0 %v240
    %991 = vmatprep.subr.mxu0 %v243
    %992 = vmatpush1.msra.mxu0 %v242
    %993 = vmatprep.subr.mxu0 %v245
    %994 = vmatpush1.msra.mxu0 %v244
    %995 = vmatprep.subr.mxu0 %v247
    %996 = vmatpush1.msra.mxu0 %v246
    %997 = vmatprep.subr.mxu0 %v249
    %998 = vmatpush1.msra.mxu0 %v248
    %999 = vmatprep.subr.mxu0 %v251
    %1000 = vmatpush1.msra.mxu0 %v250
    %1001 = vmatprep.subr.mxu0 %v253
    %1002 = vmatpush1.msra.mxu0 %v252
    %1003 = vmatprep.subr.mxu0 %v255
    %1004 = vmatpush1.msra.mxu0 %v254
    %1005 = vmatprep.subr.mxu0 %v257
    %1006 = vmatpush1.msra.mxu0 %v256
    %1007 = vmatprep.subr.mxu0 %v259
    %1008 = vmatpush1.msra.mxu0 %v258
    %1009 = vmatprep.subr.mxu0 %v261
    %1010 = vmatpush1.msra.mxu0 %v260
    %1011 = vmatprep.subr.mxu0 %v263
    %1012 = vmatpush1.msra.mxu0 %v262
    %1013 = vmatprep.subr.mxu0 %v265
    %1014 = vmatpush1.msra.mxu0 %v264
    %1015 = vmatprep.subr.mxu0 %v267
    %1016 = vmatpush1.msra.mxu0 %v266
    %1017 = vmatprep.subr.mxu0 %v269
    %1018 = vmatpush1.msra.mxu0 %v268
    %1019 = vmatprep.subr.mxu0 %v271
    %1020 = vmatpush1.msra.mxu0 %v270
    %1021 = vmatprep.mubr.f32.mxu0 %v883
    %1022 = vmatmul.mubr.f32.gmra.mrb[0].mxu0 %v882
    %v1023 = vpop.f32.mrb[0].mxu0
    %v1024 = vadd.f32 0.0, %v1023
    %v1025 = vpop.f32.mrb[0].mxu0
    %v1026 = vadd.f32 0.0, %v1025
    %1027 = vdwg.mxu0
    %v1030 = vcombine.low %v953, %v955
    %v1032 = vunpack.c.l.s4 1983009808
    %v1033 = vunpack.c.0.s8 %v1032
    %v1034 = vlaneseq
    %v1035 = vshrl.u32 %v1034, 7
    %v1036 = vsub.s32 %v1033, %v1035
    %v1037 = vrot.slane %v1030, %v1036
    %v1039 = vmul.f32 %v143, %v1037
    %v1042 = vcombine.low %v1024, %v1026
    %v1044 = vunpack.c.l.s4 1983009808
    %v1045 = vunpack.c.0.s8 %v1044
    %v1046 = vlaneseq
    %v1047 = vshrl.u32 %v1046, 7
    %v1048 = vsub.s32 %v1045, %v1047
    %v1049 = vrot.slane %v1042, %v1048
    %v1051 = vmul.f32 %v143, %v1049
    %v1054 = vunpack.c.l.s4 1983009808
    %v1055 = vunpack.c.0.s8 %v1054
    %v1056 = vlaneseq
    %v1057 = vshrl.u32 %v1056, 7
    %v1058 = vsub.s32 %v1055, %v1057
    %v1059 = vrot.slane %v1039, %v1058
    %v1060 = vcombine.high %v1059, %v1059
    %1063 = vmatprep.subr.mxu0 %v273
    %1064 = vmatpush1.msra.mxu0 %v272
    %1065 = vmatprep.subr.mxu0 %v275
    %1066 = vmatpush1.msra.mxu0 %v274
    %1067 = vmatprep.subr.mxu0 %v277
    %1068 = vmatpush1.msra.mxu0 %v276
    %1069 = vmatprep.subr.mxu0 %v279
    %1070 = vmatpush1.msra.mxu0 %v278
    %1071 = vmatprep.subr.mxu0 %v281
    %1072 = vmatpush1.msra.mxu0 %v280
    %1073 = vmatprep.subr.mxu0 %v283
    %1074 = vmatpush1.msra.mxu0 %v282
    %1075 = vmatprep.subr.mxu0 %v285
    %1076 = vmatpush1.msra.mxu0 %v284
    %1077 = vmatprep.subr.mxu0 %v287
    %1078 = vmatpush1.msra.mxu0 %v286
    %1079 = vmatprep.subr.mxu0 %v289
    %1080 = vmatpush1.msra.mxu0 %v288
    %1081 = vmatprep.subr.mxu0 %v291
    %1082 = vmatpush1.msra.mxu0 %v290
    %1083 = vmatprep.subr.mxu0 %v293
    %1084 = vmatpush1.msra.mxu0 %v292
    %1085 = vmatprep.subr.mxu0 %v295
    %1086 = vmatpush1.msra.mxu0 %v294
    %1087 = vmatprep.subr.mxu0 %v297
    %1088 = vmatpush1.msra.mxu0 %v296
    %1089 = vmatprep.subr.mxu0 %v299
    %1090 = vmatpush1.msra.mxu0 %v298
    %1091 = vmatprep.subr.mxu0 %v301
    %1092 = vmatpush1.msra.mxu0 %v300
    %1093 = vmatprep.subr.mxu0 %v303
    %1094 = vmatpush1.msra.mxu0 %v302
    %1095 = vmatprep.subr.mxu0 %v305
    %1096 = vmatpush1.msra.mxu0 %v304
    %1097 = vmatprep.subr.mxu0 %v307
    %1098 = vmatpush1.msra.mxu0 %v306
    %1099 = vmatprep.subr.mxu0 %v309
    %1100 = vmatpush1.msra.mxu0 %v308
    %1101 = vmatprep.subr.mxu0 %v311
    %1102 = vmatpush1.msra.mxu0 %v310
    %1103 = vmatprep.subr.mxu0 %v313
    %1104 = vmatpush1.msra.mxu0 %v312
    %1105 = vmatprep.subr.mxu0 %v315
    %1106 = vmatpush1.msra.mxu0 %v314
    %1107 = vmatprep.subr.mxu0 %v317
    %1108 = vmatpush1.msra.mxu0 %v316
    %1109 = vmatprep.subr.mxu0 %v319
    %1110 = vmatpush1.msra.mxu0 %v318
    %1111 = vmatprep.subr.mxu0 %v321
    %1112 = vmatpush1.msra.mxu0 %v320
    %1113 = vmatprep.subr.mxu0 %v323
    %1114 = vmatpush1.msra.mxu0 %v322
    %1115 = vmatprep.subr.mxu0 %v325
    %1116 = vmatpush1.msra.mxu0 %v324
    %1117 = vmatprep.subr.mxu0 %v327
    %1118 = vmatpush1.msra.mxu0 %v326
    %1119 = vmatprep.subr.mxu0 %v329
    %1120 = vmatpush1.msra.mxu0 %v328
    %1121 = vmatprep.subr.mxu0 %v331
    %1122 = vmatpush1.msra.mxu0 %v330
    %1123 = vmatprep.subr.mxu0 %v333
    %1124 = vmatpush1.msra.mxu0 %v332
    %1125 = vmatprep.subr.mxu0 %v335
    %1126 = vmatpush1.msra.mxu0 %v334
    %1127 = vmatprep.mubr.f32.mxu0 %v1060
    %1128 = vmatmul.mubr.f32.gmra.mrb[0].mxu0 %v1059
    %v1129 = vpop.f32.mrb[0].mxu0
    %v1130 = vadd.f32 0.0, %v1129
    %v1131 = vpop.f32.mrb[0].mxu0
    %v1132 = vadd.f32 0.0, %v1131
    %1133 = vdwg.mxu0
    %v1136 = vunpack.c.l.s4 1983009808
    %v1137 = vunpack.c.0.s8 %v1136
    %v1138 = vlaneseq
    %v1139 = vshrl.u32 %v1138, 7
    %v1140 = vsub.s32 %v1137, %v1139
    %v1141 = vrot.slane %v1051, %v1140
    %v1142 = vcombine.high %v1141, %v1141
    %1145 = vmatprep.subr.mxu0 %v337
    %1146 = vmatpush1.msra.mxu0 %v336
    %1147 = vmatprep.subr.mxu0 %v339
    %1148 = vmatpush1.msra.mxu0 %v338
    %1149 = vmatprep.subr.mxu0 %v341
    %1150 = vmatpush1.msra.mxu0 %v340
    %1151 = vmatprep.subr.mxu0 %v343
    %1152 = vmatpush1.msra.mxu0 %v342
    %1153 = vmatprep.subr.mxu0 %v345
    %1154 = vmatpush1.msra.mxu0 %v344
    %1155 = vmatprep.subr.mxu0 %v347
    %1156 = vmatpush1.msra.mxu0 %v346
    %1157 = vmatprep.subr.mxu0 %v349
    %1158 = vmatpush1.msra.mxu0 %v348
    %1159 = vmatprep.subr.mxu0 %v351
    %1160 = vmatpush1.msra.mxu0 %v350
    %1161 = vmatprep.subr.mxu0 %v353
    %1162 = vmatpush1.msra.mxu0 %v352
    %1163 = vmatprep.subr.mxu0 %v355
    %1164 = vmatpush1.msra.mxu0 %v354
    %1165 = vmatprep.subr.mxu0 %v357
    %1166 = vmatpush1.msra.mxu0 %v356
    %1167 = vmatprep.subr.mxu0 %v359
    %1168 = vmatpush1.msra.mxu0 %v358
    %1169 = vmatprep.subr.mxu0 %v361
    %1170 = vmatpush1.msra.mxu0 %v360
    %1171 = vmatprep.subr.mxu0 %v363
    %1172 = vmatpush1.msra.mxu0 %v362
    %1173 = vmatprep.subr.mxu0 %v365
    %1174 = vmatpush1.msra.mxu0 %v364
    %1175 = vmatprep.subr.mxu0 %v367
    %1176 = vmatpush1.msra.mxu0 %v366
    %1177 = vmatprep.subr.mxu0 %v369
    %1178 = vmatpush1.msra.mxu0 %v368
    %1179 = vmatprep.subr.mxu0 %v371
    %1180 = vmatpush1.msra.mxu0 %v370
    %1181 = vmatprep.subr.mxu0 %v373
    %1182 = vmatpush1.msra.mxu0 %v372
    %1183 = vmatprep.subr.mxu0 %v375
    %1184 = vmatpush1.msra.mxu0 %v374
    %1185 = vmatprep.subr.mxu0 %v377
    %1186 = vmatpush1.msra.mxu0 %v376
    %1187 = vmatprep.subr.mxu0 %v379
    %1188 = vmatpush1.msra.mxu0 %v378
    %1189 = vmatprep.subr.mxu0 %v381
    %1190 = vmatpush1.msra.mxu0 %v380
    %1191 = vmatprep.subr.mxu0 %v383
    %1192 = vmatpush1.msra.mxu0 %v382
    %1193 = vmatprep.subr.mxu0 %v385
    %1194 = vmatpush1.msra.mxu0 %v384
    %1195 = vmatprep.subr.mxu0 %v387
    %1196 = vmatpush1.msra.mxu0 %v386
    %1197 = vmatprep.subr.mxu0 %v389
    %1198 = vmatpush1.msra.mxu0 %v388
    %1199 = vmatprep.subr.mxu0 %v391
    %1200 = vmatpush1.msra.mxu0 %v390
    %1201 = vmatprep.subr.mxu0 %v393
    %1202 = vmatpush1.msra.mxu0 %v392
    %1203 = vmatprep.subr.mxu0 %v395
    %1204 = vmatpush1.msra.mxu0 %v394
    %1205 = vmatprep.subr.mxu0 %v397
    %1206 = vmatpush1.msra.mxu0 %v396
    %1207 = vmatprep.subr.mxu0 %v399
    %1208 = vmatpush1.msra.mxu0 %v398
    %1209 = vmatprep.mubr.f32.mxu0 %v1142
    %1210 = vmatmul.mubr.f32.gmra.mrb[0].mxu0 %v1141
    %v1211 = vpop.f32.mrb[0].mxu0
    %v1212 = vadd.f32 0.0, %v1211
    %v1213 = vpop.f32.mrb[0].mxu0
    %v1214 = vadd.f32 0.0, %v1213
    %1215 = vdwg.mxu0
    %v1216 = vsub.f32 %v1130, %v1212
    %v1217 = vsub.f32 %v1132, %v1214
    %v1218 = vmax.f32 %v1216, 0.0
    %v1219 = vmax.f32 %v1217, 0.0
    %v1220 = vmin.f32 %v1218, 1.0
    %v1221 = vmin.f32 %v1219, 1.0
    %v1222 = vld [vmem:[#allocation10 + $0x400] sm:$0xff]
    %v1223 = vld [vmem:[#allocation10 + $0x408] sm:$0xff]
    %v1224 = vld [vmem:[#allocation10 + $0x410] sm:$0xff]
    %v1225 = vld [vmem:[#allocation10 + $0x418] sm:$0xff]
    %v1226 = vld [vmem:[#allocation10 + $0x420] sm:$0xff]
    %v1227 = vld [vmem:[#allocation10 + $0x428] sm:$0xff]
    %v1228 = vld [vmem:[#allocation10 + $0x430] sm:$0xff]
    %v1229 = vld [vmem:[#allocation10 + $0x438] sm:$0xff]
    %v1230 = vld [vmem:[#allocation10 + $0x440] sm:$0xff]
    %v1231 = vld [vmem:[#allocation10 + $0x448] sm:$0xff]
    %v1232 = vld [vmem:[#allocation10 + $0x450] sm:$0xff]
    %v1233 = vld [vmem:[#allocation10 + $0x458] sm:$0xff]
    %v1234 = vld [vmem:[#allocation10 + $0x460] sm:$0xff]
    %v1235 = vld [vmem:[#allocation10 + $0x468] sm:$0xff]
    %v1236 = vld [vmem:[#allocation10 + $0x470] sm:$0xff]
    %v1237 = vld [vmem:[#allocation10 + $0x478] sm:$0xff]
    %v1238 = vld [vmem:[#allocation10 + $0x480] sm:$0xff]
    %v1239 = vld [vmem:[#allocation10 + $0x488] sm:$0xff]
    %v1240 = vld [vmem:[#allocation10 + $0x490] sm:$0xff]
    %v1241 = vld [vmem:[#allocation10 + $0x498] sm:$0xff]
    %v1242 = vld [vmem:[#allocation10 + $0x4a0] sm:$0xff]
    %v1243 = vld [vmem:[#allocation10 + $0x4a8] sm:$0xff]
    %v1244 = vld [vmem:[#allocation10 + $0x4b0] sm:$0xff]
    %v1245 = vld [vmem:[#allocation10 + $0x4b8] sm:$0xff]
    %v1246 = vld [vmem:[#allocation10 + $0x4c0] sm:$0xff]
    %v1247 = vld [vmem:[#allocation10 + $0x4c8] sm:$0xff]
    %v1248 = vld [vmem:[#allocation10 + $0x4d0] sm:$0xff]
    %v1249 = vld [vmem:[#allocation10 + $0x4d8] sm:$0xff]
    %v1250 = vld [vmem:[#allocation10 + $0x4e0] sm:$0xff]
    %v1251 = vld [vmem:[#allocation10 + $0x4e8] sm:$0xff]
    %v1252 = vld [vmem:[#allocation10 + $0x4f0] sm:$0xff]
    %v1253 = vld [vmem:[#allocation10 + $0x4f8] sm:$0xff]
    %v1254 = vld [vmem:[#allocation10 + $0x500] sm:$0xff]
    %v1255 = vld [vmem:[#allocation10 + $0x508] sm:$0xff]
    %v1256 = vld [vmem:[#allocation10 + $0x510] sm:$0xff]
    %v1257 = vld [vmem:[#allocation10 + $0x518] sm:$0xff]
    %v1258 = vld [vmem:[#allocation10 + $0x520] sm:$0xff]
    %v1259 = vld [vmem:[#allocation10 + $0x528] sm:$0xff]
    %v1260 = vld [vmem:[#allocation10 + $0x530] sm:$0xff]
    %v1261 = vld [vmem:[#allocation10 + $0x538] sm:$0xff]
    %v1262 = vld [vmem:[#allocation10 + $0x540] sm:$0xff]
    %v1263 = vld [vmem:[#allocation10 + $0x548] sm:$0xff]
    %v1264 = vld [vmem:[#allocation10 + $0x550] sm:$0xff]
    %v1265 = vld [vmem:[#allocation10 + $0x558] sm:$0xff]
    %v1266 = vld [vmem:[#allocation10 + $0x560] sm:$0xff]
    %v1267 = vld [vmem:[#allocation10 + $0x568] sm:$0xff]
    %v1268 = vld [vmem:[#allocation10 + $0x570] sm:$0xff]
    %v1269 = vld [vmem:[#allocation10 + $0x578] sm:$0xff]
    %v1270 = vld [vmem:[#allocation10 + $0x580] sm:$0xff]
    %v1271 = vld [vmem:[#allocation10 + $0x588] sm:$0xff]
    %v1272 = vld [vmem:[#allocation10 + $0x590] sm:$0xff]
    %v1273 = vld [vmem:[#allocation10 + $0x598] sm:$0xff]
    %v1274 = vld [vmem:[#allocation10 + $0x5a0] sm:$0xff]
    %v1275 = vld [vmem:[#allocation10 + $0x5a8] sm:$0xff]
    %v1276 = vld [vmem:[#allocation10 + $0x5b0] sm:$0xff]
    %v1277 = vld [vmem:[#allocation10 + $0x5b8] sm:$0xff]
    %v1278 = vld [vmem:[#allocation10 + $0x5c0] sm:$0xff]
    %v1279 = vld [vmem:[#allocation10 + $0x5c8] sm:$0xff]
    %v1280 = vld [vmem:[#allocation10 + $0x5d0] sm:$0xff]
    %v1281 = vld [vmem:[#allocation10 + $0x5d8] sm:$0xff]
    %v1282 = vld [vmem:[#allocation10 + $0x5e0] sm:$0xff]
    %v1283 = vld [vmem:[#allocation10 + $0x5e8] sm:$0xff]
    %v1284 = vld [vmem:[#allocation10 + $0x5f0] sm:$0xff]
    %v1285 = vld [vmem:[#allocation10 + $0x5f8] sm:$0xff]
    %v1286 = vld [vmem:[#allocation10 + $0x600] sm:$0xff]
    %v1287 = vld [vmem:[#allocation10 + $0x608] sm:$0xff]
    %v1288 = vld [vmem:[#allocation10 + $0x610] sm:$0xff]
    %v1289 = vld [vmem:[#allocation10 + $0x618] sm:$0xff]
    %v1290 = vld [vmem:[#allocation10 + $0x620] sm:$0xff]
    %v1291 = vld [vmem:[#allocation10 + $0x628] sm:$0xff]
    %v1292 = vld [vmem:[#allocation10 + $0x630] sm:$0xff]
    %v1293 = vld [vmem:[#allocation10 + $0x638] sm:$0xff]
    %v1294 = vld [vmem:[#allocation10 + $0x640] sm:$0xff]
    %v1295 = vld [vmem:[#allocation10 + $0x648] sm:$0xff]
    %v1296 = vld [vmem:[#allocation10 + $0x650] sm:$0xff]
    %v1297 = vld [vmem:[#allocation10 + $0x658] sm:$0xff]
    %v1298 = vld [vmem:[#allocation10 + $0x660] sm:$0xff]
    %v1299 = vld [vmem:[#allocation10 + $0x668] sm:$0xff]
    %v1300 = vld [vmem:[#allocation10 + $0x670] sm:$0xff]
    %v1301 = vld [vmem:[#allocation10 + $0x678] sm:$0xff]
    %v1302 = vld [vmem:[#allocation10 + $0x680] sm:$0xff]
    %v1303 = vld [vmem:[#allocation10 + $0x688] sm:$0xff]
    %v1304 = vld [vmem:[#allocation10 + $0x690] sm:$0xff]
    %v1305 = vld [vmem:[#allocation10 + $0x698] sm:$0xff]
    %v1306 = vld [vmem:[#allocation10 + $0x6a0] sm:$0xff]
    %v1307 = vld [vmem:[#allocation10 + $0x6a8] sm:$0xff]
    %v1308 = vld [vmem:[#allocation10 + $0x6b0] sm:$0xff]
    %v1309 = vld [vmem:[#allocation10 + $0x6b8] sm:$0xff]
    %v1310 = vld [vmem:[#allocation10 + $0x6c0] sm:$0xff]
    %v1311 = vld [vmem:[#allocation10 + $0x6c8] sm:$0xff]
    %v1312 = vld [vmem:[#allocation10 + $0x6d0] sm:$0xff]
    %v1313 = vld [vmem:[#allocation10 + $0x6d8] sm:$0xff]
    %v1314 = vld [vmem:[#allocation10 + $0x6e0] sm:$0xff]
    %v1315 = vld [vmem:[#allocation10 + $0x6e8] sm:$0xff]
    %v1316 = vld [vmem:[#allocation10 + $0x6f0] sm:$0xff]
    %v1317 = vld [vmem:[#allocation10 + $0x6f8] sm:$0xff]
    %v1318 = vld [vmem:[#allocation10 + $0x700] sm:$0xff]
    %v1319 = vld [vmem:[#allocation10 + $0x708] sm:$0xff]
    %v1320 = vld [vmem:[#allocation10 + $0x710] sm:$0xff]
    %v1321 = vld [vmem:[#allocation10 + $0x718] sm:$0xff]
    %v1322 = vld [vmem:[#allocation10 + $0x720] sm:$0xff]
    %v1323 = vld [vmem:[#allocation10 + $0x728] sm:$0xff]
    %v1324 = vld [vmem:[#allocation10 + $0x730] sm:$0xff]
    %v1325 = vld [vmem:[#allocation10 + $0x738] sm:$0xff]
    %v1326 = vld [vmem:[#allocation10 + $0x740] sm:$0xff]
    %v1327 = vld [vmem:[#allocation10 + $0x748] sm:$0xff]
    %v1328 = vld [vmem:[#allocation10 + $0x750] sm:$0xff]
    %v1329 = vld [vmem:[#allocation10 + $0x758] sm:$0xff]
    %v1330 = vld [vmem:[#allocation10 + $0x760] sm:$0xff]
    %v1331 = vld [vmem:[#allocation10 + $0x768] sm:$0xff]
    %v1332 = vld [vmem:[#allocation10 + $0x770] sm:$0xff]
    %v1333 = vld [vmem:[#allocation10 + $0x778] sm:$0xff]
    %v1334 = vld [vmem:[#allocation10 + $0x780] sm:$0xff]
    %v1335 = vld [vmem:[#allocation10 + $0x788] sm:$0xff]
    %v1336 = vld [vmem:[#allocation10 + $0x790] sm:$0xff]
    %v1337 = vld [vmem:[#allocation10 + $0x798] sm:$0xff]
    %v1338 = vld [vmem:[#allocation10 + $0x7a0] sm:$0xff]
    %v1339 = vld [vmem:[#allocation10 + $0x7a8] sm:$0xff]
    %v1340 = vld [vmem:[#allocation10 + $0x7b0] sm:$0xff]
    %v1341 = vld [vmem:[#allocation10 + $0x7b8] sm:$0xff]
    %v1342 = vld [vmem:[#allocation10 + $0x7c0] sm:$0xff]
    %v1343 = vld [vmem:[#allocation10 + $0x7c8] sm:$0xff]
    %v1344 = vld [vmem:[#allocation10 + $0x7d0] sm:$0xff]
    %v1345 = vld [vmem:[#allocation10 + $0x7d8] sm:$0xff]
    %v1346 = vld [vmem:[#allocation10 + $0x7e0] sm:$0xff]
    %v1347 = vld [vmem:[#allocation10 + $0x7e8] sm:$0xff]
    %v1348 = vld [vmem:[#allocation10 + $0x7f0] sm:$0xff]
    %v1349 = vld [vmem:[#allocation10 + $0x7f8] sm:$0xff]
    %1350 = vmatprep.subr.mxu0 %v1223
    %1351 = vmatpush1.msra.mxu0 %v1222
    %1352 = vmatprep.subr.mxu0 %v1227
    %1353 = vmatpush1.msra.mxu0 %v1226
    %1354 = vmatprep.subr.mxu0 %v1231
    %1355 = vmatpush1.msra.mxu0 %v1230
    %1356 = vmatprep.subr.mxu0 %v1235
    %1357 = vmatpush1.msra.mxu0 %v1234
    %1358 = vmatprep.subr.mxu0 %v1239
    %1359 = vmatpush1.msra.mxu0 %v1238
    %1360 = vmatprep.subr.mxu0 %v1243
    %1361 = vmatpush1.msra.mxu0 %v1242
    %1362 = vmatprep.subr.mxu0 %v1247
    %1363 = vmatpush1.msra.mxu0 %v1246
    %1364 = vmatprep.subr.mxu0 %v1251
    %1365 = vmatpush1.msra.mxu0 %v1250
    %1366 = vmatprep.subr.mxu0 %v1255
    %1367 = vmatpush1.msra.mxu0 %v1254
    %1368 = vmatprep.subr.mxu0 %v1259
    %1369 = vmatpush1.msra.mxu0 %v1258
    %1370 = vmatprep.subr.mxu0 %v1263
    %1371 = vmatpush1.msra.mxu0 %v1262
    %1372 = vmatprep.subr.mxu0 %v1267
    %1373 = vmatpush1.msra.mxu0 %v1266
    %1374 = vmatprep.subr.mxu0 %v1271
    %1375 = vmatpush1.msra.mxu0 %v1270
    %1376 = vmatprep.subr.mxu0 %v1275
    %1377 = vmatpush1.msra.mxu0 %v1274
    %1378 = vmatprep.subr.mxu0 %v1279
    %1379 = vmatpush1.msra.mxu0 %v1278
    %1380 = vmatprep.subr.mxu0 %v1283
    %1381 = vmatpush1.msra.mxu0 %v1282
    %1382 = vmatprep.subr.mxu0 %v1287
    %1383 = vmatpush1.msra.mxu0 %v1286
    %1384 = vmatprep.subr.mxu0 %v1291
    %1385 = vmatpush1.msra.mxu0 %v1290
    %1386 = vmatprep.subr.mxu0 %v1295
    %1387 = vmatpush1.msra.mxu0 %v1294
    %1388 = vmatprep.subr.mxu0 %v1299
    %1389 = vmatpush1.msra.mxu0 %v1298
    %1390 = vmatprep.subr.mxu0 %v1303
    %1391 = vmatpush1.msra.mxu0 %v1302
    %1392 = vmatprep.subr.mxu0 %v1307
    %1393 = vmatpush1.msra.mxu0 %v1306
    %1394 = vmatprep.subr.mxu0 %v1311
    %1395 = vmatpush1.msra.mxu0 %v1310
    %1396 = vmatprep.subr.mxu0 %v1315
    %1397 = vmatpush1.msra.mxu0 %v1314
    %1398 = vmatprep.subr.mxu0 %v1319
    %1399 = vmatpush1.msra.mxu0 %v1318
    %1400 = vmatprep.subr.mxu0 %v1323
    %1401 = vmatpush1.msra.mxu0 %v1322
    %1402 = vmatprep.subr.mxu0 %v1327
    %1403 = vmatpush1.msra.mxu0 %v1326
    %1404 = vmatprep.subr.mxu0 %v1331
    %1405 = vmatpush1.msra.mxu0 %v1330
    %1406 = vmatprep.subr.mxu0 %v1335
    %1407 = vmatpush1.msra.mxu0 %v1334
    %1408 = vmatprep.subr.mxu0 %v1339
    %1409 = vmatpush1.msra.mxu0 %v1338
    %1410 = vmatprep.subr.mxu0 %v1343
    %1411 = vmatpush1.msra.mxu0 %v1342
    %1412 = vmatprep.subr.mxu0 %v1347
    %1413 = vmatpush1.msra.mxu0 %v1346
    %1414 = vmatprep.mubr.f32.mxu0 %v1221
    %1415 = vmatmul.mubr.f32.gmra.mrb[0].mxu0 %v1220
    %v1416 = vpop.f32.mrb[0].mxu0
    %v1417 = vadd.f32 0.0, %v1416
    %v1418 = vpop.f32.mrb[0].mxu0
    %v1419 = vadd.f32 0.0, %v1418
    %1420 = vdwg.mxu0
    %1421 = vmatprep.subr.mxu0 %v1225
    %1422 = vmatpush1.msra.mxu0 %v1224
    %1423 = vmatprep.subr.mxu0 %v1229
    %1424 = vmatpush1.msra.mxu0 %v1228
    %1425 = vmatprep.subr.mxu0 %v1233
    %1426 = vmatpush1.msra.mxu0 %v1232
    %1427 = vmatprep.subr.mxu0 %v1237
    %1428 = vmatpush1.msra.mxu0 %v1236
    %1429 = vmatprep.subr.mxu0 %v1241
    %1430 = vmatpush1.msra.mxu0 %v1240
    %1431 = vmatprep.subr.mxu0 %v1245
    %1432 = vmatpush1.msra.mxu0 %v1244
    %1433 = vmatprep.subr.mxu0 %v1249
    %1434 = vmatpush1.msra.mxu0 %v1248
    %1435 = vmatprep.subr.mxu0 %v1253
    %1436 = vmatpush1.msra.mxu0 %v1252
    %1437 = vmatprep.subr.mxu0 %v1257
    %1438 = vmatpush1.msra.mxu0 %v1256
    %1439 = vmatprep.subr.mxu0 %v1261
    %1440 = vmatpush1.msra.mxu0 %v1260
    %1441 = vmatprep.subr.mxu0 %v1265
    %1442 = vmatpush1.msra.mxu0 %v1264
    %1443 = vmatprep.subr.mxu0 %v1269
    %1444 = vmatpush1.msra.mxu0 %v1268
    %1445 = vmatprep.subr.mxu0 %v1273
    %1446 = vmatpush1.msra.mxu0 %v1272
    %1447 = vmatprep.subr.mxu0 %v1277
    %1448 = vmatpush1.msra.mxu0 %v1276
    %1449 = vmatprep.subr.mxu0 %v1281
    %1450 = vmatpush1.msra.mxu0 %v1280
    %1451 = vmatprep.subr.mxu0 %v1285
    %1452 = vmatpush1.msra.mxu0 %v1284
    %1453 = vmatprep.subr.mxu0 %v1289
    %1454 = vmatpush1.msra.mxu0 %v1288
    %1455 = vmatprep.subr.mxu0 %v1293
    %1456 = vmatpush1.msra.mxu0 %v1292
    %1457 = vmatprep.subr.mxu0 %v1297
    %1458 = vmatpush1.msra.mxu0 %v1296
    %1459 = vmatprep.subr.mxu0 %v1301
    %1460 = vmatpush1.msra.mxu0 %v1300
    %1461 = vmatprep.subr.mxu0 %v1305
    %1462 = vmatpush1.msra.mxu0 %v1304
    %1463 = vmatprep.subr.mxu0 %v1309
    %1464 = vmatpush1.msra.mxu0 %v1308
    %1465 = vmatprep.subr.mxu0 %v1313
    %1466 = vmatpush1.msra.mxu0 %v1312
    %1467 = vmatprep.subr.mxu0 %v1317
    %1468 = vmatpush1.msra.mxu0 %v1316
    %1469 = vmatprep.subr.mxu0 %v1321
    %1470 = vmatpush1.msra.mxu0 %v1320
    %1471 = vmatprep.subr.mxu0 %v1325
    %1472 = vmatpush1.msra.mxu0 %v1324
    %1473 = vmatprep.subr.mxu0 %v1329
    %1474 = vmatpush1.msra.mxu0 %v1328
    %1475 = vmatprep.subr.mxu0 %v1333
    %1476 = vmatpush1.msra.mxu0 %v1332
    %1477 = vmatprep.subr.mxu0 %v1337
    %1478 = vmatpush1.msra.mxu0 %v1336
    %1479 = vmatprep.subr.mxu0 %v1341
    %1480 = vmatpush1.msra.mxu0 %v1340
    %1481 = vmatprep.subr.mxu0 %v1345
    %1482 = vmatpush1.msra.mxu0 %v1344
    %1483 = vmatprep.subr.mxu0 %v1349
    %1484 = vmatpush1.msra.mxu0 %v1348
    %1485 = vmatprep.mubr.f32.mxu0 %v1221
    %1486 = vmatmul.mubr.f32.gmra.mrb[0].mxu0 %v1220
    %v1487 = vpop.f32.mrb[0].mxu0
    %v1488 = vadd.f32 0.0, %v1487
    %v1489 = vpop.f32.mrb[0].mxu0
    %v1490 = vadd.f32 0.0, %v1489
    %1491 = vdwg.mxu0
    %1492 = vmatprep.subr.mxu0 %v748
    %1493 = vmatpush1.msra.mxu0 %v747
    %1494 = vmatprep.subr.mxu0 %v752
    %1495 = vmatpush1.msra.mxu0 %v751
    %1496 = vmatprep.subr.mxu0 %v756
    %1497 = vmatpush1.msra.mxu0 %v755
    %1498 = vmatprep.subr.mxu0 %v760
    %1499 = vmatpush1.msra.mxu0 %v759
    %1500 = vmatprep.subr.mxu0 %v764
    %1501 = vmatpush1.msra.mxu0 %v763
    %1502 = vmatprep.subr.mxu0 %v768
    %1503 = vmatpush1.msra.mxu0 %v767
    %1504 = vmatprep.subr.mxu0 %v772
    %1505 = vmatpush1.msra.mxu0 %v771
    %1506 = vmatprep.subr.mxu0 %v776
    %1507 = vmatpush1.msra.mxu0 %v775
    %1508 = vmatprep.subr.mxu0 %v780
    %1509 = vmatpush1.msra.mxu0 %v779
    %1510 = vmatprep.subr.mxu0 %v784
    %1511 = vmatpush1.msra.mxu0 %v783
    %1512 = vmatprep.subr.mxu0 %v788
    %1513 = vmatpush1.msra.mxu0 %v787
    %1514 = vmatprep.subr.mxu0 %v792
    %1515 = vmatpush1.msra.mxu0 %v791
    %1516 = vmatprep.subr.mxu0 %v796
    %1517 = vmatpush1.msra.mxu0 %v795
    %1518 = vmatprep.subr.mxu0 %v800
    %1519 = vmatpush1.msra.mxu0 %v799
    %1520 = vmatprep.subr.mxu0 %v804
    %1521 = vmatpush1.msra.mxu0 %v803
    %1522 = vmatprep.subr.mxu0 %v808
    %1523 = vmatpush1.msra.mxu0 %v807
    %1524 = vmatprep.subr.mxu0 %v812
    %1525 = vmatpush1.msra.mxu0 %v811
    %1526 = vmatprep.subr.mxu0 %v816
    %1527 = vmatpush1.msra.mxu0 %v815
    %1528 = vmatprep.subr.mxu0 %v820
    %1529 = vmatpush1.msra.mxu0 %v819
    %1530 = vmatprep.subr.mxu0 %v824
    %1531 = vmatpush1.msra.mxu0 %v823
    %1532 = vmatprep.subr.mxu0 %v828
    %1533 = vmatpush1.msra.mxu0 %v827
    %1534 = vmatprep.subr.mxu0 %v832
    %1535 = vmatpush1.msra.mxu0 %v831
    %1536 = vmatprep.subr.mxu0 %v836
    %1537 = vmatpush1.msra.mxu0 %v835
    %1538 = vmatprep.subr.mxu0 %v840
    %1539 = vmatpush1.msra.mxu0 %v839
    %1540 = vmatprep.subr.mxu0 %v844
    %1541 = vmatpush1.msra.mxu0 %v843
    %1542 = vmatprep.subr.mxu0 %v848
    %1543 = vmatpush1.msra.mxu0 %v847
    %1544 = vmatprep.subr.mxu0 %v852
    %1545 = vmatpush1.msra.mxu0 %v851
    %1546 = vmatprep.subr.mxu0 %v856
    %1547 = vmatpush1.msra.mxu0 %v855
    %1548 = vmatprep.subr.mxu0 %v860
    %1549 = vmatpush1.msra.mxu0 %v859
    %1550 = vmatprep.subr.mxu0 %v864
    %1551 = vmatpush1.msra.mxu0 %v863
    %1552 = vmatprep.subr.mxu0 %v868
    %1553 = vmatpush1.msra.mxu0 %v867
    %1554 = vmatprep.subr.mxu0 %v872
    %1555 = vmatpush1.msra.mxu0 %v871
    %1556 = vmatprep.mubr.f32.mxu0 %v746
    %1557 = vmatmul.mubr.f32.gmra.mrb[0].mxu0 %v745
    %v1558 = vpop.f32.mrb[0].mxu0
    %v1559 = vadd.f32 %v1417, %v1558
    %v1560 = vpop.f32.mrb[0].mxu0
    %v1561 = vadd.f32 %v1419, %v1560
    %1562 = vdwg.mxu0
    %1563 = vmatprep.subr.mxu0 %v750
    %1564 = vmatpush1.msra.mxu0 %v749
    %1565 = vmatprep.subr.mxu0 %v754
    %1566 = vmatpush1.msra.mxu0 %v753
    %1567 = vmatprep.subr.mxu0 %v758
    %1568 = vmatpush1.msra.mxu0 %v757
    %1569 = vmatprep.subr.mxu0 %v762
    %1570 = vmatpush1.msra.mxu0 %v761
    %1571 = vmatprep.subr.mxu0 %v766
    %1572 = vmatpush1.msra.mxu0 %v765
    %1573 = vmatprep.subr.mxu0 %v770
    %1574 = vmatpush1.msra.mxu0 %v769
    %1575 = vmatprep.subr.mxu0 %v774
    %1576 = vmatpush1.msra.mxu0 %v773
    %1577 = vmatprep.subr.mxu0 %v778
    %1578 = vmatpush1.msra.mxu0 %v777
    %1579 = vmatprep.subr.mxu0 %v782
    %1580 = vmatpush1.msra.mxu0 %v781
    %1581 = vmatprep.subr.mxu0 %v786
    %1582 = vmatpush1.msra.mxu0 %v785
    %1583 = vmatprep.subr.mxu0 %v790
    %1584 = vmatpush1.msra.mxu0 %v789
    %1585 = vmatprep.subr.mxu0 %v794
    %1586 = vmatpush1.msra.mxu0 %v793
    %1587 = vmatprep.subr.mxu0 %v798
    %1588 = vmatpush1.msra.mxu0 %v797
    %1589 = vmatprep.subr.mxu0 %v802
    %1590 = vmatpush1.msra.mxu0 %v801
    %1591 = vmatprep.subr.mxu0 %v806
    %1592 = vmatpush1.msra.mxu0 %v805
    %1593 = vmatprep.subr.mxu0 %v810
    %1594 = vmatpush1.msra.mxu0 %v809
    %1595 = vmatprep.subr.mxu0 %v814
    %1596 = vmatpush1.msra.mxu0 %v813
    %1597 = vmatprep.subr.mxu0 %v818
    %1598 = vmatpush1.msra.mxu0 %v817
    %1599 = vmatprep.subr.mxu0 %v822
    %1600 = vmatpush1.msra.mxu0 %v821
    %1601 = vmatprep.subr.mxu0 %v826
    %1602 = vmatpush1.msra.mxu0 %v825
    %1603 = vmatprep.subr.mxu0 %v830
    %1604 = vmatpush1.msra.mxu0 %v829
    %1605 = vmatprep.subr.mxu0 %v834
    %1606 = vmatpush1.msra.mxu0 %v833
    %1607 = vmatprep.subr.mxu0 %v838
    %1608 = vmatpush1.msra.mxu0 %v837
    %1609 = vmatprep.subr.mxu0 %v842
    %1610 = vmatpush1.msra.mxu0 %v841
    %1611 = vmatprep.subr.mxu0 %v846
    %1612 = vmatpush1.msra.mxu0 %v845
    %1613 = vmatprep.subr.mxu0 %v850
    %1614 = vmatpush1.msra.mxu0 %v849
    %1615 = vmatprep.subr.mxu0 %v854
    %1616 = vmatpush1.msra.mxu0 %v853
    %1617 = vmatprep.subr.mxu0 %v858
    %1618 = vmatpush1.msra.mxu0 %v857
    %1619 = vmatprep.subr.mxu0 %v862
    %1620 = vmatpush1.msra.mxu0 %v861
    %1621 = vmatprep.subr.mxu0 %v866
    %1622 = vmatpush1.msra.mxu0 %v865
    %1623 = vmatprep.subr.mxu0 %v870
    %1624 = vmatpush1.msra.mxu0 %v869
    %1625 = vmatprep.subr.mxu0 %v874
    %1626 = vmatpush1.msra.mxu0 %v873
    %1627 = vmatprep.mubr.f32.mxu0 %v746
    %1628 = vmatmul.mubr.f32.gmra.mrb[0].mxu0 %v745
    %v1629 = vpop.f32.mrb[0].mxu0
    %v1630 = vadd.f32 %v1488, %v1629
    %v1631 = vpop.f32.mrb[0].mxu0
    %v1632 = vadd.f32 %v1490, %v1631
    %1633 = vdwg.mxu0
    %v1636 = vunpack.c.l.s4 1983009808
    %v1637 = vunpack.c.0.s8 %v1636
    %v1638 = vlaneseq
    %v1639 = vshrl.u32 %v1638, 7
    %v1640 = vsub.s32 %v1637, %v1639
    %v1641 = vrot.slane %v142, %v1640
    %v1642 = vcombine.high %v1641, %v1641
    %1645 = vmatprep.subr.mxu0 %v145
    %1646 = vmatpush1.msra.mxu0 %v144
    %1647 = vmatprep.subr.mxu0 %v147
    %1648 = vmatpush1.msra.mxu0 %v146
    %1649 = vmatprep.subr.mxu0 %v149
    %1650 = vmatpush1.msra.mxu0 %v148
    %1651 = vmatprep.subr.mxu0 %v151
    %1652 = vmatpush1.msra.mxu0 %v150
    %1653 = vmatprep.subr.mxu0 %v153
    %1654 = vmatpush1.msra.mxu0 %v152
    %1655 = vmatprep.subr.mxu0 %v155
    %1656 = vmatpush1.msra.mxu0 %v154
    %1657 = vmatprep.subr.mxu0 %v157
    %1658 = vmatpush1.msra.mxu0 %v156
    %1659 = vmatprep.subr.mxu0 %v159
    %1660 = vmatpush1.msra.mxu0 %v158
    %1661 = vmatprep.subr.mxu0 %v161
    %1662 = vmatpush1.msra.mxu0 %v160
    %1663 = vmatprep.subr.mxu0 %v163
    %1664 = vmatpush1.msra.mxu0 %v162
    %1665 = vmatprep.subr.mxu0 %v165
    %1666 = vmatpush1.msra.mxu0 %v164
    %1667 = vmatprep.subr.mxu0 %v167
    %1668 = vmatpush1.msra.mxu0 %v166
    %1669 = vmatprep.subr.mxu0 %v169
    %1670 = vmatpush1.msra.mxu0 %v168
    %1671 = vmatprep.subr.mxu0 %v171
    %1672 = vmatpush1.msra.mxu0 %v170
    %1673 = vmatprep.subr.mxu0 %v173
    %1674 = vmatpush1.msra.mxu0 %v172
    %1675 = vmatprep.subr.mxu0 %v175
    %1676 = vmatpush1.msra.mxu0 %v174
    %1677 = vmatprep.subr.mxu0 %v177
    %1678 = vmatpush1.msra.mxu0 %v176
    %1679 = vmatprep.subr.mxu0 %v179
    %1680 = vmatpush1.msra.mxu0 %v178
    %1681 = vmatprep.subr.mxu0 %v181
    %1682 = vmatpush1.msra.mxu0 %v180
    %1683 = vmatprep.subr.mxu0 %v183
    %1684 = vmatpush1.msra.mxu0 %v182
    %1685 = vmatprep.subr.mxu0 %v185
    %1686 = vmatpush1.msra.mxu0 %v184
    %1687 = vmatprep.subr.mxu0 %v187
    %1688 = vmatpush1.msra.mxu0 %v186
    %1689 = vmatprep.subr.mxu0 %v189
    %1690 = vmatpush1.msra.mxu0 %v188
    %1691 = vmatprep.subr.mxu0 %v191
    %1692 = vmatpush1.msra.mxu0 %v190
    %1693 = vmatprep.subr.mxu0 %v193
    %1694 = vmatpush1.msra.mxu0 %v192
    %1695 = vmatprep.subr.mxu0 %v195
    %1696 = vmatpush1.msra.mxu0 %v194
    %1697 = vmatprep.subr.mxu0 %v197
    %1698 = vmatpush1.msra.mxu0 %v196
    %1699 = vmatprep.subr.mxu0 %v199
    %1700 = vmatpush1.msra.mxu0 %v198
    %1701 = vmatprep.subr.mxu0 %v201
    %1702 = vmatpush1.msra.mxu0 %v200
    %1703 = vmatprep.subr.mxu0 %v203
    %1704 = vmatpush1.msra.mxu0 %v202
    %1705 = vmatprep.subr.mxu0 %v205
    %1706 = vmatpush1.msra.mxu0 %v204
    %1707 = vmatprep.subr.mxu0 %v207
    %1708 = vmatpush1.msra.mxu0 %v206
    %1709 = vmatprep.mubr.f32.mxu0 %v1642
    %1710 = vmatmul.mubr.f32.gmra.mrb[0].mxu0 %v1641
    %v1711 = vpop.f32.mrb[0].mxu0
    %v1712 = vadd.f32 0.0, %v1711
    %v1713 = vpop.f32.mrb[0].mxu0
    %v1714 = vadd.f32 0.0, %v1713
    %1715 = vdwg.mxu0
    %1716 = vmatprep.subr.mxu0 %v209
    %1717 = vmatpush1.msra.mxu0 %v208
    %1718 = vmatprep.subr.mxu0 %v211
    %1719 = vmatpush1.msra.mxu0 %v210
    %1720 = vmatprep.subr.mxu0 %v213
    %1721 = vmatpush1.msra.mxu0 %v212
    %1722 = vmatprep.subr.mxu0 %v215
    %1723 = vmatpush1.msra.mxu0 %v214
    %1724 = vmatprep.subr.mxu0 %v217
    %1725 = vmatpush1.msra.mxu0 %v216
    %1726 = vmatprep.subr.mxu0 %v219
    %1727 = vmatpush1.msra.mxu0 %v218
    %1728 = vmatprep.subr.mxu0 %v221
    %1729 = vmatpush1.msra.mxu0 %v220
    %1730 = vmatprep.subr.mxu0 %v223
    %1731 = vmatpush1.msra.mxu0 %v222
    %1732 = vmatprep.subr.mxu0 %v225
    %1733 = vmatpush1.msra.mxu0 %v224
    %1734 = vmatprep.subr.mxu0 %v227
    %1735 = vmatpush1.msra.mxu0 %v226
    %1736 = vmatprep.subr.mxu0 %v229
    %1737 = vmatpush1.msra.mxu0 %v228
    %1738 = vmatprep.subr.mxu0 %v231
    %1739 = vmatpush1.msra.mxu0 %v230
    %1740 = vmatprep.subr.mxu0 %v233
    %1741 = vmatpush1.msra.mxu0 %v232
    %1742 = vmatprep.subr.mxu0 %v235
    %1743 = vmatpush1.msra.mxu0 %v234
    %1744 = vmatprep.subr.mxu0 %v237
    %1745 = vmatpush1.msra.mxu0 %v236
    %1746 = vmatprep.subr.mxu0 %v239
    %1747 = vmatpush1.msra.mxu0 %v238
    %1748 = vmatprep.subr.mxu0 %v241
    %1749 = vmatpush1.msra.mxu0 %v240
    %1750 = vmatprep.subr.mxu0 %v243
    %1751 = vmatpush1.msra.mxu0 %v242
    %1752 = vmatprep.subr.mxu0 %v245
    %1753 = vmatpush1.msra.mxu0 %v244
    %1754 = vmatprep.subr.mxu0 %v247
    %1755 = vmatpush1.msra.mxu0 %v246
    %1756 = vmatprep.subr.mxu0 %v249
    %1757 = vmatpush1.msra.mxu0 %v248
    %1758 = vmatprep.subr.mxu0 %v251
    %1759 = vmatpush1.msra.mxu0 %v250
    %1760 = vmatprep.subr.mxu0 %v253
    %1761 = vmatpush1.msra.mxu0 %v252
    %1762 = vmatprep.subr.mxu0 %v255
    %1763 = vmatpush1.msra.mxu0 %v254
    %1764 = vmatprep.subr.mxu0 %v257
    %1765 = vmatpush1.msra.mxu0 %v256
    %1766 = vmatprep.subr.mxu0 %v259
    %1767 = vmatpush1.msra.mxu0 %v258
    %1768 = vmatprep.subr.mxu0 %v261
    %1769 = vmatpush1.msra.mxu0 %v260
    %1770 = vmatprep.subr.mxu0 %v263
    %1771 = vmatpush1.msra.mxu0 %v262
    %1772 = vmatprep.subr.mxu0 %v265
    %1773 = vmatpush1.msra.mxu0 %v264
    %1774 = vmatprep.subr.mxu0 %v267
    %1775 = vmatpush1.msra.mxu0 %v266
    %1776 = vmatprep.subr.mxu0 %v269
    %1777 = vmatpush1.msra.mxu0 %v268
    %1778 = vmatprep.subr.mxu0 %v271
    %1779 = vmatpush1.msra.mxu0 %v270
    %1780 = vmatprep.mubr.f32.mxu0 %v1642
    %1781 = vmatmul.mubr.f32.gmra.mrb[0].mxu0 %v1641
    %v1782 = vpop.f32.mrb[0].mxu0
    %v1783 = vadd.f32 0.0, %v1782
    %v1784 = vpop.f32.mrb[0].mxu0
    %v1785 = vadd.f32 0.0, %v1784
    %1786 = vdwg.mxu0
    %v1789 = vcombine.low %v1712, %v1714
    %v1791 = vunpack.c.l.s4 1983009808
    %v1792 = vunpack.c.0.s8 %v1791
    %v1793 = vlaneseq
    %v1794 = vshrl.u32 %v1793, 7
    %v1795 = vsub.s32 %v1792, %v1794
    %v1796 = vrot.slane %v1789, %v1795
    %v1798 = vmul.f32 %v143, %v1796
    %v1801 = vcombine.low %v1783, %v1785
    %v1803 = vunpack.c.l.s4 1983009808
    %v1804 = vunpack.c.0.s8 %v1803
    %v1805 = vlaneseq
    %v1806 = vshrl.u32 %v1805, 7
    %v1807 = vsub.s32 %v1804, %v1806
    %v1808 = vrot.slane %v1801, %v1807
    %v1810 = vmul.f32 %v143, %v1808
    %v1813 = vunpack.c.l.s4 1983009808
    %v1814 = vunpack.c.0.s8 %v1813
    %v1815 = vlaneseq
    %v1816 = vshrl.u32 %v1815, 7
    %v1817 = vsub.s32 %v1814, %v1816
    %v1818 = vrot.slane %v1798, %v1817
    %v1819 = vcombine.high %v1818, %v1818
    %1822 = vmatprep.subr.mxu0 %v273
    %1823 = vmatpush1.msra.mxu0 %v272
    %1824 = vmatprep.subr.mxu0 %v275
    %1825 = vmatpush1.msra.mxu0 %v274
    %1826 = vmatprep.subr.mxu0 %v277
    %1827 = vmatpush1.msra.mxu0 %v276
    %1828 = vmatprep.subr.mxu0 %v279
    %1829 = vmatpush1.msra.mxu0 %v278
    %1830 = vmatprep.subr.mxu0 %v281
    %1831 = vmatpush1.msra.mxu0 %v280
    %1832 = vmatprep.subr.mxu0 %v283
    %1833 = vmatpush1.msra.mxu0 %v282
    %1834 = vmatprep.subr.mxu0 %v285
    %1835 = vmatpush1.msra.mxu0 %v284
    %1836 = vmatprep.subr.mxu0 %v287
    %1837 = vmatpush1.msra.mxu0 %v286
    %1838 = vmatprep.subr.mxu0 %v289
    %1839 = vmatpush1.msra.mxu0 %v288
    %1840 = vmatprep.subr.mxu0 %v291
    %1841 = vmatpush1.msra.mxu0 %v290
    %1842 = vmatprep.subr.mxu0 %v293
    %1843 = vmatpush1.msra.mxu0 %v292
    %1844 = vmatprep.subr.mxu0 %v295
    %1845 = vmatpush1.msra.mxu0 %v294
    %1846 = vmatprep.subr.mxu0 %v297
    %1847 = vmatpush1.msra.mxu0 %v296
    %1848 = vmatprep.subr.mxu0 %v299
    %1849 = vmatpush1.msra.mxu0 %v298
    %1850 = vmatprep.subr.mxu0 %v301
    %1851 = vmatpush1.msra.mxu0 %v300
    %1852 = vmatprep.subr.mxu0 %v303
    %1853 = vmatpush1.msra.mxu0 %v302
    %1854 = vmatprep.subr.mxu0 %v305
    %1855 = vmatpush1.msra.mxu0 %v304
    %1856 = vmatprep.subr.mxu0 %v307
    %1857 = vmatpush1.msra.mxu0 %v306
    %1858 = vmatprep.subr.mxu0 %v309
    %1859 = vmatpush1.msra.mxu0 %v308
    %1860 = vmatprep.subr.mxu0 %v311
    %1861 = vmatpush1.msra.mxu0 %v310
    %1862 = vmatprep.subr.mxu0 %v313
    %1863 = vmatpush1.msra.mxu0 %v312
    %1864 = vmatprep.subr.mxu0 %v315
    %1865 = vmatpush1.msra.mxu0 %v314
    %1866 = vmatprep.subr.mxu0 %v317
    %1867 = vmatpush1.msra.mxu0 %v316
    %1868 = vmatprep.subr.mxu0 %v319
    %1869 = vmatpush1.msra.mxu0 %v318
    %1870 = vmatprep.subr.mxu0 %v321
    %1871 = vmatpush1.msra.mxu0 %v320
    %1872 = vmatprep.subr.mxu0 %v323
    %1873 = vmatpush1.msra.mxu0 %v322
    %1874 = vmatprep.subr.mxu0 %v325
    %1875 = vmatpush1.msra.mxu0 %v324
    %1876 = vmatprep.subr.mxu0 %v327
    %1877 = vmatpush1.msra.mxu0 %v326
    %1878 = vmatprep.subr.mxu0 %v329
    %1879 = vmatpush1.msra.mxu0 %v328
    %1880 = vmatprep.subr.mxu0 %v331
    %1881 = vmatpush1.msra.mxu0 %v330
    %1882 = vmatprep.subr.mxu0 %v333
    %1883 = vmatpush1.msra.mxu0 %v332
    %1884 = vmatprep.subr.mxu0 %v335
    %1885 = vmatpush1.msra.mxu0 %v334
    %1886 = vmatprep.mubr.f32.mxu0 %v1819
    %1887 = vmatmul.mubr.f32.gmra.mrb[0].mxu0 %v1818
    %v1888 = vpop.f32.mrb[0].mxu0
    %v1889 = vadd.f32 0.0, %v1888
    %v1890 = vpop.f32.mrb[0].mxu0
    %v1891 = vadd.f32 0.0, %v1890
    %1892 = vdwg.mxu0
    %v1895 = vunpack.c.l.s4 1983009808
    %v1896 = vunpack.c.0.s8 %v1895
    %v1897 = vlaneseq
    %v1898 = vshrl.u32 %v1897, 7
    %v1899 = vsub.s32 %v1896, %v1898
    %v1900 = vrot.slane %v1810, %v1899
    %v1901 = vcombine.high %v1900, %v1900
    %1904 = vmatprep.subr.mxu0 %v337
    %1905 = vmatpush1.msra.mxu0 %v336
    %1906 = vmatprep.subr.mxu0 %v339
    %1907 = vmatpush1.msra.mxu0 %v338
    %1908 = vmatprep.subr.mxu0 %v341
    %1909 = vmatpush1.msra.mxu0 %v340
    %1910 = vmatprep.subr.mxu0 %v343
    %1911 = vmatpush1.msra.mxu0 %v342
    %1912 = vmatprep.subr.mxu0 %v345
    %1913 = vmatpush1.msra.mxu0 %v344
    %1914 = vmatprep.subr.mxu0 %v347
    %1915 = vmatpush1.msra.mxu0 %v346
    %1916 = vmatprep.subr.mxu0 %v349
    %1917 = vmatpush1.msra.mxu0 %v348
    %1918 = vmatprep.subr.mxu0 %v351
    %1919 = vmatpush1.msra.mxu0 %v350
    %1920 = vmatprep.subr.mxu0 %v353
    %1921 = vmatpush1.msra.mxu0 %v352
    %1922 = vmatprep.subr.mxu0 %v355
    %1923 = vmatpush1.msra.mxu0 %v354
    %1924 = vmatprep.subr.mxu0 %v357
    %1925 = vmatpush1.msra.mxu0 %v356
    %1926 = vmatprep.subr.mxu0 %v359
    %1927 = vmatpush1.msra.mxu0 %v358
    %1928 = vmatprep.subr.mxu0 %v361
    %1929 = vmatpush1.msra.mxu0 %v360
    %1930 = vmatprep.subr.mxu0 %v363
    %1931 = vmatpush1.msra.mxu0 %v362
    %1932 = vmatprep.subr.mxu0 %v365
    %1933 = vmatpush1.msra.mxu0 %v364
    %1934 = vmatprep.subr.mxu0 %v367
    %1935 = vmatpush1.msra.mxu0 %v366
    %1936 = vmatprep.subr.mxu0 %v369
    %1937 = vmatpush1.msra.mxu0 %v368
    %1938 = vmatprep.subr.mxu0 %v371
    %1939 = vmatpush1.msra.mxu0 %v370
    %1940 = vmatprep.subr.mxu0 %v373
    %1941 = vmatpush1.msra.mxu0 %v372
    %1942 = vmatprep.subr.mxu0 %v375
    %1943 = vmatpush1.msra.mxu0 %v374
    %1944 = vmatprep.subr.mxu0 %v377
    %1945 = vmatpush1.msra.mxu0 %v376
    %1946 = vmatprep.subr.mxu0 %v379
    %1947 = vmatpush1.msra.mxu0 %v378
    %1948 = vmatprep.subr.mxu0 %v381
    %1949 = vmatpush1.msra.mxu0 %v380
    %1950 = vmatprep.subr.mxu0 %v383
    %1951 = vmatpush1.msra.mxu0 %v382
    %1952 = vmatprep.subr.mxu0 %v385
    %1953 = vmatpush1.msra.mxu0 %v384
    %1954 = vmatprep.subr.mxu0 %v387
    %1955 = vmatpush1.msra.mxu0 %v386
    %1956 = vmatprep.subr.mxu0 %v389
    %1957 = vmatpush1.msra.mxu0 %v388
    %1958 = vmatprep.subr.mxu0 %v391
    %1959 = vmatpush1.msra.mxu0 %v390
    %1960 = vmatprep.subr.mxu0 %v393
    %1961 = vmatpush1.msra.mxu0 %v392
    %1962 = vmatprep.subr.mxu0 %v395
    %1963 = vmatpush1.msra.mxu0 %v394
    %1964 = vmatprep.subr.mxu0 %v397
    %1965 = vmatpush1.msra.mxu0 %v396
    %1966 = vmatprep.subr.mxu0 %v399
    %1967 = vmatpush1.msra.mxu0 %v398
    %1968 = vmatprep.mubr.f32.mxu0 %v1901
    %1969 = vmatmul.mubr.f32.gmra.mrb[0].mxu0 %v1900
    %v1970 = vpop.f32.mrb[0].mxu0
    %v1971 = vadd.f32 0.0, %v1970
    %v1972 = vpop.f32.mrb[0].mxu0
    %v1973 = vadd.f32 0.0, %v1972
    %1974 = vdwg.mxu0
    %v1975 = vsub.f32 %v1889, %v1971
    %v1976 = vsub.f32 %v1891, %v1973
    %v1977 = vmax.f32 %v1975, 0.0
    %v1978 = vmax.f32 %v1976, 0.0
    %v1979 = vmin.f32 %v1977, 1.0
    %v1980 = vmin.f32 %v1978, 1.0
    %v1981 = vld [vmem:[#allocation10 + $0x800] sm:$0xff]
    %v1982 = vld [vmem:[#allocation10 + $0x808] sm:$0xff]
    %v1983 = vld [vmem:[#allocation10 + $0x810] sm:$0xff]
    %v1984 = vld [vmem:[#allocation10 + $0x818] sm:$0xff]
    %v1985 = vld [vmem:[#allocation10 + $0x820] sm:$0xff]
    %v1986 = vld [vmem:[#allocation10 + $0x828] sm:$0xff]
    %v1987 = vld [vmem:[#allocation10 + $0x830] sm:$0xff]
    %v1988 = vld [vmem:[#allocation10 + $0x838] sm:$0xff]
    %v1989 = vld [vmem:[#allocation10 + $0x840] sm:$0xff]
    %v1990 = vld [vmem:[#allocation10 + $0x848] sm:$0xff]
    %v1991 = vld [vmem:[#allocation10 + $0x850] sm:$0xff]
    %v1992 = vld [vmem:[#allocation10 + $0x858] sm:$0xff]
    %v1993 = vld [vmem:[#allocation10 + $0x860] sm:$0xff]
    %v1994 = vld [vmem:[#allocation10 + $0x868] sm:$0xff]
    %v1995 = vld [vmem:[#allocation10 + $0x870] sm:$0xff]
    %v1996 = vld [vmem:[#allocation10 + $0x878] sm:$0xff]
    %v1997 = vld [vmem:[#allocation10 + $0x880] sm:$0xff]
    %v1998 = vld [vmem:[#allocation10 + $0x888] sm:$0xff]
    %v1999 = vld [vmem:[#allocation10 + $0x890] sm:$0xff]
    %v2000 = vld [vmem:[#allocation10 + $0x898] sm:$0xff]
    %v2001 = vld [vmem:[#allocation10 + $0x8a0] sm:$0xff]
    %v2002 = vld [vmem:[#allocation10 + $0x8a8] sm:$0xff]
    %v2003 = vld [vmem:[#allocation10 + $0x8b0] sm:$0xff]
    %v2004 = vld [vmem:[#allocation10 + $0x8b8] sm:$0xff]
    %v2005 = vld [vmem:[#allocation10 + $0x8c0] sm:$0xff]
    %v2006 = vld [vmem:[#allocation10 + $0x8c8] sm:$0xff]
    %v2007 = vld [vmem:[#allocation10 + $0x8d0] sm:$0xff]
    %v2008 = vld [vmem:[#allocation10 + $0x8d8] sm:$0xff]
    %v2009 = vld [vmem:[#allocation10 + $0x8e0] sm:$0xff]
    %v2010 = vld [vmem:[#allocation10 + $0x8e8] sm:$0xff]
    %v2011 = vld [vmem:[#allocation10 + $0x8f0] sm:$0xff]
    %v2012 = vld [vmem:[#allocation10 + $0x8f8] sm:$0xff]
    %v2013 = vld [vmem:[#allocation10 + $0x900] sm:$0xff]
    %v2014 = vld [vmem:[#allocation10 + $0x908] sm:$0xff]
    %v2015 = vld [vmem:[#allocation10 + $0x910] sm:$0xff]
    %v2016 = vld [vmem:[#allocation10 + $0x918] sm:$0xff]
    %v2017 = vld [vmem:[#allocation10 + $0x920] sm:$0xff]
    %v2018 = vld [vmem:[#allocation10 + $0x928] sm:$0xff]
    %v2019 = vld [vmem:[#allocation10 + $0x930] sm:$0xff]
    %v2020 = vld [vmem:[#allocation10 + $0x938] sm:$0xff]
    %v2021 = vld [vmem:[#allocation10 + $0x940] sm:$0xff]
    %v2022 = vld [vmem:[#allocation10 + $0x948] sm:$0xff]
    %v2023 = vld [vmem:[#allocation10 + $0x950] sm:$0xff]
    %v2024 = vld [vmem:[#allocation10 + $0x958] sm:$0xff]
    %v2025 = vld [vmem:[#allocation10 + $0x960] sm:$0xff]
    %v2026 = vld [vmem:[#allocation10 + $0x968] sm:$0xff]
    %v2027 = vld [vmem:[#allocation10 + $0x970] sm:$0xff]
    %v2028 = vld [vmem:[#allocation10 + $0x978] sm:$0xff]
    %v2029 = vld [vmem:[#allocation10 + $0x980] sm:$0xff]
    %v2030 = vld [vmem:[#allocation10 + $0x988] sm:$0xff]
    %v2031 = vld [vmem:[#allocation10 + $0x990] sm:$0xff]
    %v2032 = vld [vmem:[#allocation10 + $0x998] sm:$0xff]
    %v2033 = vld [vmem:[#allocation10 + $0x9a0] sm:$0xff]
    %v2034 = vld [vmem:[#allocation10 + $0x9a8] sm:$0xff]
    %v2035 = vld [vmem:[#allocation10 + $0x9b0] sm:$0xff]
    %v2036 = vld [vmem:[#allocation10 + $0x9b8] sm:$0xff]
    %v2037 = vld [vmem:[#allocation10 + $0x9c0] sm:$0xff]
    %v2038 = vld [vmem:[#allocation10 + $0x9c8] sm:$0xff]
    %v2039 = vld [vmem:[#allocation10 + $0x9d0] sm:$0xff]
    %v2040 = vld [vmem:[#allocation10 + $0x9d8] sm:$0xff]
    %v2041 = vld [vmem:[#allocation10 + $0x9e0] sm:$0xff]
    %v2042 = vld [vmem:[#allocation10 + $0x9e8] sm:$0xff]
    %v2043 = vld [vmem:[#allocation10 + $0x9f0] sm:$0xff]
    %v2044 = vld [vmem:[#allocation10 + $0x9f8] sm:$0xff]
    %v2045 = vld [vmem:[#allocation10 + $0xa00] sm:$0xff]
    %v2046 = vld [vmem:[#allocation10 + $0xa08] sm:$0xff]
    %v2047 = vld [vmem:[#allocation10 + $0xa10] sm:$0xff]
    %v2048 = vld [vmem:[#allocation10 + $0xa18] sm:$0xff]
    %v2049 = vld [vmem:[#allocation10 + $0xa20] sm:$0xff]
    %v2050 = vld [vmem:[#allocation10 + $0xa28] sm:$0xff]
    %v2051 = vld [vmem:[#allocation10 + $0xa30] sm:$0xff]
    %v2052 = vld [vmem:[#allocation10 + $0xa38] sm:$0xff]
    %v2053 = vld [vmem:[#allocation10 + $0xa40] sm:$0xff]
    %v2054 = vld [vmem:[#allocation10 + $0xa48] sm:$0xff]
    %v2055 = vld [vmem:[#allocation10 + $0xa50] sm:$0xff]
    %v2056 = vld [vmem:[#allocation10 + $0xa58] sm:$0xff]
    %v2057 = vld [vmem:[#allocation10 + $0xa60] sm:$0xff]
    %v2058 = vld [vmem:[#allocation10 + $0xa68] sm:$0xff]
    %v2059 = vld [vmem:[#allocation10 + $0xa70] sm:$0xff]
    %v2060 = vld [vmem:[#allocation10 + $0xa78] sm:$0xff]
    %v2061 = vld [vmem:[#allocation10 + $0xa80] sm:$0xff]
    %v2062 = vld [vmem:[#allocation10 + $0xa88] sm:$0xff]
    %v2063 = vld [vmem:[#allocation10 + $0xa90] sm:$0xff]
    %v2064 = vld [vmem:[#allocation10 + $0xa98] sm:$0xff]
    %v2065 = vld [vmem:[#allocation10 + $0xaa0] sm:$0xff]
    %v2066 = vld [vmem:[#allocation10 + $0xaa8] sm:$0xff]
    %v2067 = vld [vmem:[#allocation10 + $0xab0] sm:$0xff]
    %v2068 = vld [vmem:[#allocation10 + $0xab8] sm:$0xff]
    %v2069 = vld [vmem:[#allocation10 + $0xac0] sm:$0xff]
    %v2070 = vld [vmem:[#allocation10 + $0xac8] sm:$0xff]
    %v2071 = vld [vmem:[#allocation10 + $0xad0] sm:$0xff]
    %v2072 = vld [vmem:[#allocation10 + $0xad8] sm:$0xff]
    %v2073 = vld [vmem:[#allocation10 + $0xae0] sm:$0xff]
    %v2074 = vld [vmem:[#allocation10 + $0xae8] sm:$0xff]
    %v2075 = vld [vmem:[#allocation10 + $0xaf0] sm:$0xff]
    %v2076 = vld [vmem:[#allocation10 + $0xaf8] sm:$0xff]
    %v2077 = vld [vmem:[#allocation10 + $0xb00] sm:$0xff]
    %v2078 = vld [vmem:[#allocation10 + $0xb08] sm:$0xff]
    %v2079 = vld [vmem:[#allocation10 + $0xb10] sm:$0xff]
    %v2080 = vld [vmem:[#allocation10 + $0xb18] sm:$0xff]
    %v2081 = vld [vmem:[#allocation10 + $0xb20] sm:$0xff]
    %v2082 = vld [vmem:[#allocation10 + $0xb28] sm:$0xff]
    %v2083 = vld [vmem:[#allocation10 + $0xb30] sm:$0xff]
    %v2084 = vld [vmem:[#allocation10 + $0xb38] sm:$0xff]
    %v2085 = vld [vmem:[#allocation10 + $0xb40] sm:$0xff]
    %v2086 = vld [vmem:[#allocation10 + $0xb48] sm:$0xff]
    %v2087 = vld [vmem:[#allocation10 + $0xb50] sm:$0xff]
    %v2088 = vld [vmem:[#allocation10 + $0xb58] sm:$0xff]
    %v2089 = vld [vmem:[#allocation10 + $0xb60] sm:$0xff]
    %v2090 = vld [vmem:[#allocation10 + $0xb68] sm:$0xff]
    %v2091 = vld [vmem:[#allocation10 + $0xb70] sm:$0xff]
    %v2092 = vld [vmem:[#allocation10 + $0xb78] sm:$0xff]
    %v2093 = vld [vmem:[#allocation10 + $0xb80] sm:$0xff]
    %v2094 = vld [vmem:[#allocation10 + $0xb88] sm:$0xff]
    %v2095 = vld [vmem:[#allocation10 + $0xb90] sm:$0xff]
    %v2096 = vld [vmem:[#allocation10 + $0xb98] sm:$0xff]
    %v2097 = vld [vmem:[#allocation10 + $0xba0] sm:$0xff]
    %v2098 = vld [vmem:[#allocation10 + $0xba8] sm:$0xff]
    %v2099 = vld [vmem:[#allocation10 + $0xbb0] sm:$0xff]
    %v2100 = vld [vmem:[#allocation10 + $0xbb8] sm:$0xff]
    %v2101 = vld [vmem:[#allocation10 + $0xbc0] sm:$0xff]
    %v2102 = vld [vmem:[#allocation10 + $0xbc8] sm:$0xff]
    %v2103 = vld [vmem:[#allocation10 + $0xbd0] sm:$0xff]
    %v2104 = vld [vmem:[#allocation10 + $0xbd8] sm:$0xff]
    %v2105 = vld [vmem:[#allocation10 + $0xbe0] sm:$0xff]
    %v2106 = vld [vmem:[#allocation10 + $0xbe8] sm:$0xff]
    %v2107 = vld [vmem:[#allocation10 + $0xbf0] sm:$0xff]
    %v2108 = vld [vmem:[#allocation10 + $0xbf8] sm:$0xff]
    %2109 = vmatprep.subr.mxu0 %v1982
    %2110 = vmatpush1.msra.mxu0 %v1981
    %2111 = vmatprep.subr.mxu0 %v1986
    %2112 = vmatpush1.msra.mxu0 %v1985
    %2113 = vmatprep.subr.mxu0 %v1990
    %2114 = vmatpush1.msra.mxu0 %v1989
    %2115 = vmatprep.subr.mxu0 %v1994
    %2116 = vmatpush1.msra.mxu0 %v1993
    %2117 = vmatprep.subr.mxu0 %v1998
    %2118 = vmatpush1.msra.mxu0 %v1997
    %2119 = vmatprep.subr.mxu0 %v2002
    %2120 = vmatpush1.msra.mxu0 %v2001
    %2121 = vmatprep.subr.mxu0 %v2006
    %2122 = vmatpush1.msra.mxu0 %v2005
    %2123 = vmatprep.subr.mxu0 %v2010
    %2124 = vmatpush1.msra.mxu0 %v2009
    %2125 = vmatprep.subr.mxu0 %v2014
    %2126 = vmatpush1.msra.mxu0 %v2013
    %2127 = vmatprep.subr.mxu0 %v2018
    %2128 = vmatpush1.msra.mxu0 %v2017
    %2129 = vmatprep.subr.mxu0 %v2022
    %2130 = vmatpush1.msra.mxu0 %v2021
    %2131 = vmatprep.subr.mxu0 %v2026
    %2132 = vmatpush1.msra.mxu0 %v2025
    %2133 = vmatprep.subr.mxu0 %v2030
    %2134 = vmatpush1.msra.mxu0 %v2029
    %2135 = vmatprep.subr.mxu0 %v2034
    %2136 = vmatpush1.msra.mxu0 %v2033
    %2137 = vmatprep.subr.mxu0 %v2038
    %2138 = vmatpush1.msra.mxu0 %v2037
    %2139 = vmatprep.subr.mxu0 %v2042
    %2140 = vmatpush1.msra.mxu0 %v2041
    %2141 = vmatprep.subr.mxu0 %v2046
    %2142 = vmatpush1.msra.mxu0 %v2045
    %2143 = vmatprep.subr.mxu0 %v2050
    %2144 = vmatpush1.msra.mxu0 %v2049
    %2145 = vmatprep.subr.mxu0 %v2054
    %2146 = vmatpush1.msra.mxu0 %v2053
    %2147 = vmatprep.subr.mxu0 %v2058
    %2148 = vmatpush1.msra.mxu0 %v2057
    %2149 = vmatprep.subr.mxu0 %v2062
    %2150 = vmatpush1.msra.mxu0 %v2061
    %2151 = vmatprep.subr.mxu0 %v2066
    %2152 = vmatpush1.msra.mxu0 %v2065
    %2153 = vmatprep.subr.mxu0 %v2070
    %2154 = vmatpush1.msra.mxu0 %v2069
    %2155 = vmatprep.subr.mxu0 %v2074
    %2156 = vmatpush1.msra.mxu0 %v2073
    %2157 = vmatprep.subr.mxu0 %v2078
    %2158 = vmatpush1.msra.mxu0 %v2077
    %2159 = vmatprep.subr.mxu0 %v2082
    %2160 = vmatpush1.msra.mxu0 %v2081
    %2161 = vmatprep.subr.mxu0 %v2086
    %2162 = vmatpush1.msra.mxu0 %v2085
    %2163 = vmatprep.subr.mxu0 %v2090
    %2164 = vmatpush1.msra.mxu0 %v2089
    %2165 = vmatprep.subr.mxu0 %v2094
    %2166 = vmatpush1.msra.mxu0 %v2093
    %2167 = vmatprep.subr.mxu0 %v2098
    %2168 = vmatpush1.msra.mxu0 %v2097
    %2169 = vmatprep.subr.mxu0 %v2102
    %2170 = vmatpush1.msra.mxu0 %v2101
    %2171 = vmatprep.subr.mxu0 %v2106
    %2172 = vmatpush1.msra.mxu0 %v2105
    %2173 = vmatprep.mubr.f32.mxu0 %v1980
    %2174 = vmatmul.mubr.f32.gmra.mrb[0].mxu0 %v1979
    %v2175 = vpop.f32.mrb[0].mxu0
    %v2176 = vadd.f32 0.0, %v2175
    %v2177 = vpop.f32.mrb[0].mxu0
    %v2178 = vadd.f32 0.0, %v2177
    %2179 = vdwg.mxu0
    %2180 = vmatprep.subr.mxu0 %v1984
    %2181 = vmatpush1.msra.mxu0 %v1983
    %2182 = vmatprep.subr.mxu0 %v1988
    %2183 = vmatpush1.msra.mxu0 %v1987
    %2184 = vmatprep.subr.mxu0 %v1992
    %2185 = vmatpush1.msra.mxu0 %v1991
    %2186 = vmatprep.subr.mxu0 %v1996
    %2187 = vmatpush1.msra.mxu0 %v1995
    %2188 = vmatprep.subr.mxu0 %v2000
    %2189 = vmatpush1.msra.mxu0 %v1999
    %2190 = vmatprep.subr.mxu0 %v2004
    %2191 = vmatpush1.msra.mxu0 %v2003
    %2192 = vmatprep.subr.mxu0 %v2008
    %2193 = vmatpush1.msra.mxu0 %v2007
    %2194 = vmatprep.subr.mxu0 %v2012
    %2195 = vmatpush1.msra.mxu0 %v2011
    %2196 = vmatprep.subr.mxu0 %v2016
    %2197 = vmatpush1.msra.mxu0 %v2015
    %2198 = vmatprep.subr.mxu0 %v2020
    %2199 = vmatpush1.msra.mxu0 %v2019
    %2200 = vmatprep.subr.mxu0 %v2024
    %2201 = vmatpush1.msra.mxu0 %v2023
    %2202 = vmatprep.subr.mxu0 %v2028
    %2203 = vmatpush1.msra.mxu0 %v2027
    %2204 = vmatprep.subr.mxu0 %v2032
    %2205 = vmatpush1.msra.mxu0 %v2031
    %2206 = vmatprep.subr.mxu0 %v2036
    %2207 = vmatpush1.msra.mxu0 %v2035
    %2208 = vmatprep.subr.mxu0 %v2040
    %2209 = vmatpush1.msra.mxu0 %v2039
    %2210 = vmatprep.subr.mxu0 %v2044
    %2211 = vmatpush1.msra.mxu0 %v2043
    %2212 = vmatprep.subr.mxu0 %v2048
    %2213 = vmatpush1.msra.mxu0 %v2047
    %2214 = vmatprep.subr.mxu0 %v2052
    %2215 = vmatpush1.msra.mxu0 %v2051
    %2216 = vmatprep.subr.mxu0 %v2056
    %2217 = vmatpush1.msra.mxu0 %v2055
    %2218 = vmatprep.subr.mxu0 %v2060
    %2219 = vmatpush1.msra.mxu0 %v2059
    %2220 = vmatprep.subr.mxu0 %v2064
    %2221 = vmatpush1.msra.mxu0 %v2063
    %2222 = vmatprep.subr.mxu0 %v2068
    %2223 = vmatpush1.msra.mxu0 %v2067
    %2224 = vmatprep.subr.mxu0 %v2072
    %2225 = vmatpush1.msra.mxu0 %v2071
    %2226 = vmatprep.subr.mxu0 %v2076
    %2227 = vmatpush1.msra.mxu0 %v2075
    %2228 = vmatprep.subr.mxu0 %v2080
    %2229 = vmatpush1.msra.mxu0 %v2079
    %2230 = vmatprep.subr.mxu0 %v2084
    %2231 = vmatpush1.msra.mxu0 %v2083
    %2232 = vmatprep.subr.mxu0 %v2088
    %2233 = vmatpush1.msra.mxu0 %v2087
    %2234 = vmatprep.subr.mxu0 %v2092
    %2235 = vmatpush1.msra.mxu0 %v2091
    %2236 = vmatprep.subr.mxu0 %v2096
    %2237 = vmatpush1.msra.mxu0 %v2095
    %2238 = vmatprep.subr.mxu0 %v2100
    %2239 = vmatpush1.msra.mxu0 %v2099
    %2240 = vmatprep.subr.mxu0 %v2104
    %2241 = vmatpush1.msra.mxu0 %v2103
    %2242 = vmatprep.subr.mxu0 %v2108
    %2243 = vmatpush1.msra.mxu0 %v2107
    %2244 = vmatprep.mubr.f32.mxu0 %v1980
    %2245 = vmatmul.mubr.f32.gmra.mrb[0].mxu0 %v1979
    %v2246 = vpop.f32.mrb[0].mxu0
    %v2247 = vadd.f32 0.0, %v2246
    %v2248 = vpop.f32.mrb[0].mxu0
    %v2249 = vadd.f32 0.0, %v2248
    %2250 = vdwg.mxu0
    %v2251 = vadd.f32 %v1559, %v2176
    %v2252 = vadd.f32 %v1561, %v2178
    %v2253 = vadd.f32 %v1630, %v2247
    %v2254 = vadd.f32 %v1632, %v2249
    %v2255 = vld [vmem:[#allocation11] sm:$0xf]
    %v2257 = vlaneseq
    %v2258 = vshrl.u32 %v2257, 7
    %v2259 = vsub.s32 0, %v2258
    %v2260 = vrot.slane %v2255, %v2259
    %v2261 = vlaneseq
    %v2262 = vshrl.u32 %v2261, 7
    %v2263 = vsub.s32 1, %v2262
    %v2264 = vrot.slane %v2255, %v2263
    %v2265 = vlaneseq
    %v2266 = vshrl.u32 %v2265, 7
    %v2267 = vsub.s32 2, %v2266
    %v2268 = vrot.slane %v2255, %v2267
    %v2269 = vlaneseq
    %v2270 = vshrl.u32 %v2269, 7
    %v2271 = vsub.s32 3, %v2270
    %v2272 = vrot.slane %v2255, %v2271
    %v2277 = vadd.f32 %v2251, %v2260
    %v2278 = vadd.f32 %v2252, %v2264
    %v2279 = vadd.f32 %v2253, %v2268
    %v2280 = vadd.f32 %v2254, %v2272
    %v2281 = vmul.f32 %v2277, %v2277
    %v2282 = vmul.f32 %v2278, %v2278
    %v2283 = vmul.f32 %v2279, %v2279
    %v2284 = vmul.f32 %v2280, %v2280
    %v2285 = vmul.f32 %v2277, %v2281
    %v2286 = vmul.f32 %v2278, %v2282
    %v2287 = vmul.f32 %v2279, %v2283
    %v2288 = vmul.f32 %v2280, %v2284
    %v2289 = vmul.f32 %v2285, 0.044715
    %v2290 = vmul.f32 %v2286, 0.044715
    %v2291 = vmul.f32 %v2287, 0.044715
    %v2292 = vmul.f32 %v2288, 0.044715
    %v2293 = vadd.f32 %v2277, %v2289
    %v2294 = vadd.f32 %v2278, %v2290
    %v2295 = vadd.f32 %v2279, %v2291
    %v2296 = vadd.f32 %v2280, %v2292
    %v2297 = vmul.f32 %v2293, 0.7978846
    %v2298 = vmul.f32 %v2294, 0.7978846
    %v2299 = vmul.f32 %v2295, 0.7978846
    %v2300 = vmul.f32 %v2296, 0.7978846
    %v2301 = vtanh.pop %v2297
    %v2302 = vtanh.pop %v2298
    %v2303 = vtanh.pop %v2299
    %v2304 = vtanh.pop %v2300
    %v2305 = vadd.f32 %v2301, 1.0
    %v2306 = vadd.f32 %v2302, 1.0
    %v2307 = vadd.f32 %v2303, 1.0
    %v2308 = vadd.f32 %v2304, 1.0
    %v2309 = vmul.f32 %v2305, 0.5
    %v2310 = vmul.f32 %v2306, 0.5
    %v2311 = vmul.f32 %v2307, 0.5
    %v2312 = vmul.f32 %v2308, 0.5
    %v2313 = vmul.f32 %v2277, %v2309
    %v2314 = vmul.f32 %v2278, %v2310
    %v2315 = vmul.f32 %v2279, %v2311
    %v2316 = vmul.f32 %v2280, %v2312
    %v2317 = vld [vmem:[#allocation13] sm:$0xff]
    %v2318 = vld [vmem:[#allocation13 + $0x8] sm:$0xff]
    %v2319 = vld [vmem:[#allocation13 + $0x10] sm:$0xff]
    %v2320 = vld [vmem:[#allocation13 + $0x18] sm:$0xff]
    %v2321 = vld [vmem:[#allocation13 + $0x20] sm:$0xff]
    %v2322 = vld [vmem:[#allocation13 + $0x28] sm:$0xff]
    %v2323 = vld [vmem:[#allocation13 + $0x30] sm:$0xff]
    %v2324 = vld [vmem:[#allocation13 + $0x38] sm:$0xff]
    %v2325 = vld [vmem:[#allocation13 + $0x40] sm:$0xff]
    %v2326 = vld [vmem:[#allocation13 + $0x48] sm:$0xff]
    %v2327 = vld [vmem:[#allocation13 + $0x50] sm:$0xff]
    %v2328 = vld [vmem:[#allocation13 + $0x58] sm:$0xff]
    %v2329 = vld [vmem:[#allocation13 + $0x60] sm:$0xff]
    %v2330 = vld [vmem:[#allocation13 + $0x68] sm:$0xff]
    %v2331 = vld [vmem:[#allocation13 + $0x70] sm:$0xff]
    %v2332 = vld [vmem:[#allocation13 + $0x78] sm:$0xff]
    %v2333 = vld [vmem:[#allocation13 + $0x80] sm:$0xff]
    %v2334 = vld [vmem:[#allocation13 + $0x88] sm:$0xff]
    %v2335 = vld [vmem:[#allocation13 + $0x90] sm:$0xff]
    %v2336 = vld [vmem:[#allocation13 + $0x98] sm:$0xff]
    %v2337 = vld [vmem:[#allocation13 + $0xa0] sm:$0xff]
    %v2338 = vld [vmem:[#allocation13 + $0xa8] sm:$0xff]
    %v2339 = vld [vmem:[#allocation13 + $0xb0] sm:$0xff]
    %v2340 = vld [vmem:[#allocation13 + $0xb8] sm:$0xff]
    %v2341 = vld [vmem:[#allocation13 + $0xc0] sm:$0xff]
    %v2342 = vld [vmem:[#allocation13 + $0xc8] sm:$0xff]
    %v2343 = vld [vmem:[#allocation13 + $0xd0] sm:$0xff]
    %v2344 = vld [vmem:[#allocation13 + $0xd8] sm:$0xff]
    %v2345 = vld [vmem:[#allocation13 + $0xe0] sm:$0xff]
    %v2346 = vld [vmem:[#allocation13 + $0xe8] sm:$0xff]
    %v2347 = vld [vmem:[#allocation13 + $0xf0] sm:$0xff]
    %v2348 = vld [vmem:[#allocation13 + $0xf8] sm:$0xff]
    %v2349 = vld [vmem:[#allocation13 + $0x100] sm:$0xff]
    %v2350 = vld [vmem:[#allocation13 + $0x108] sm:$0xff]
    %v2351 = vld [vmem:[#allocation13 + $0x110] sm:$0xff]
    %v2352 = vld [vmem:[#allocation13 + $0x118] sm:$0xff]
    %v2353 = vld [vmem:[#allocation13 + $0x120] sm:$0xff]
    %v2354 = vld [vmem:[#allocation13 + $0x128] sm:$0xff]
    %v2355 = vld [vmem:[#allocation13 + $0x130] sm:$0xff]
    %v2356 = vld [vmem:[#allocation13 + $0x138] sm:$0xff]
    %v2357 = vld [vmem:[#allocation13 + $0x140] sm:$0xff]
    %v2358 = vld [vmem:[#allocation13 + $0x148] sm:$0xff]
    %v2359 = vld [vmem:[#allocation13 + $0x150] sm:$0xff]
    %v2360 = vld [vmem:[#allocation13 + $0x158] sm:$0xff]
    %v2361 = vld [vmem:[#allocation13 + $0x160] sm:$0xff]
    %v2362 = vld [vmem:[#allocation13 + $0x168] sm:$0xff]
    %v2363 = vld [vmem:[#allocation13 + $0x170] sm:$0xff]
    %v2364 = vld [vmem:[#allocation13 + $0x178] sm:$0xff]
    %v2365 = vld [vmem:[#allocation13 + $0x180] sm:$0xff]
    %v2366 = vld [vmem:[#allocation13 + $0x188] sm:$0xff]
    %v2367 = vld [vmem:[#allocation13 + $0x190] sm:$0xff]
    %v2368 = vld [vmem:[#allocation13 + $0x198] sm:$0xff]
    %v2369 = vld [vmem:[#allocation13 + $0x1a0] sm:$0xff]
    %v2370 = vld [vmem:[#allocation13 + $0x1a8] sm:$0xff]
    %v2371 = vld [vmem:[#allocation13 + $0x1b0] sm:$0xff]
    %v2372 = vld [vmem:[#allocation13 + $0x1b8] sm:$0xff]
    %v2373 = vld [vmem:[#allocation13 + $0x1c0] sm:$0xff]
    %v2374 = vld [vmem:[#allocation13 + $0x1c8] sm:$0xff]
    %v2375 = vld [vmem:[#allocation13 + $0x1d0] sm:$0xff]
    %v2376 = vld [vmem:[#allocation13 + $0x1d8] sm:$0xff]
    %v2377 = vld [vmem:[#allocation13 + $0x1e0] sm:$0xff]
    %v2378 = vld [vmem:[#allocation13 + $0x1e8] sm:$0xff]
    %v2379 = vld [vmem:[#allocation13 + $0x1f0] sm:$0xff]
    %v2380 = vld [vmem:[#allocation13 + $0x1f8] sm:$0xff]
    %v2381 = vld [vmem:[#allocation13 + $0x200] sm:$0xff]
    %v2382 = vld [vmem:[#allocation13 + $0x208] sm:$0xff]
    %v2383 = vld [vmem:[#allocation13 + $0x210] sm:$0xff]
    %v2384 = vld [vmem:[#allocation13 + $0x218] sm:$0xff]
    %v2385 = vld [vmem:[#allocation13 + $0x220] sm:$0xff]
    %v2386 = vld [vmem:[#allocation13 + $0x228] sm:$0xff]
    %v2387 = vld [vmem:[#allocation13 + $0x230] sm:$0xff]
    %v2388 = vld [vmem:[#allocation13 + $0x238] sm:$0xff]
    %v2389 = vld [vmem:[#allocation13 + $0x240] sm:$0xff]
    %v2390 = vld [vmem:[#allocation13 + $0x248] sm:$0xff]
    %v2391 = vld [vmem:[#allocation13 + $0x250] sm:$0xff]
    %v2392 = vld [vmem:[#allocation13 + $0x258] sm:$0xff]
    %v2393 = vld [vmem:[#allocation13 + $0x260] sm:$0xff]
    %v2394 = vld [vmem:[#allocation13 + $0x268] sm:$0xff]
    %v2395 = vld [vmem:[#allocation13 + $0x270] sm:$0xff]
    %v2396 = vld [vmem:[#allocation13 + $0x278] sm:$0xff]
    %v2397 = vld [vmem:[#allocation13 + $0x280] sm:$0xff]
    %v2398 = vld [vmem:[#allocation13 + $0x288] sm:$0xff]
    %v2399 = vld [vmem:[#allocation13 + $0x290] sm:$0xff]
    %v2400 = vld [vmem:[#allocation13 + $0x298] sm:$0xff]
    %v2401 = vld [vmem:[#allocation13 + $0x2a0] sm:$0xff]
    %v2402 = vld [vmem:[#allocation13 + $0x2a8] sm:$0xff]
    %v2403 = vld [vmem:[#allocation13 + $0x2b0] sm:$0xff]
    %v2404 = vld [vmem:[#allocation13 + $0x2b8] sm:$0xff]
    %v2405 = vld [vmem:[#allocation13 + $0x2c0] sm:$0xff]
    %v2406 = vld [vmem:[#allocation13 + $0x2c8] sm:$0xff]
    %v2407 = vld [vmem:[#allocation13 + $0x2d0] sm:$0xff]
    %v2408 = vld [vmem:[#allocation13 + $0x2d8] sm:$0xff]
    %v2409 = vld [vmem:[#allocation13 + $0x2e0] sm:$0xff]
    %v2410 = vld [vmem:[#allocation13 + $0x2e8] sm:$0xff]
    %v2411 = vld [vmem:[#allocation13 + $0x2f0] sm:$0xff]
    %v2412 = vld [vmem:[#allocation13 + $0x2f8] sm:$0xff]
    %v2413 = vld [vmem:[#allocation13 + $0x300] sm:$0xff]
    %v2414 = vld [vmem:[#allocation13 + $0x308] sm:$0xff]
    %v2415 = vld [vmem:[#allocation13 + $0x310] sm:$0xff]
    %v2416 = vld [vmem:[#allocation13 + $0x318] sm:$0xff]
    %v2417 = vld [vmem:[#allocation13 + $0x320] sm:$0xff]
    %v2418 = vld [vmem:[#allocation13 + $0x328] sm:$0xff]
    %v2419 = vld [vmem:[#allocation13 + $0x330] sm:$0xff]
    %v2420 = vld [vmem:[#allocation13 + $0x338] sm:$0xff]
    %v2421 = vld [vmem:[#allocation13 + $0x340] sm:$0xff]
    %v2422 = vld [vmem:[#allocation13 + $0x348] sm:$0xff]
    %v2423 = vld [vmem:[#allocation13 + $0x350] sm:$0xff]
    %v2424 = vld [vmem:[#allocation13 + $0x358] sm:$0xff]
    %v2425 = vld [vmem:[#allocation13 + $0x360] sm:$0xff]
    %v2426 = vld [vmem:[#allocation13 + $0x368] sm:$0xff]
    %v2427 = vld [vmem:[#allocation13 + $0x370] sm:$0xff]
    %v2428 = vld [vmem:[#allocation13 + $0x378] sm:$0xff]
    %v2429 = vld [vmem:[#allocation13 + $0x380] sm:$0xff]
    %v2430 = vld [vmem:[#allocation13 + $0x388] sm:$0xff]
    %v2431 = vld [vmem:[#allocation13 + $0x390] sm:$0xff]
    %v2432 = vld [vmem:[#allocation13 + $0x398] sm:$0xff]
    %v2433 = vld [vmem:[#allocation13 + $0x3a0] sm:$0xff]
    %v2434 = vld [vmem:[#allocation13 + $0x3a8] sm:$0xff]
    %v2435 = vld [vmem:[#allocation13 + $0x3b0] sm:$0xff]
    %v2436 = vld [vmem:[#allocation13 + $0x3b8] sm:$0xff]
    %v2437 = vld [vmem:[#allocation13 + $0x3c0] sm:$0xff]
    %v2438 = vld [vmem:[#allocation13 + $0x3c8] sm:$0xff]
    %v2439 = vld [vmem:[#allocation13 + $0x3d0] sm:$0xff]
    %v2440 = vld [vmem:[#allocation13 + $0x3d8] sm:$0xff]
    %v2441 = vld [vmem:[#allocation13 + $0x3e0] sm:$0xff]
    %v2442 = vld [vmem:[#allocation13 + $0x3e8] sm:$0xff]
    %v2443 = vld [vmem:[#allocation13 + $0x3f0] sm:$0xff]
    %v2444 = vld [vmem:[#allocation13 + $0x3f8] sm:$0xff]
    %v2445 = vld [vmem:[#allocation13 + $0x400] sm:$0xff]
    %v2446 = vld [vmem:[#allocation13 + $0x408] sm:$0xff]
    %v2447 = vld [vmem:[#allocation13 + $0x410] sm:$0xff]
    %v2448 = vld [vmem:[#allocation13 + $0x418] sm:$0xff]
    %v2449 = vld [vmem:[#allocation13 + $0x420] sm:$0xff]
    %v2450 = vld [vmem:[#allocation13 + $0x428] sm:$0xff]
    %v2451 = vld [vmem:[#allocation13 + $0x430] sm:$0xff]
    %v2452 = vld [vmem:[#allocation13 + $0x438] sm:$0xff]
    %v2453 = vld [vmem:[#allocation13 + $0x440] sm:$0xff]
    %v2454 = vld [vmem:[#allocation13 + $0x448] sm:$0xff]
    %v2455 = vld [vmem:[#allocation13 + $0x450] sm:$0xff]
    %v2456 = vld [vmem:[#allocation13 + $0x458] sm:$0xff]
    %v2457 = vld [vmem:[#allocation13 + $0x460] sm:$0xff]
    %v2458 = vld [vmem:[#allocation13 + $0x468] sm:$0xff]
    %v2459 = vld [vmem:[#allocation13 + $0x470] sm:$0xff]
    %v2460 = vld [vmem:[#allocation13 + $0x478] sm:$0xff]
    %v2461 = vld [vmem:[#allocation13 + $0x480] sm:$0xff]
    %v2462 = vld [vmem:[#allocation13 + $0x488] sm:$0xff]
    %v2463 = vld [vmem:[#allocation13 + $0x490] sm:$0xff]
    %v2464 = vld [vmem:[#allocation13 + $0x498] sm:$0xff]
    %v2465 = vld [vmem:[#allocation13 + $0x4a0] sm:$0xff]
    %v2466 = vld [vmem:[#allocation13 + $0x4a8] sm:$0xff]
    %v2467 = vld [vmem:[#allocation13 + $0x4b0] sm:$0xff]
    %v2468 = vld [vmem:[#allocation13 + $0x4b8] sm:$0xff]
    %v2469 = vld [vmem:[#allocation13 + $0x4c0] sm:$0xff]
    %v2470 = vld [vmem:[#allocation13 + $0x4c8] sm:$0xff]
    %v2471 = vld [vmem:[#allocation13 + $0x4d0] sm:$0xff]
    %v2472 = vld [vmem:[#allocation13 + $0x4d8] sm:$0xff]
    %v2473 = vld [vmem:[#allocation13 + $0x4e0] sm:$0xff]
    %v2474 = vld [vmem:[#allocation13 + $0x4e8] sm:$0xff]
    %v2475 = vld [vmem:[#allocation13 + $0x4f0] sm:$0xff]
    %v2476 = vld [vmem:[#allocation13 + $0x4f8] sm:$0xff]
    %v2477 = vld [vmem:[#allocation13 + $0x500] sm:$0xff]
    %v2478 = vld [vmem:[#allocation13 + $0x508] sm:$0xff]
    %v2479 = vld [vmem:[#allocation13 + $0x510] sm:$0xff]
    %v2480 = vld [vmem:[#allocation13 + $0x518] sm:$0xff]
    %v2481 = vld [vmem:[#allocation13 + $0x520] sm:$0xff]
    %v2482 = vld [vmem:[#allocation13 + $0x528] sm:$0xff]
    %v2483 = vld [vmem:[#allocation13 + $0x530] sm:$0xff]
    %v2484 = vld [vmem:[#allocation13 + $0x538] sm:$0xff]
    %v2485 = vld [vmem:[#allocation13 + $0x540] sm:$0xff]
    %v2486 = vld [vmem:[#allocation13 + $0x548] sm:$0xff]
    %v2487 = vld [vmem:[#allocation13 + $0x550] sm:$0xff]
    %v2488 = vld [vmem:[#allocation13 + $0x558] sm:$0xff]
    %v2489 = vld [vmem:[#allocation13 + $0x560] sm:$0xff]
    %v2490 = vld [vmem:[#allocation13 + $0x568] sm:$0xff]
    %v2491 = vld [vmem:[#allocation13 + $0x570] sm:$0xff]
    %v2492 = vld [vmem:[#allocation13 + $0x578] sm:$0xff]
    %v2493 = vld [vmem:[#allocation13 + $0x580] sm:$0xff]
    %v2494 = vld [vmem:[#allocation13 + $0x588] sm:$0xff]
    %v2495 = vld [vmem:[#allocation13 + $0x590] sm:$0xff]
    %v2496 = vld [vmem:[#allocation13 + $0x598] sm:$0xff]
    %v2497 = vld [vmem:[#allocation13 + $0x5a0] sm:$0xff]
    %v2498 = vld [vmem:[#allocation13 + $0x5a8] sm:$0xff]
    %v2499 = vld [vmem:[#allocation13 + $0x5b0] sm:$0xff]
    %v2500 = vld [vmem:[#allocation13 + $0x5b8] sm:$0xff]
    %v2501 = vld [vmem:[#allocation13 + $0x5c0] sm:$0xff]
    %v2502 = vld [vmem:[#allocation13 + $0x5c8] sm:$0xff]
    %v2503 = vld [vmem:[#allocation13 + $0x5d0] sm:$0xff]
    %v2504 = vld [vmem:[#allocation13 + $0x5d8] sm:$0xff]
    %v2505 = vld [vmem:[#allocation13 + $0x5e0] sm:$0xff]
    %v2506 = vld [vmem:[#allocation13 + $0x5e8] sm:$0xff]
    %v2507 = vld [vmem:[#allocation13 + $0x5f0] sm:$0xff]
    %v2508 = vld [vmem:[#allocation13 + $0x5f8] sm:$0xff]
    %v2509 = vld [vmem:[#allocation13 + $0x600] sm:$0xff]
    %v2510 = vld [vmem:[#allocation13 + $0x608] sm:$0xff]
    %v2511 = vld [vmem:[#allocation13 + $0x610] sm:$0xff]
    %v2512 = vld [vmem:[#allocation13 + $0x618] sm:$0xff]
    %v2513 = vld [vmem:[#allocation13 + $0x620] sm:$0xff]
    %v2514 = vld [vmem:[#allocation13 + $0x628] sm:$0xff]
    %v2515 = vld [vmem:[#allocation13 + $0x630] sm:$0xff]
    %v2516 = vld [vmem:[#allocation13 + $0x638] sm:$0xff]
    %v2517 = vld [vmem:[#allocation13 + $0x640] sm:$0xff]
    %v2518 = vld [vmem:[#allocation13 + $0x648] sm:$0xff]
    %v2519 = vld [vmem:[#allocation13 + $0x650] sm:$0xff]
    %v2520 = vld [vmem:[#allocation13 + $0x658] sm:$0xff]
    %v2521 = vld [vmem:[#allocation13 + $0x660] sm:$0xff]
    %v2522 = vld [vmem:[#allocation13 + $0x668] sm:$0xff]
    %v2523 = vld [vmem:[#allocation13 + $0x670] sm:$0xff]
    %v2524 = vld [vmem:[#allocation13 + $0x678] sm:$0xff]
    %v2525 = vld [vmem:[#allocation13 + $0x680] sm:$0xff]
    %v2526 = vld [vmem:[#allocation13 + $0x688] sm:$0xff]
    %v2527 = vld [vmem:[#allocation13 + $0x690] sm:$0xff]
    %v2528 = vld [vmem:[#allocation13 + $0x698] sm:$0xff]
    %v2529 = vld [vmem:[#allocation13 + $0x6a0] sm:$0xff]
    %v2530 = vld [vmem:[#allocation13 + $0x6a8] sm:$0xff]
    %v2531 = vld [vmem:[#allocation13 + $0x6b0] sm:$0xff]
    %v2532 = vld [vmem:[#allocation13 + $0x6b8] sm:$0xff]
    %v2533 = vld [vmem:[#allocation13 + $0x6c0] sm:$0xff]
    %v2534 = vld [vmem:[#allocation13 + $0x6c8] sm:$0xff]
    %v2535 = vld [vmem:[#allocation13 + $0x6d0] sm:$0xff]
    %v2536 = vld [vmem:[#allocation13 + $0x6d8] sm:$0xff]
    %v2537 = vld [vmem:[#allocation13 + $0x6e0] sm:$0xff]
    %v2538 = vld [vmem:[#allocation13 + $0x6e8] sm:$0xff]
    %v2539 = vld [vmem:[#allocation13 + $0x6f0] sm:$0xff]
    %v2540 = vld [vmem:[#allocation13 + $0x6f8] sm:$0xff]
    %v2541 = vld [vmem:[#allocation13 + $0x700] sm:$0xff]
    %v2542 = vld [vmem:[#allocation13 + $0x708] sm:$0xff]
    %v2543 = vld [vmem:[#allocation13 + $0x710] sm:$0xff]
    %v2544 = vld [vmem:[#allocation13 + $0x718] sm:$0xff]
    %v2545 = vld [vmem:[#allocation13 + $0x720] sm:$0xff]
    %v2546 = vld [vmem:[#allocation13 + $0x728] sm:$0xff]
    %v2547 = vld [vmem:[#allocation13 + $0x730] sm:$0xff]
    %v2548 = vld [vmem:[#allocation13 + $0x738] sm:$0xff]
    %v2549 = vld [vmem:[#allocation13 + $0x740] sm:$0xff]
    %v2550 = vld [vmem:[#allocation13 + $0x748] sm:$0xff]
    %v2551 = vld [vmem:[#allocation13 + $0x750] sm:$0xff]
    %v2552 = vld [vmem:[#allocation13 + $0x758] sm:$0xff]
    %v2553 = vld [vmem:[#allocation13 + $0x760] sm:$0xff]
    %v2554 = vld [vmem:[#allocation13 + $0x768] sm:$0xff]
    %v2555 = vld [vmem:[#allocation13 + $0x770] sm:$0xff]
    %v2556 = vld [vmem:[#allocation13 + $0x778] sm:$0xff]
    %v2557 = vld [vmem:[#allocation13 + $0x780] sm:$0xff]
    %v2558 = vld [vmem:[#allocation13 + $0x788] sm:$0xff]
    %v2559 = vld [vmem:[#allocation13 + $0x790] sm:$0xff]
    %v2560 = vld [vmem:[#allocation13 + $0x798] sm:$0xff]
    %v2561 = vld [vmem:[#allocation13 + $0x7a0] sm:$0xff]
    %v2562 = vld [vmem:[#allocation13 + $0x7a8] sm:$0xff]
    %v2563 = vld [vmem:[#allocation13 + $0x7b0] sm:$0xff]
    %v2564 = vld [vmem:[#allocation13 + $0x7b8] sm:$0xff]
    %v2565 = vld [vmem:[#allocation13 + $0x7c0] sm:$0xff]
    %v2566 = vld [vmem:[#allocation13 + $0x7c8] sm:$0xff]
    %v2567 = vld [vmem:[#allocation13 + $0x7d0] sm:$0xff]
    %v2568 = vld [vmem:[#allocation13 + $0x7d8] sm:$0xff]
    %v2569 = vld [vmem:[#allocation13 + $0x7e0] sm:$0xff]
    %v2570 = vld [vmem:[#allocation13 + $0x7e8] sm:$0xff]
    %v2571 = vld [vmem:[#allocation13 + $0x7f0] sm:$0xff]
    %v2572 = vld [vmem:[#allocation13 + $0x7f8] sm:$0xff]
    %v2573 = vld [vmem:[#allocation13 + $0x800] sm:$0xff]
    %v2574 = vld [vmem:[#allocation13 + $0x808] sm:$0xff]
    %v2575 = vld [vmem:[#allocation13 + $0x810] sm:$0xff]
    %v2576 = vld [vmem:[#allocation13 + $0x818] sm:$0xff]
    %v2577 = vld [vmem:[#allocation13 + $0x820] sm:$0xff]
    %v2578 = vld [vmem:[#allocation13 + $0x828] sm:$0xff]
    %v2579 = vld [vmem:[#allocation13 + $0x830] sm:$0xff]
    %v2580 = vld [vmem:[#allocation13 + $0x838] sm:$0xff]
    %v2581 = vld [vmem:[#allocation13 + $0x840] sm:$0xff]
    %v2582 = vld [vmem:[#allocation13 + $0x848] sm:$0xff]
    %v2583 = vld [vmem:[#allocation13 + $0x850] sm:$0xff]
    %v2584 = vld [vmem:[#allocation13 + $0x858] sm:$0xff]
    %v2585 = vld [vmem:[#allocation13 + $0x860] sm:$0xff]
    %v2586 = vld [vmem:[#allocation13 + $0x868] sm:$0xff]
    %v2587 = vld [vmem:[#allocation13 + $0x870] sm:$0xff]
    %v2588 = vld [vmem:[#allocation13 + $0x878] sm:$0xff]
    %v2589 = vld [vmem:[#allocation13 + $0x880] sm:$0xff]
    %v2590 = vld [vmem:[#allocation13 + $0x888] sm:$0xff]
    %v2591 = vld [vmem:[#allocation13 + $0x890] sm:$0xff]
    %v2592 = vld [vmem:[#allocation13 + $0x898] sm:$0xff]
    %v2593 = vld [vmem:[#allocation13 + $0x8a0] sm:$0xff]
    %v2594 = vld [vmem:[#allocation13 + $0x8a8] sm:$0xff]
    %v2595 = vld [vmem:[#allocation13 + $0x8b0] sm:$0xff]
    %v2596 = vld [vmem:[#allocation13 + $0x8b8] sm:$0xff]
    %v2597 = vld [vmem:[#allocation13 + $0x8c0] sm:$0xff]
    %v2598 = vld [vmem:[#allocation13 + $0x8c8] sm:$0xff]
    %v2599 = vld [vmem:[#allocation13 + $0x8d0] sm:$0xff]
    %v2600 = vld [vmem:[#allocation13 + $0x8d8] sm:$0xff]
    %v2601 = vld [vmem:[#allocation13 + $0x8e0] sm:$0xff]
    %v2602 = vld [vmem:[#allocation13 + $0x8e8] sm:$0xff]
    %v2603 = vld [vmem:[#allocation13 + $0x8f0] sm:$0xff]
    %v2604 = vld [vmem:[#allocation13 + $0x8f8] sm:$0xff]
    %v2605 = vld [vmem:[#allocation13 + $0x900] sm:$0xff]
    %v2606 = vld [vmem:[#allocation13 + $0x908] sm:$0xff]
    %v2607 = vld [vmem:[#allocation13 + $0x910] sm:$0xff]
    %v2608 = vld [vmem:[#allocation13 + $0x918] sm:$0xff]
    %v2609 = vld [vmem:[#allocation13 + $0x920] sm:$0xff]
    %v2610 = vld [vmem:[#allocation13 + $0x928] sm:$0xff]
    %v2611 = vld [vmem:[#allocation13 + $0x930] sm:$0xff]
    %v2612 = vld [vmem:[#allocation13 + $0x938] sm:$0xff]
    %v2613 = vld [vmem:[#allocation13 + $0x940] sm:$0xff]
    %v2614 = vld [vmem:[#allocation13 + $0x948] sm:$0xff]
    %v2615 = vld [vmem:[#allocation13 + $0x950] sm:$0xff]
    %v2616 = vld [vmem:[#allocation13 + $0x958] sm:$0xff]
    %v2617 = vld [vmem:[#allocation13 + $0x960] sm:$0xff]
    %v2618 = vld [vmem:[#allocation13 + $0x968] sm:$0xff]
    %v2619 = vld [vmem:[#allocation13 + $0x970] sm:$0xff]
    %v2620 = vld [vmem:[#allocation13 + $0x978] sm:$0xff]
    %v2621 = vld [vmem:[#allocation13 + $0x980] sm:$0xff]
    %v2622 = vld [vmem:[#allocation13 + $0x988] sm:$0xff]
    %v2623 = vld [vmem:[#allocation13 + $0x990] sm:$0xff]
    %v2624 = vld [vmem:[#allocation13 + $0x998] sm:$0xff]
    %v2625 = vld [vmem:[#allocation13 + $0x9a0] sm:$0xff]
    %v2626 = vld [vmem:[#allocation13 + $0x9a8] sm:$0xff]
    %v2627 = vld [vmem:[#allocation13 + $0x9b0] sm:$0xff]
    %v2628 = vld [vmem:[#allocation13 + $0x9b8] sm:$0xff]
    %v2629 = vld [vmem:[#allocation13 + $0x9c0] sm:$0xff]
    %v2630 = vld [vmem:[#allocation13 + $0x9c8] sm:$0xff]
    %v2631 = vld [vmem:[#allocation13 + $0x9d0] sm:$0xff]
    %v2632 = vld [vmem:[#allocation13 + $0x9d8] sm:$0xff]
    %v2633 = vld [vmem:[#allocation13 + $0x9e0] sm:$0xff]
    %v2634 = vld [vmem:[#allocation13 + $0x9e8] sm:$0xff]
    %v2635 = vld [vmem:[#allocation13 + $0x9f0] sm:$0xff]
    %v2636 = vld [vmem:[#allocation13 + $0x9f8] sm:$0xff]
    %v2637 = vld [vmem:[#allocation13 + $0xa00] sm:$0xff]
    %v2638 = vld [vmem:[#allocation13 + $0xa08] sm:$0xff]
    %v2639 = vld [vmem:[#allocation13 + $0xa10] sm:$0xff]
    %v2640 = vld [vmem:[#allocation13 + $0xa18] sm:$0xff]
    %v2641 = vld [vmem:[#allocation13 + $0xa20] sm:$0xff]
    %v2642 = vld [vmem:[#allocation13 + $0xa28] sm:$0xff]
    %v2643 = vld [vmem:[#allocation13 + $0xa30] sm:$0xff]
    %v2644 = vld [vmem:[#allocation13 + $0xa38] sm:$0xff]
    %v2645 = vld [vmem:[#allocation13 + $0xa40] sm:$0xff]
    %v2646 = vld [vmem:[#allocation13 + $0xa48] sm:$0xff]
    %v2647 = vld [vmem:[#allocation13 + $0xa50] sm:$0xff]
    %v2648 = vld [vmem:[#allocation13 + $0xa58] sm:$0xff]
    %v2649 = vld [vmem:[#allocation13 + $0xa60] sm:$0xff]
    %v2650 = vld [vmem:[#allocation13 + $0xa68] sm:$0xff]
    %v2651 = vld [vmem:[#allocation13 + $0xa70] sm:$0xff]
    %v2652 = vld [vmem:[#allocation13 + $0xa78] sm:$0xff]
    %v2653 = vld [vmem:[#allocation13 + $0xa80] sm:$0xff]
    %v2654 = vld [vmem:[#allocation13 + $0xa88] sm:$0xff]
    %v2655 = vld [vmem:[#allocation13 + $0xa90] sm:$0xff]
    %v2656 = vld [vmem:[#allocation13 + $0xa98] sm:$0xff]
    %v2657 = vld [vmem:[#allocation13 + $0xaa0] sm:$0xff]
    %v2658 = vld [vmem:[#allocation13 + $0xaa8] sm:$0xff]
    %v2659 = vld [vmem:[#allocation13 + $0xab0] sm:$0xff]
    %v2660 = vld [vmem:[#allocation13 + $0xab8] sm:$0xff]
    %v2661 = vld [vmem:[#allocation13 + $0xac0] sm:$0xff]
    %v2662 = vld [vmem:[#allocation13 + $0xac8] sm:$0xff]
    %v2663 = vld [vmem:[#allocation13 + $0xad0] sm:$0xff]
    %v2664 = vld [vmem:[#allocation13 + $0xad8] sm:$0xff]
    %v2665 = vld [vmem:[#allocation13 + $0xae0] sm:$0xff]
    %v2666 = vld [vmem:[#allocation13 + $0xae8] sm:$0xff]
    %v2667 = vld [vmem:[#allocation13 + $0xaf0] sm:$0xff]
    %v2668 = vld [vmem:[#allocation13 + $0xaf8] sm:$0xff]
    %v2669 = vld [vmem:[#allocation13 + $0xb00] sm:$0xff]
    %v2670 = vld [vmem:[#allocation13 + $0xb08] sm:$0xff]
    %v2671 = vld [vmem:[#allocation13 + $0xb10] sm:$0xff]
    %v2672 = vld [vmem:[#allocation13 + $0xb18] sm:$0xff]
    %v2673 = vld [vmem:[#allocation13 + $0xb20] sm:$0xff]
    %v2674 = vld [vmem:[#allocation13 + $0xb28] sm:$0xff]
    %v2675 = vld [vmem:[#allocation13 + $0xb30] sm:$0xff]
    %v2676 = vld [vmem:[#allocation13 + $0xb38] sm:$0xff]
    %v2677 = vld [vmem:[#allocation13 + $0xb40] sm:$0xff]
    %v2678 = vld [vmem:[#allocation13 + $0xb48] sm:$0xff]
    %v2679 = vld [vmem:[#allocation13 + $0xb50] sm:$0xff]
    %v2680 = vld [vmem:[#allocation13 + $0xb58] sm:$0xff]
    %v2681 = vld [vmem:[#allocation13 + $0xb60] sm:$0xff]
    %v2682 = vld [vmem:[#allocation13 + $0xb68] sm:$0xff]
    %v2683 = vld [vmem:[#allocation13 + $0xb70] sm:$0xff]
    %v2684 = vld [vmem:[#allocation13 + $0xb78] sm:$0xff]
    %v2685 = vld [vmem:[#allocation13 + $0xb80] sm:$0xff]
    %v2686 = vld [vmem:[#allocation13 + $0xb88] sm:$0xff]
    %v2687 = vld [vmem:[#allocation13 + $0xb90] sm:$0xff]
    %v2688 = vld [vmem:[#allocation13 + $0xb98] sm:$0xff]
    %v2689 = vld [vmem:[#allocation13 + $0xba0] sm:$0xff]
    %v2690 = vld [vmem:[#allocation13 + $0xba8] sm:$0xff]
    %v2691 = vld [vmem:[#allocation13 + $0xbb0] sm:$0xff]
    %v2692 = vld [vmem:[#allocation13 + $0xbb8] sm:$0xff]
    %v2693 = vld [vmem:[#allocation13 + $0xbc0] sm:$0xff]
    %v2694 = vld [vmem:[#allocation13 + $0xbc8] sm:$0xff]
    %v2695 = vld [vmem:[#allocation13 + $0xbd0] sm:$0xff]
    %v2696 = vld [vmem:[#allocation13 + $0xbd8] sm:$0xff]
    %v2697 = vld [vmem:[#allocation13 + $0xbe0] sm:$0xff]
    %v2698 = vld [vmem:[#allocation13 + $0xbe8] sm:$0xff]
    %v2699 = vld [vmem:[#allocation13 + $0xbf0] sm:$0xff]
    %v2700 = vld [vmem:[#allocation13 + $0xbf8] sm:$0xff]
    %v2701 = vld [vmem:[#allocation14] sm:$0x3f]
    %v2703 = vlaneseq
    %v2704 = vshrl.u32 %v2703, 7
    %v2705 = vsub.s32 0, %v2704
    %v2706 = vrot.slane %v2701, %v2705
    %v2707 = vlaneseq
    %v2708 = vshrl.u32 %v2707, 7
    %v2709 = vsub.s32 1, %v2708
    %v2710 = vrot.slane %v2701, %v2709
    %v2711 = vlaneseq
    %v2712 = vshrl.u32 %v2711, 7
    %v2713 = vsub.s32 2, %v2712
    %v2714 = vrot.slane %v2701, %v2713
    %v2715 = vlaneseq
    %v2716 = vshrl.u32 %v2715, 7
    %v2717 = vsub.s32 3, %v2716
    %v2718 = vrot.slane %v2701, %v2717
    %v2719 = vlaneseq
    %v2720 = vshrl.u32 %v2719, 7
    %v2721 = vsub.s32 4, %v2720
    %v2722 = vrot.slane %v2701, %v2721
    %v2723 = vlaneseq
    %v2724 = vshrl.u32 %v2723, 7
    %v2725 = vsub.s32 5, %v2724
    %v2726 = vrot.slane %v2701, %v2725
    %2733 = vmatprep.subr.mxu0 %v2318
    %2734 = vmatpush1.msra.mxu0 %v2317
    %2735 = vmatprep.subr.mxu0 %v2324
    %2736 = vmatpush1.msra.mxu0 %v2323
    %2737 = vmatprep.subr.mxu0 %v2330
    %2738 = vmatpush1.msra.mxu0 %v2329
    %2739 = vmatprep.subr.mxu0 %v2336
    %2740 = vmatpush1.msra.mxu0 %v2335
    %2741 = vmatprep.subr.mxu0 %v2342
    %2742 = vmatpush1.msra.mxu0 %v2341
    %2743 = vmatprep.subr.mxu0 %v2348
    %2744 = vmatpush1.msra.mxu0 %v2347
    %2745 = vmatprep.subr.mxu0 %v2354
    %2746 = vmatpush1.msra.mxu0 %v2353
    %2747 = vmatprep.subr.mxu0 %v2360
    %2748 = vmatpush1.msra.mxu0 %v2359
    %2749 = vmatprep.subr.mxu0 %v2366
    %2750 = vmatpush1.msra.mxu0 %v2365
    %2751 = vmatprep.subr.mxu0 %v2372
    %2752 = vmatpush1.msra.mxu0 %v2371
    %2753 = vmatprep.subr.mxu0 %v2378
    %2754 = vmatpush1.msra.mxu0 %v2377
    %2755 = vmatprep.subr.mxu0 %v2384
    %2756 = vmatpush1.msra.mxu0 %v2383
    %2757 = vmatprep.subr.mxu0 %v2390
    %2758 = vmatpush1.msra.mxu0 %v2389
    %2759 = vmatprep.subr.mxu0 %v2396
    %2760 = vmatpush1.msra.mxu0 %v2395
    %2761 = vmatprep.subr.mxu0 %v2402
    %2762 = vmatpush1.msra.mxu0 %v2401
    %2763 = vmatprep.subr.mxu0 %v2408
    %2764 = vmatpush1.msra.mxu0 %v2407
    %2765 = vmatprep.subr.mxu0 %v2414
    %2766 = vmatpush1.msra.mxu0 %v2413
    %2767 = vmatprep.subr.mxu0 %v2420
    %2768 = vmatpush1.msra.mxu0 %v2419
    %2769 = vmatprep.subr.mxu0 %v2426
    %2770 = vmatpush1.msra.mxu0 %v2425
    %2771 = vmatprep.subr.mxu0 %v2432
    %2772 = vmatpush1.msra.mxu0 %v2431
    %2773 = vmatprep.subr.mxu0 %v2438
    %2774 = vmatpush1.msra.mxu0 %v2437
    %2775 = vmatprep.subr.mxu0 %v2444
    %2776 = vmatpush1.msra.mxu0 %v2443
    %2777 = vmatprep.subr.mxu0 %v2450
    %2778 = vmatpush1.msra.mxu0 %v2449
    %2779 = vmatprep.subr.mxu0 %v2456
    %2780 = vmatpush1.msra.mxu0 %v2455
    %2781 = vmatprep.subr.mxu0 %v2462
    %2782 = vmatpush1.msra.mxu0 %v2461
    %2783 = vmatprep.subr.mxu0 %v2468
    %2784 = vmatpush1.msra.mxu0 %v2467
    %2785 = vmatprep.subr.mxu0 %v2474
    %2786 = vmatpush1.msra.mxu0 %v2473
    %2787 = vmatprep.subr.mxu0 %v2480
    %2788 = vmatpush1.msra.mxu0 %v2479
    %2789 = vmatprep.subr.mxu0 %v2486
    %2790 = vmatpush1.msra.mxu0 %v2485
    %2791 = vmatprep.subr.mxu0 %v2492
    %2792 = vmatpush1.msra.mxu0 %v2491
    %2793 = vmatprep.subr.mxu0 %v2498
    %2794 = vmatpush1.msra.mxu0 %v2497
    %2795 = vmatprep.subr.mxu0 %v2504
    %2796 = vmatpush1.msra.mxu0 %v2503
    %2797 = vmatprep.mubr.f32.mxu0 %v2314
    %2798 = vmatmul.mubr.f32.gmra.mrb[0].mxu0 %v2313
    %v2799 = vpop.f32.mrb[0].mxu0
    %v2800 = vadd.f32 %v2706, %v2799
    %v2801 = vpop.f32.mrb[0].mxu0
    %v2802 = vadd.f32 %v2710, %v2801
    %2803 = vdwg.mxu0
    %2804 = vmatprep.subr.mxu0 %v2510
    %2805 = vmatpush1.msra.mxu0 %v2509
    %2806 = vmatprep.subr.mxu0 %v2516
    %2807 = vmatpush1.msra.mxu0 %v2515
    %2808 = vmatprep.subr.mxu0 %v2522
    %2809 = vmatpush1.msra.mxu0 %v2521
    %2810 = vmatprep.subr.mxu0 %v2528
    %2811 = vmatpush1.msra.mxu0 %v2527
    %2812 = vmatprep.subr.mxu0 %v2534
    %2813 = vmatpush1.msra.mxu0 %v2533
    %2814 = vmatprep.subr.mxu0 %v2540
    %2815 = vmatpush1.msra.mxu0 %v2539
    %2816 = vmatprep.subr.mxu0 %v2546
    %2817 = vmatpush1.msra.mxu0 %v2545
    %2818 = vmatprep.subr.mxu0 %v2552
    %2819 = vmatpush1.msra.mxu0 %v2551
    %2820 = vmatprep.subr.mxu0 %v2558
    %2821 = vmatpush1.msra.mxu0 %v2557
    %2822 = vmatprep.subr.mxu0 %v2564
    %2823 = vmatpush1.msra.mxu0 %v2563
    %2824 = vmatprep.subr.mxu0 %v2570
    %2825 = vmatpush1.msra.mxu0 %v2569
    %2826 = vmatprep.subr.mxu0 %v2576
    %2827 = vmatpush1.msra.mxu0 %v2575
    %2828 = vmatprep.subr.mxu0 %v2582
    %2829 = vmatpush1.msra.mxu0 %v2581
    %2830 = vmatprep.subr.mxu0 %v2588
    %2831 = vmatpush1.msra.mxu0 %v2587
    %2832 = vmatprep.subr.mxu0 %v2594
    %2833 = vmatpush1.msra.mxu0 %v2593
    %2834 = vmatprep.subr.mxu0 %v2600
    %2835 = vmatpush1.msra.mxu0 %v2599
    %2836 = vmatprep.subr.mxu0 %v2606
    %2837 = vmatpush1.msra.mxu0 %v2605
    %2838 = vmatprep.subr.mxu0 %v2612
    %2839 = vmatpush1.msra.mxu0 %v2611
    %2840 = vmatprep.subr.mxu0 %v2618
    %2841 = vmatpush1.msra.mxu0 %v2617
    %2842 = vmatprep.subr.mxu0 %v2624
    %2843 = vmatpush1.msra.mxu0 %v2623
    %2844 = vmatprep.subr.mxu0 %v2630
    %2845 = vmatpush1.msra.mxu0 %v2629
    %2846 = vmatprep.subr.mxu0 %v2636
    %2847 = vmatpush1.msra.mxu0 %v2635
    %2848 = vmatprep.subr.mxu0 %v2642
    %2849 = vmatpush1.msra.mxu0 %v2641
    %2850 = vmatprep.subr.mxu0 %v2648
    %2851 = vmatpush1.msra.mxu0 %v2647
    %2852 = vmatprep.subr.mxu0 %v2654
    %2853 = vmatpush1.msra.mxu0 %v2653
    %2854 = vmatprep.subr.mxu0 %v2660
    %2855 = vmatpush1.msra.mxu0 %v2659
    %2856 = vmatprep.subr.mxu0 %v2666
    %2857 = vmatpush1.msra.mxu0 %v2665
    %2858 = vmatprep.subr.mxu0 %v2672
    %2859 = vmatpush1.msra.mxu0 %v2671
    %2860 = vmatprep.subr.mxu0 %v2678
    %2861 = vmatpush1.msra.mxu0 %v2677
    %2862 = vmatprep.subr.mxu0 %v2684
    %2863 = vmatpush1.msra.mxu0 %v2683
    %2864 = vmatprep.subr.mxu0 %v2690
    %2865 = vmatpush1.msra.mxu0 %v2689
    %2866 = vmatprep.subr.mxu0 %v2696
    %2867 = vmatpush1.msra.mxu0 %v2695
    %2868 = vmatprep.mubr.f32.mxu0 %v2316
    %2869 = vmatmul.mubr.f32.gmra.mrb[0].mxu0 %v2315
    %v2870 = vpop.f32.mrb[0].mxu0
    %v2871 = vadd.f32 %v2800, %v2870
    %v2872 = vpop.f32.mrb[0].mxu0
    %v2873 = vadd.f32 %v2802, %v2872
    %2874 = vdwg.mxu0
    %2875 = vmatprep.subr.mxu0 %v2320
    %2876 = vmatpush1.msra.mxu0 %v2319
    %2877 = vmatprep.subr.mxu0 %v2326
    %2878 = vmatpush1.msra.mxu0 %v2325
    %2879 = vmatprep.subr.mxu0 %v2332
    %2880 = vmatpush1.msra.mxu0 %v2331
    %2881 = vmatprep.subr.mxu0 %v2338
    %2882 = vmatpush1.msra.mxu0 %v2337
    %2883 = vmatprep.subr.mxu0 %v2344
    %2884 = vmatpush1.msra.mxu0 %v2343
    %2885 = vmatprep.subr.mxu0 %v2350
    %2886 = vmatpush1.msra.mxu0 %v2349
    %2887 = vmatprep.subr.mxu0 %v2356
    %2888 = vmatpush1.msra.mxu0 %v2355
    %2889 = vmatprep.subr.mxu0 %v2362
    %2890 = vmatpush1.msra.mxu0 %v2361
    %2891 = vmatprep.subr.mxu0 %v2368
    %2892 = vmatpush1.msra.mxu0 %v2367
    %2893 = vmatprep.subr.mxu0 %v2374
    %2894 = vmatpush1.msra.mxu0 %v2373
    %2895 = vmatprep.subr.mxu0 %v2380
    %2896 = vmatpush1.msra.mxu0 %v2379
    %2897 = vmatprep.subr.mxu0 %v2386
    %2898 = vmatpush1.msra.mxu0 %v2385
    %2899 = vmatprep.subr.mxu0 %v2392
    %2900 = vmatpush1.msra.mxu0 %v2391
    %2901 = vmatprep.subr.mxu0 %v2398
    %2902 = vmatpush1.msra.mxu0 %v2397
    %2903 = vmatprep.subr.mxu0 %v2404
    %2904 = vmatpush1.msra.mxu0 %v2403
    %2905 = vmatprep.subr.mxu0 %v2410
    %2906 = vmatpush1.msra.mxu0 %v2409
    %2907 = vmatprep.subr.mxu0 %v2416
    %2908 = vmatpush1.msra.mxu0 %v2415
    %2909 = vmatprep.subr.mxu0 %v2422
    %2910 = vmatpush1.msra.mxu0 %v2421
    %2911 = vmatprep.subr.mxu0 %v2428
    %2912 = vmatpush1.msra.mxu0 %v2427
    %2913 = vmatprep.subr.mxu0 %v2434
    %2914 = vmatpush1.msra.mxu0 %v2433
    %2915 = vmatprep.subr.mxu0 %v2440
    %2916 = vmatpush1.msra.mxu0 %v2439
    %2917 = vmatprep.subr.mxu0 %v2446
    %2918 = vmatpush1.msra.mxu0 %v2445
    %2919 = vmatprep.subr.mxu0 %v2452
    %2920 = vmatpush1.msra.mxu0 %v2451
    %2921 = vmatprep.subr.mxu0 %v2458
    %2922 = vmatpush1.msra.mxu0 %v2457
    %2923 = vmatprep.subr.mxu0 %v2464
    %2924 = vmatpush1.msra.mxu0 %v2463
    %2925 = vmatprep.subr.mxu0 %v2470
    %2926 = vmatpush1.msra.mxu0 %v2469
    %2927 = vmatprep.subr.mxu0 %v2476
    %2928 = vmatpush1.msra.mxu0 %v2475
    %2929 = vmatprep.subr.mxu0 %v2482
    %2930 = vmatpush1.msra.mxu0 %v2481
    %2931 = vmatprep.subr.mxu0 %v2488
    %2932 = vmatpush1.msra.mxu0 %v2487
    %2933 = vmatprep.subr.mxu0 %v2494
    %2934 = vmatpush1.msra.mxu0 %v2493
    %2935 = vmatprep.subr.mxu0 %v2500
    %2936 = vmatpush1.msra.mxu0 %v2499
    %2937 = vmatprep.subr.mxu0 %v2506
    %2938 = vmatpush1.msra.mxu0 %v2505
    %2939 = vmatprep.mubr.f32.mxu0 %v2314
    %2940 = vmatmul.mubr.f32.gmra.mrb[0].mxu0 %v2313
    %v2941 = vpop.f32.mrb[0].mxu0
    %v2942 = vadd.f32 %v2714, %v2941
    %v2943 = vpop.f32.mrb[0].mxu0
    %v2944 = vadd.f32 %v2718, %v2943
    %2945 = vdwg.mxu0
    %2946 = vmatprep.subr.mxu0 %v2512
    %2947 = vmatpush1.msra.mxu0 %v2511
    %2948 = vmatprep.subr.mxu0 %v2518
    %2949 = vmatpush1.msra.mxu0 %v2517
    %2950 = vmatprep.subr.mxu0 %v2524
    %2951 = vmatpush1.msra.mxu0 %v2523
    %2952 = vmatprep.subr.mxu0 %v2530
    %2953 = vmatpush1.msra.mxu0 %v2529
    %2954 = vmatprep.subr.mxu0 %v2536
    %2955 = vmatpush1.msra.mxu0 %v2535
    %2956 = vmatprep.subr.mxu0 %v2542
    %2957 = vmatpush1.msra.mxu0 %v2541
    %2958 = vmatprep.subr.mxu0 %v2548
    %2959 = vmatpush1.msra.mxu0 %v2547
    %2960 = vmatprep.subr.mxu0 %v2554
    %2961 = vmatpush1.msra.mxu0 %v2553
    %2962 = vmatprep.subr.mxu0 %v2560
    %2963 = vmatpush1.msra.mxu0 %v2559
    %2964 = vmatprep.subr.mxu0 %v2566
    %2965 = vmatpush1.msra.mxu0 %v2565
    %2966 = vmatprep.subr.mxu0 %v2572
    %2967 = vmatpush1.msra.mxu0 %v2571
    %2968 = vmatprep.subr.mxu0 %v2578
    %2969 = vmatpush1.msra.mxu0 %v2577
    %2970 = vmatprep.subr.mxu0 %v2584
    %2971 = vmatpush1.msra.mxu0 %v2583
    %2972 = vmatprep.subr.mxu0 %v2590
    %2973 = vmatpush1.msra.mxu0 %v2589
    %2974 = vmatprep.subr.mxu0 %v2596
    %2975 = vmatpush1.msra.mxu0 %v2595
    %2976 = vmatprep.subr.mxu0 %v2602
    %2977 = vmatpush1.msra.mxu0 %v2601
    %2978 = vmatprep.subr.mxu0 %v2608
    %2979 = vmatpush1.msra.mxu0 %v2607
    %2980 = vmatprep.subr.mxu0 %v2614
    %2981 = vmatpush1.msra.mxu0 %v2613
    %2982 = vmatprep.subr.mxu0 %v2620
    %2983 = vmatpush1.msra.mxu0 %v2619
    %2984 = vmatprep.subr.mxu0 %v2626
    %2985 = vmatpush1.msra.mxu0 %v2625
    %2986 = vmatprep.subr.mxu0 %v2632
    %2987 = vmatpush1.msra.mxu0 %v2631
    %2988 = vmatprep.subr.mxu0 %v2638
    %2989 = vmatpush1.msra.mxu0 %v2637
    %2990 = vmatprep.subr.mxu0 %v2644
    %2991 = vmatpush1.msra.mxu0 %v2643
    %2992 = vmatprep.subr.mxu0 %v2650
    %2993 = vmatpush1.msra.mxu0 %v2649
    %2994 = vmatprep.subr.mxu0 %v2656
    %2995 = vmatpush1.msra.mxu0 %v2655
    %2996 = vmatprep.subr.mxu0 %v2662
    %2997 = vmatpush1.msra.mxu0 %v2661
    %2998 = vmatprep.subr.mxu0 %v2668
    %2999 = vmatpush1.msra.mxu0 %v2667
    %3000 = vmatprep.subr.mxu0 %v2674
    %3001 = vmatpush1.msra.mxu0 %v2673
    %3002 = vmatprep.subr.mxu0 %v2680
    %3003 = vmatpush1.msra.mxu0 %v2679
    %3004 = vmatprep.subr.mxu0 %v2686
    %3005 = vmatpush1.msra.mxu0 %v2685
    %3006 = vmatprep.subr.mxu0 %v2692
    %3007 = vmatpush1.msra.mxu0 %v2691
    %3008 = vmatprep.subr.mxu0 %v2698
    %3009 = vmatpush1.msra.mxu0 %v2697
    %3010 = vmatprep.mubr.f32.mxu0 %v2316
    %3011 = vmatmul.mubr.f32.gmra.mrb[0].mxu0 %v2315
    %v3012 = vpop.f32.mrb[0].mxu0
    %v3013 = vadd.f32 %v2942, %v3012
    %v3014 = vpop.f32.mrb[0].mxu0
    %v3015 = vadd.f32 %v2944, %v3014
    %3016 = vdwg.mxu0
    %3017 = vmatprep.subr.mxu0 %v2322
    %3018 = vmatpush1.msra.mxu0 %v2321
    %3019 = vmatprep.subr.mxu0 %v2328
    %3020 = vmatpush1.msra.mxu0 %v2327
    %3021 = vmatprep.subr.mxu0 %v2334
    %3022 = vmatpush1.msra.mxu0 %v2333
    %3023 = vmatprep.subr.mxu0 %v2340
    %3024 = vmatpush1.msra.mxu0 %v2339
    %3025 = vmatprep.subr.mxu0 %v2346
    %3026 = vmatpush1.msra.mxu0 %v2345
    %3027 = vmatprep.subr.mxu0 %v2352
    %3028 = vmatpush1.msra.mxu0 %v2351
    %3029 = vmatprep.subr.mxu0 %v2358
    %3030 = vmatpush1.msra.mxu0 %v2357
    %3031 = vmatprep.subr.mxu0 %v2364
    %3032 = vmatpush1.msra.mxu0 %v2363
    %3033 = vmatprep.subr.mxu0 %v2370
    %3034 = vmatpush1.msra.mxu0 %v2369
    %3035 = vmatprep.subr.mxu0 %v2376
    %3036 = vmatpush1.msra.mxu0 %v2375
    %3037 = vmatprep.subr.mxu0 %v2382
    %3038 = vmatpush1.msra.mxu0 %v2381
    %3039 = vmatprep.subr.mxu0 %v2388
    %3040 = vmatpush1.msra.mxu0 %v2387
    %3041 = vmatprep.subr.mxu0 %v2394
    %3042 = vmatpush1.msra.mxu0 %v2393
    %3043 = vmatprep.subr.mxu0 %v2400
    %3044 = vmatpush1.msra.mxu0 %v2399
    %3045 = vmatprep.subr.mxu0 %v2406
    %3046 = vmatpush1.msra.mxu0 %v2405
    %3047 = vmatprep.subr.mxu0 %v2412
    %3048 = vmatpush1.msra.mxu0 %v2411
    %3049 = vmatprep.subr.mxu0 %v2418
    %3050 = vmatpush1.msra.mxu0 %v2417
    %3051 = vmatprep.subr.mxu0 %v2424
    %3052 = vmatpush1.msra.mxu0 %v2423
    %3053 = vmatprep.subr.mxu0 %v2430
    %3054 = vmatpush1.msra.mxu0 %v2429
    %3055 = vmatprep.subr.mxu0 %v2436
    %3056 = vmatpush1.msra.mxu0 %v2435
    %3057 = vmatprep.subr.mxu0 %v2442
    %3058 = vmatpush1.msra.mxu0 %v2441
    %3059 = vmatprep.subr.mxu0 %v2448
    %3060 = vmatpush1.msra.mxu0 %v2447
    %3061 = vmatprep.subr.mxu0 %v2454
    %3062 = vmatpush1.msra.mxu0 %v2453
    %3063 = vmatprep.subr.mxu0 %v2460
    %3064 = vmatpush1.msra.mxu0 %v2459
    %3065 = vmatprep.subr.mxu0 %v2466
    %3066 = vmatpush1.msra.mxu0 %v2465
    %3067 = vmatprep.subr.mxu0 %v2472
    %3068 = vmatpush1.msra.mxu0 %v2471
    %3069 = vmatprep.subr.mxu0 %v2478
    %3070 = vmatpush1.msra.mxu0 %v2477
    %3071 = vmatprep.subr.mxu0 %v2484
    %3072 = vmatpush1.msra.mxu0 %v2483
    %3073 = vmatprep.subr.mxu0 %v2490
    %3074 = vmatpush1.msra.mxu0 %v2489
    %3075 = vmatprep.subr.mxu0 %v2496
    %3076 = vmatpush1.msra.mxu0 %v2495
    %3077 = vmatprep.subr.mxu0 %v2502
    %3078 = vmatpush1.msra.mxu0 %v2501
    %3079 = vmatprep.subr.mxu0 %v2508
    %3080 = vmatpush1.msra.mxu0 %v2507
    %3081 = vmatprep.mubr.f32.mxu0 %v2314
    %3082 = vmatmul.mubr.f32.gmra.mrb[0].mxu0 %v2313
    %v3083 = vpop.f32.mrb[0].mxu0
    %v3084 = vadd.f32 %v2722, %v3083
    %v3085 = vpop.f32.mrb[0].mxu0
    %v3086 = vadd.f32 %v2726, %v3085
    %3087 = vdwg.mxu0
    %3088 = vmatprep.subr.mxu0 %v2514
    %3089 = vmatpush1.msra.mxu0 %v2513
    %3090 = vmatprep.subr.mxu0 %v2520
    %3091 = vmatpush1.msra.mxu0 %v2519
    %3092 = vmatprep.subr.mxu0 %v2526
    %3093 = vmatpush1.msra.mxu0 %v2525
    %3094 = vmatprep.subr.mxu0 %v2532
    %3095 = vmatpush1.msra.mxu0 %v2531
    %3096 = vmatprep.subr.mxu0 %v2538
    %3097 = vmatpush1.msra.mxu0 %v2537
    %3098 = vmatprep.subr.mxu0 %v2544
    %3099 = vmatpush1.msra.mxu0 %v2543
    %3100 = vmatprep.subr.mxu0 %v2550
    %3101 = vmatpush1.msra.mxu0 %v2549
    %3102 = vmatprep.subr.mxu0 %v2556
    %3103 = vmatpush1.msra.mxu0 %v2555
    %3104 = vmatprep.subr.mxu0 %v2562
    %3105 = vmatpush1.msra.mxu0 %v2561
    %3106 = vmatprep.subr.mxu0 %v2568
    %3107 = vmatpush1.msra.mxu0 %v2567
    %3108 = vmatprep.subr.mxu0 %v2574
    %3109 = vmatpush1.msra.mxu0 %v2573
    %3110 = vmatprep.subr.mxu0 %v2580
    %3111 = vmatpush1.msra.mxu0 %v2579
    %3112 = vmatprep.subr.mxu0 %v2586
    %3113 = vmatpush1.msra.mxu0 %v2585
    %3114 = vmatprep.subr.mxu0 %v2592
    %3115 = vmatpush1.msra.mxu0 %v2591
    %3116 = vmatprep.subr.mxu0 %v2598
    %3117 = vmatpush1.msra.mxu0 %v2597
    %3118 = vmatprep.subr.mxu0 %v2604
    %3119 = vmatpush1.msra.mxu0 %v2603
    %3120 = vmatprep.subr.mxu0 %v2610
    %3121 = vmatpush1.msra.mxu0 %v2609
    %3122 = vmatprep.subr.mxu0 %v2616
    %3123 = vmatpush1.msra.mxu0 %v2615
    %3124 = vmatprep.subr.mxu0 %v2622
    %3125 = vmatpush1.msra.mxu0 %v2621
    %3126 = vmatprep.subr.mxu0 %v2628
    %3127 = vmatpush1.msra.mxu0 %v2627
    %3128 = vmatprep.subr.mxu0 %v2634
    %3129 = vmatpush1.msra.mxu0 %v2633
    %3130 = vmatprep.subr.mxu0 %v2640
    %3131 = vmatpush1.msra.mxu0 %v2639
    %3132 = vmatprep.subr.mxu0 %v2646
    %3133 = vmatpush1.msra.mxu0 %v2645
    %3134 = vmatprep.subr.mxu0 %v2652
    %3135 = vmatpush1.msra.mxu0 %v2651
    %3136 = vmatprep.subr.mxu0 %v2658
    %3137 = vmatpush1.msra.mxu0 %v2657
    %3138 = vmatprep.subr.mxu0 %v2664
    %3139 = vmatpush1.msra.mxu0 %v2663
    %3140 = vmatprep.subr.mxu0 %v2670
    %3141 = vmatpush1.msra.mxu0 %v2669
    %3142 = vmatprep.subr.mxu0 %v2676
    %3143 = vmatpush1.msra.mxu0 %v2675
    %3144 = vmatprep.subr.mxu0 %v2682
    %3145 = vmatpush1.msra.mxu0 %v2681
    %3146 = vmatprep.subr.mxu0 %v2688
    %3147 = vmatpush1.msra.mxu0 %v2687
    %3148 = vmatprep.subr.mxu0 %v2694
    %3149 = vmatpush1.msra.mxu0 %v2693
    %3150 = vmatprep.subr.mxu0 %v2700
    %3151 = vmatpush1.msra.mxu0 %v2699
    %3152 = vmatprep.mubr.f32.mxu0 %v2316
    %3153 = vmatmul.mubr.f32.gmra.mrb[0].mxu0 %v2315
    %v3154 = vpop.f32.mrb[0].mxu0
    %v3155 = vadd.f32 %v3084, %v3154
    %v3156 = vpop.f32.mrb[0].mxu0
    %v3157 = vadd.f32 %v3086, %v3156
    %3158 = vdwg.mxu0
    %v3159 = vmul.f32 %v141, 4.366812
    %v3160 = vadd.f32 %v3159, -2.117904
    %v3163 = vunpack.c.l.s4 1983009808
    %v3164 = vunpack.c.0.s8 %v3163
    %v3165 = vlaneseq
    %v3166 = vshrl.u32 %v3165, 7
    %v3167 = vsub.s32 %v3164, %v3166
    %v3168 = vrot.slane %v3160, %v3167
    %v3169 = vcombine.high %v3168, %v3168
    %v3172 = vsub.f32 %v2871, %v3168
    %v3173 = vsub.f32 %v2873, %v3169
    %v3174 = vmul.f32 %v3172, %v3172
    %v3175 = vmul.f32 %v3173, %v3173
    %vm3176 = vcmask 1041408
    %v3177 = vsel %vm3176, %v3174, 0.0
    %v3178 = vsel %vm3176, %v3175, 0.0
    %v3179 = vadd.f32 %v3177, %v3178
    %3180 = vadd.xlane.f32.xlu0 %v3179
    %v3181 = vpop.xlane.xlu0 %3180
    %v3182 = vrot.slane %v3181, 4
    %v3183 = vadd.f32 %v3181, %v3182
    %v3184 = vrot.slane %v3183, 2
    %v3185 = vadd.f32 %v3183, %v3184
    %v3186 = vrot.slane %v3185, 1
    %v3187 = vadd.f32 %v3185, %v3186
    %s3188 = vtos %v3187
    %s3189 = sadd.f32 %s3188, 0.0
    %v3190 = vrot.slane %v141, 4
    %v3192 = vmul.f32 %v3190, 4.464286
    %v3193 = vadd.f32 %v3192, -2.0357144
    %v3196 = vunpack.c.l.s4 1983009808
    %v3197 = vunpack.c.0.s8 %v3196
    %v3198 = vlaneseq
    %v3199 = vshrl.u32 %v3198, 7
    %v3200 = vsub.s32 %v3197, %v3199
    %v3201 = vrot.slane %v3193, %v3200
    %v3202 = vcombine.high %v3201, %v3201
    %v3205 = vsub.f32 %v3013, %v3201
    %v3206 = vsub.f32 %v3015, %v3202
    %v3207 = vmul.f32 %v3205, %v3205
    %v3208 = vmul.f32 %v3206, %v3206
    %v3209 = vsel %vm3176, %v3207, 0.0
    %v3210 = vsel %vm3176, %v3208, 0.0
    %v3211 = vadd.f32 %v3209, %v3210
    %3212 = vadd.xlane.f32.xlu0 %v3211
    %v3213 = vpop.xlane.xlu0 %3212
    %v3214 = vrot.slane %v3213, 4
    %v3215 = vadd.f32 %v3213, %v3214
    %v3216 = vrot.slane %v3215, 2
    %v3217 = vadd.f32 %v3215, %v3216
    %v3218 = vrot.slane %v3217, 1
    %v3219 = vadd.f32 %v3217, %v3218
    %s3220 = vtos %v3219
    %s3221 = sadd.f32 %s3189, %s3220
    %v3222 = vmul.f32 %v142, 4.4444447
    %v3223 = vadd.f32 %v3222, -1.8044444
    %v3226 = vunpack.c.l.s4 1983009808
    %v3227 = vunpack.c.0.s8 %v3226
    %v3228 = vlaneseq
    %v3229 = vshrl.u32 %v3228, 7
    %v3230 = vsub.s32 %v3227, %v3229
    %v3231 = vrot.slane %v3223, %v3230
    %v3232 = vcombine.high %v3231, %v3231
    %v3235 = vsub.f32 %v3155, %v3231
    %v3236 = vsub.f32 %v3157, %v3232
    %v3237 = vmul.f32 %v3235, %v3235
    %v3238 = vmul.f32 %v3236, %v3236
    %v3239 = vsel %vm3176, %v3237, 0.0
    %v3240 = vsel %vm3176, %v3238, 0.0
    %v3241 = vadd.f32 %v3239, %v3240
    %3242 = vadd.xlane.f32.xlu0 %v3241
    %v3243 = vpop.xlane.xlu0 %3242
    %v3244 = vrot.slane %v3243, 4
    %v3245 = vadd.f32 %v3243, %v3244
    %v3246 = vrot.slane %v3245, 2
    %v3247 = vadd.f32 %v3245, %v3246
    %v3248 = vrot.slane %v3247, 1
    %v3249 = vadd.f32 %v3247, %v3248
    %s3250 = vtos %v3249
    %s3251 = sadd.f32 %s3221, %s3250
    %s3252 = smul.f32 %s3251, 0.16666667
    %s3253 = scalar_lea.smem [#allocation16], 0
    %3254 = sst [smem:[%s3253]] %s3252
    // Predicated region
    $region74: #{mfm_forward.1} parent=1 // pred_check
      _
    $region75: #{mfm_forward.1} parent=1 // pred_check_branch
      %3256 = sbr.rel (0) target = $region77
    $region76: #{mfm_forward.1} parent=1 // pred_region
      %s3258 = ssub.s32 16, 16
      %3259 = vsyncadd [#allocation4], %s3258
      %3262 = dma.smem_to_hbm [#allocation16], 16, %s10, [#allocation4]
    $region77: #{mfm_forward.1} parent=1 // pred_fallthru
      _
    // Predicated region
    $region78: #{mfm_forward.1} parent=1 // pred_check
      _
    $region79: #{mfm_forward.1} parent=1 // pred_check_branch
      %3264 = sbr.rel (0) target = $region81
    $region80: #{mfm_forward.1} parent=1 // pred_region
      %3265 = dma.done [#allocation4], 16
    $region81: #{mfm_forward.1} parent=1 // pred_fallthru
      _
    %3266 = sfence
    %3267 = vsyncpa [#allocation3], 1
    %3268 = vsyncpa [#allocation6], 1
    %3269 = vsyncpa [#allocation9], 1
    %3270 = vsyncpa [#allocation12], 1
    %3271 = vsyncpa [#allocation15], 1
    %3272 = vsyncpa [#allocation4], 1

</llo_original>
